<compile_context>
chip_gen: v5e
topology: v5e:2x2
jax: 0.10.0
libtpu: 0.0.40
codegen_flags: <defaults>
</compile_context>

<pallas_src>
import functools

import jax
import jax.numpy as jnp
from jax import lax
from jax.experimental import pallas as pl
from jax.experimental.pallas import tpu as pltpu


# ----------------------------------------------------------------------------
# Kernel 1: fused QKV projection (1x1 convs) + guide scaling
# ----------------------------------------------------------------------------
def _proj_kernel(x_ref, g_ref, w_ref, b_ref, qk_ref, vt_ref, *, n_qk):
    # x_ref: (1, C, T) f32   g_ref: (1, 1, T) f32 (raw upsampled guide)
    # w_ref: (F, C)  f32     b_ref: (F, 1) f32        F = n_qk + C
    # qk_ref: (1, n_qk, T) bf16     vt_ref: (1, T, C) bf16
    x = x_ref[0]
    g = 1.0 + jax.nn.sigmoid(g_ref[0])                        # (1, T) f32, EUP
    qkv = (jnp.dot(w_ref[...], x, preferred_element_type=jnp.float32)
           + b_ref[...]) * g                                  # (F, T) f32
    qk_ref[0] = qkv[:n_qk, :].astype(qk_ref.dtype)
    # Store V transposed (T, C): the attention kernel then computes attn @ V^T
    # as a native (M,K)@(K,N) matmul -> no (HW, HW) transpose anywhere.
    vt_ref[0] = qkv[n_qk:, :].T.astype(vt_ref.dtype)


# ----------------------------------------------------------------------------
# Kernel 2: flash-style guided attention + gamma residual
# ----------------------------------------------------------------------------
def _flash_kernel(q_ref, k_ref, vt_ref, x_ref, gamma_ref, o_ref,
                  m_sc, l_sc, acc_sc, *, hw_real, tk, needs_mask):
    # q_ref: (1, Cqp, Tq) bf16    k_ref: (1, Cqp, Tk) bf16
    # vt_ref: (1, Tk, C)  bf16    x_ref: (1, C, Tq) f32 (residual)
    # gamma_ref: (1,) f32 in SMEM o_ref: (1, C, Tq)
    # scratch: m/l (Tq, 1) f32, acc (Tq, C) f32
    ki = pl.program_id(2)

    @pl.when(ki == 0)
    def _():
        m_sc[...] = jnp.full(m_sc.shape, -jnp.inf, jnp.float32)
        l_sc[...] = jnp.zeros(l_sc.shape, jnp.float32)
        acc_sc[...] = jnp.zeros(acc_sc.shape, jnp.float32)

    q = q_ref[0]                                              # (Cqp, Tq)
    k = k_ref[0]                                              # (Cqp, Tk)
    # s[i, j] = sum_c q[c, i] * k[c, j]; contraction dim = Cqp >= 16 (padded),
    # bf16 inputs with f32 accumulation on the MXU.
    s = lax.dot_general(q, k, (((0,), (0,)), ((), ())),
                        preferred_element_type=jnp.float32)   # (Tq, Tk) f32

    if needs_mask:
        col = ki * tk + lax.broadcasted_iota(jnp.int32, s.shape, 1)
        s = jnp.where(col < hw_real, s, -jnp.inf)

    m_prev = m_sc[...]                                        # (Tq, 1)
    m_new = jnp.maximum(m_prev, jnp.max(s, axis=-1, keepdims=True))
    alpha = jnp.exp(m_prev - m_new)
    p = jnp.exp(s - m_new)                                    # (Tq, Tk) f32
    l_sc[...] = alpha * l_sc[...] + jnp.sum(p, axis=-1, keepdims=True)
    acc_sc[...] = alpha * acc_sc[...] + jnp.dot(
        p.astype(vt_ref.dtype), vt_ref[0], preferred_element_type=jnp.float32)
    m_sc[...] = m_new

    @pl.when(ki == pl.num_programs(2) - 1)
    def _():
        out_t = acc_sc[...] * pl.reciprocal(l_sc[...], approx=True)  # (Tq, C)
        # small (Tq, C) -> (C, Tq) transpose; output stays lane-dense over HW
        o_ref[0] = (gamma_ref[0] * out_t.T + x_ref[0]).astype(o_ref.dtype)


# ----------------------------------------------------------------------------
# Wrapper
# ----------------------------------------------------------------------------
def _vmem_limit(block_bytes):
    # Explicit scoped-VMEM budget derived from the actual block sizes (double
    # buffered); capped at 64 MiB so the kernels stay portable to v7x (half the
    # VMEM of v5e/v6e).
    return int(min(64 * 1024 * 1024, max(16 * 1024 * 1024, 4 * block_bytes)))


def change_guide_module_pallas(x, guide_up, wq, wk, wv, bq, bk, bv, gamma):
    """x: (B, C, H, W) f32; guide_up: (B, 1, H, W) bilinear-upsampled guide."""
    B, C, H, W = x.shape
    HW = H * W
    Cq = wq.shape[0]

    # Pad the Q/K channel dim to a 16-aligned value (bf16 sublane packing + MXU K).
    cqp = max(16, ((Cq + 15) // 16) * 16)
    n_qk = 2 * cqp
    F = n_qk + C

    # Pad HW to a multiple of 128 so every block is lane-dense; use the biggest
    # tile that divides the padded extent (fewer grid steps -> less per-step
    # overhead; VMEM stays tiny at these sizes).
    hw_pad = ((HW + 127) // 128) * 128
    T = 128
    for cand in (512, 256):
        if hw_pad % cand == 0:
            T = cand
            break
    n_t = hw_pad // T
    needs_mask = hw_pad != HW

    x2 = x.reshape(B, C, HW).astype(jnp.float32)
    g2 = guide_up.reshape(B, 1, HW).astype(jnp.float32)
    if needs_mask:
        pad = hw_pad - HW
        # Padded key columns are masked to -inf in the attention kernel and
        # padded query rows are sliced off, so zero-padding is sufficient.
        x2 = jnp.pad(x2, ((0, 0), (0, 0), (0, pad)))
        g2 = jnp.pad(g2, ((0, 0), (0, 0), (0, pad)))

    padq = cqp - Cq
    w_all = jnp.concatenate(
        [jnp.pad(wq, ((0, padq), (0, 0))),
         jnp.pad(wk, ((0, padq), (0, 0))),
         wv], axis=0).astype(jnp.float32)                       # (F, C)
    b_all = jnp.concatenate(
        [jnp.pad(bq, (0, padq)), jnp.pad(bk, (0, padq)), bv],
        axis=0).reshape(F, 1).astype(jnp.float32)               # (F, 1)
    gamma_arr = jnp.asarray(gamma, jnp.float32).reshape(1)

    # --- kernel 1: fused projection -------------------------------------------------
    est1 = 2 * (C * T * 4 + T * 4 + F * C * 4 + F * 4 + n_qk * T * 2 + T * C * 2)
    qk, vt = pl.pallas_call(
        functools.partial(_proj_kernel, n_qk=n_qk),
        out_shape=(jax.ShapeDtypeStruct((B, n_qk, hw_pad), jnp.bfloat16),
                   jax.ShapeDtypeStruct((B, hw_pad, C), jnp.bfloat16)),
        grid=(B, n_t),
        in_specs=[
            pl.BlockSpec((1, C, T), lambda b, t: (b, 0, t)),    # x
            pl.BlockSpec((1, 1, T), lambda b, t: (b, 0, t)),    # raw guide
            pl.BlockSpec((F, C), lambda b, t: (0, 0)),          # stacked [Wq;Wk;Wv]
            pl.BlockSpec((F, 1), lambda b, t: (0, 0)),          # stacked biases
        ],
        out_specs=(
            pl.BlockSpec((1, n_qk, T), lambda b, t: (b, 0, t)),  # [q; k] channel-major
            pl.BlockSpec((1, T, C), lambda b, t: (b, t, 0)),     # v^T
        ),
        compiler_params=pltpu.CompilerParams(
            dimension_semantics=("parallel", "parallel"),
            vmem_limit_bytes=_vmem_limit(est1)),
    )(x2, g2, w_all, b_all)

    # --- kernel 2: flash attention + residual ----------------------------------------
    est2 = (2 * (2 * cqp * T * 2 + T * C * 2 + 2 * C * T * 4)
            + 2 * T * 4 + T * C * 4 + T * T * 4)
    out = pl.pallas_call(
        functools.partial(_flash_kernel, hw_real=HW, tk=T, needs_mask=needs_mask),
        out_shape=jax.ShapeDtypeStruct((B, C, hw_pad), x.dtype),
        grid=(B, n_t, n_t),
        in_specs=[
            pl.BlockSpec((1, cqp, T), lambda b, qi, ki: (b, 0, qi)),  # q rows [0:Cqp]
            pl.BlockSpec((1, cqp, T), lambda b, qi, ki: (b, 1, ki)),  # k rows [Cqp:2Cqp]
            pl.BlockSpec((1, T, C), lambda b, qi, ki: (b, ki, 0)),    # v^T kv-tile
            pl.BlockSpec((1, C, T), lambda b, qi, ki: (b, 0, qi)),    # x residual tile
            pl.BlockSpec(memory_space=pltpu.MemorySpace.SMEM),        # gamma scalar
        ],
        out_specs=pl.BlockSpec((1, C, T), lambda b, qi, ki: (b, 0, qi)),
        scratch_shapes=[
            pltpu.VMEM((T, 1), jnp.float32),   # running max
            pltpu.VMEM((T, 1), jnp.float32),   # running sum
            pltpu.VMEM((T, C), jnp.float32),   # output accumulator (query-major)
        ],
        compiler_params=pltpu.CompilerParams(
            dimension_semantics=("parallel", "parallel", "arbitrary"),
            vmem_limit_bytes=_vmem_limit(est2)),
    )(qk, qk, vt, x2, gamma_arr)

    return out[:, :, :HW].reshape(B, C, H, W)


# ----------------------------------------------------------------------------
# Glue: bilinear upsample (align_corners=True) of the guiding map, in plain JAX
# ----------------------------------------------------------------------------
def _interp_matrix(out_size, in_size):
    if in_size == 1:
        return jnp.ones((out_size, 1), jnp.float32)
    if out_size == 1:
        return jnp.zeros((1, in_size), jnp.float32).at[0, 0].set(1.0)
    src = jnp.arange(out_size, dtype=jnp.float32) * (in_size - 1) / (out_size - 1)
    lo = jnp.clip(jnp.floor(src).astype(jnp.int32), 0, in_size - 2)
    frac = src - lo.astype(jnp.float32)
    m = jnp.zeros((out_size, in_size), jnp.float32)
    idx = jnp.arange(out_size)
    m = m.at[idx, lo].set(1.0 - frac)
    m = m.at[idx, lo + 1].add(frac)
    return m


def upsample_bilinear_align_corners(g, H, W):
    # g: (B, 1, h0, w0) -> (B, 1, H, W); matches F.interpolate(..., 'bilinear',
    # align_corners=True)
    _, _, h0, w0 = g.shape
    rh = _interp_matrix(H, h0)
    rw = _interp_matrix(W, w0)
    return jnp.einsum('hi,bcij,wj->bchw', rh, g, rw)


@jax.jit
def change_guide_forward(x, guiding_map0, wq, wk, wv, bq, bk, bv, gamma):
    B, C, H, W = x.shape
    g_up = upsample_bilinear_align_corners(guiding_map0, H, W)
    # sigmoid + "1 +" are fused into the projection kernel.
    return change_guide_module_pallas(x, g_up, wq, wk, wv, bq, bk, bv, gamma)


# ----------------------------------------------------------------------------
# Pure-JAX reference of the PyTorch forward (for the correctness check)
# ----------------------------------------------------------------------------
def reference_forward(x, guiding_map0, wq, wk, wv, bq, bk, bv, gamma):
    B, C, H, W = x.shape
    g_up = upsample_bilinear_align_corners(guiding_map0, H, W)
    g = jax.nn.sigmoid(g_up)

    def conv1x1(inp, w, b):
        return jnp.einsum('oc,bchw->bohw', w, inp) + b[None, :, None, None]

    query = conv1x1(x, wq, bq) * (1.0 + g)
    key = conv1x1(x, wk, bk) * (1.0 + g)
    value = conv1x1(x, wv, bv) * (1.0 + g)

    proj_q = query.reshape(B, -1, H * W).transpose(0, 2, 1)   # (B, HW, Cq)
    proj_k = key.reshape(B, -1, H * W)                        # (B, Cq, HW)
    energy = jnp.einsum('bic,bcj->bij', proj_q, proj_k)       # (B, HW, HW)
    attn = jax.nn.softmax(energy, axis=-1)
    proj_v = value.reshape(B, -1, H * W)                      # (B, C, HW)
    out = jnp.einsum('bcj,bij->bci', proj_v, attn).reshape(B, C, H, W)
    return gamma * out + x


# ----------------------------------------------------------------------------
if __name__ == "__main__":
    key = jax.random.PRNGKey(0)

    def make_params(k, C):
        Cq = C // 8
        ks = jax.random.split(k, 6)
        wq = 0.1 * jax.random.normal(ks[0], (Cq, C), jnp.float32)
        wk = 0.1 * jax.random.normal(ks[1], (Cq, C), jnp.float32)
        wv = 0.1 * jax.random.normal(ks[2], (C, C), jnp.float32)
        bq = 0.1 * jax.random.normal(ks[3], (Cq,), jnp.float32)
        bk = 0.1 * jax.random.normal(ks[4], (Cq,), jnp.float32)
        bv = 0.1 * jax.random.normal(ks[5], (C,), jnp.float32)
        return wq, wk, wv, bq, bk, bv

    # Case 1: lane-aligned spatial size (HW = 256), in_dim = 32 -> Cq = 4
    B, C, H, W = 2, 32, 16, 16
    k1, k2, k3 = jax.random.split(key, 3)
    x = jax.random.normal(k1, (B, C, H, W), jnp.float32)
    gmap = jax.random.normal(k2, (B, 1, 8, 8), jnp.float32)
    params = make_params(k3, C)

    gamma0 = jnp.zeros((), jnp.float32)            # faithful init: gamma = 0
    out0 = change_guide_forward(x, gmap, *params, gamma0)
    jax.block_until_ready(out0)
    assert jnp.allclose(out0, x, atol=1e-5), "gamma=0 residual path mismatch"

    gamma1 = jnp.float32(0.5)                      # exercise the attention path
    out1 = change_guide_forward(x, gmap, *params, gamma1)
    ref1 = reference_forward(x, gmap, *params, gamma1)
    jax.block_until_ready(out1)
    # bf16 MXU inputs + approx reciprocal -> loosened tolerance vs f32 reference
    assert jnp.allclose(out1, ref1, rtol=5e-2, atol=5e-2), "attention path mismatch"

    # Case 2: ragged spatial size (HW = 288 -> padded to 384, masked softmax),
    #         in_dim = 16 -> Cq = 2 (exercises Q/K channel padding + multi kv-tile)
    B2, C2, H2, W2 = 1, 16, 12, 24
    k4, k5, k6 = jax.random.split(k3, 3)
    x_b = jax.random.normal(k4, (B2, C2, H2, W2), jnp.float32)
    gmap_b = jax.random.normal(k5, (B2, 1, 6, 12), jnp.float32)
    params_b = make_params(k6, C2)
    gamma2 = jnp.float32(0.7)
    out2 = change_guide_forward(x_b, gmap_b, *params_b, gamma2)
    ref2 = reference_forward(x_b, gmap_b, *params_b, gamma2)
    jax.block_until_ready(out2)
    assert jnp.allclose(out2, ref2, rtol=5e-2, atol=5e-2), "padded/masked path mismatch"

    print("KERNEL_OK")
</pallas_src>

<mosaic_0001>
module attributes {stable_mosaic.version = 11 : i64} {
  func.func @_proj_kernel(%arg0: i32, %arg1: i32, %arg2: memref<1x32x256xf32, #tpu.memory_space<vmem>>, %arg3: memref<1x1x256xf32, #tpu.memory_space<vmem>>, %arg4: memref<64x32xf32, #tpu.memory_space<vmem>>, %arg5: memref<64x1xf32, #tpu.memory_space<vmem>>, %arg6: memref<1x32x256xbf16, #tpu.memory_space<vmem>>, %arg7: memref<1x256x32xbf16, #tpu.memory_space<vmem>>) attributes {dimension_semantics = [#tpu.dimension_semantics<parallel>, #tpu.dimension_semantics<parallel>], iteration_bounds = array<i64: 2, 1>, scalar_prefetch = 0 : i64, scratch_operands = 0 : i64, tpu.core_type = #tpu.core_type<tc>, window_params = [{transform_indices = @transform_0, window_bounds = array<i64: 1, 32, 256>}, {transform_indices = @transform_1, window_bounds = array<i64: 1, 1, 256>}, {pipeline_mode = #tpu.pipeline_mode<synchronous>, transform_indices = @transform_2, window_bounds = array<i64: 64, 32>}, {pipeline_mode = #tpu.pipeline_mode<synchronous>, transform_indices = @transform_3, window_bounds = array<i64: 64, 1>}, {transform_indices = @transform_4, window_bounds = array<i64: 1, 32, 256>}, {transform_indices = @transform_5, window_bounds = array<i64: 1, 256, 32>}]} {
    %c0 = arith.constant 0 : index
    %c0_0 = arith.constant 0 : index
    %c0_1 = arith.constant 0 : index
    %0 = vector.load %arg2[%c0, %c0_0, %c0_1] : memref<1x32x256xf32, #tpu.memory_space<vmem>>, vector<1x32x256xf32>
    %1 = vector.shape_cast %0 : vector<1x32x256xf32> to vector<32x256xf32>
    %c0_2 = arith.constant 0 : index
    %c0_3 = arith.constant 0 : index
    %c0_4 = arith.constant 0 : index
    %2 = vector.load %arg3[%c0_2, %c0_3, %c0_4] : memref<1x1x256xf32, #tpu.memory_space<vmem>>, vector<1x1x256xf32>
    %3 = vector.shape_cast %2 : vector<1x1x256xf32> to vector<1x256xf32>
    %4 = arith.negf %3 : vector<1x256xf32>
    %5 = math.exp %4 : vector<1x256xf32>
    %cst = arith.constant 1.000000e+00 : f32
    %6 = vector.broadcast %cst : f32 to vector<1x256xf32>
    %7 = arith.addf %6, %5 : vector<1x256xf32>
    %8 = arith.divf %6, %7 : vector<1x256xf32>
    %cst_5 = arith.constant 1.000000e+00 : f32
    %9 = vector.broadcast %cst_5 : f32 to vector<1x256xf32>
    %10 = arith.addf %9, %8 : vector<1x256xf32>
    %c0_6 = arith.constant 0 : index
    %c0_7 = arith.constant 0 : index
    %11 = vector.load %arg4[%c0_6, %c0_7] : memref<64x32xf32, #tpu.memory_space<vmem>>, vector<64x32xf32>
    %cst_8 = arith.constant dense<0.000000e+00> : vector<64x256xf32>
    %12 = tpu.matmul %11, %1, %cst_8 {dimension_numbers = #tpu.dot_dimension_numbers<[1], [0], [0], [1], [0, 0, 1, 1], [], []>} : vector<64x32xf32>, vector<32x256xf32>, vector<64x256xf32> -> vector<64x256xf32>
    %c0_9 = arith.constant 0 : index
    %c0_10 = arith.constant 0 : index
    %13 = vector.load %arg5[%c0_9, %c0_10] : memref<64x1xf32, #tpu.memory_space<vmem>>, vector<64x1xf32>
    %14 = vector.broadcast %13 : vector<64x1xf32> to vector<64x256xf32>
    %15 = arith.addf %12, %14 : vector<64x256xf32>
    %16 = vector.broadcast %10 : vector<1x256xf32> to vector<64x256xf32>
    %17 = arith.mulf %15, %16 : vector<64x256xf32>
    %18 = vector.extract_strided_slice %17 {offsets = [0, 0], sizes = [32, 256], strides = [1, 1]} : vector<64x256xf32> to vector<32x256xf32>
    %19 = arith.truncf %18 : vector<32x256xf32> to vector<32x256xbf16>
    %c0_11 = arith.constant 0 : index
    %c0_12 = arith.constant 0 : index
    %c0_13 = arith.constant 0 : index
    %20 = vector.load %arg6[%c0_11, %c0_12, %c0_13] : memref<1x32x256xbf16, #tpu.memory_space<vmem>>, vector<1x32x256xbf16>
    %21 = vector.shape_cast %20 : vector<1x32x256xbf16> to vector<32x256xbf16>
    %22 = vector.shape_cast %19 : vector<32x256xbf16> to vector<1x32x256xbf16>
    tpu.vector_store %arg6[%c0_11, %c0_12, %c0_13], %22 {strides = array<i32>} : memref<1x32x256xbf16, #tpu.memory_space<vmem>>, vector<1x32x256xbf16>,
    %23 = vector.extract_strided_slice %17 {offsets = [32, 0], sizes = [32, 256], strides = [1, 1]} : vector<64x256xf32> to vector<32x256xf32>
    %24 = tpu.transpose %23, [1, 0] : vector<32x256xf32> -> vector<256x32xf32>
    %25 = arith.truncf %24 : vector<256x32xf32> to vector<256x32xbf16>
    %c0_14 = arith.constant 0 : index
    %c0_15 = arith.constant 0 : index
    %c0_16 = arith.constant 0 : index
    %26 = vector.load %arg7[%c0_14, %c0_15, %c0_16] : memref<1x256x32xbf16, #tpu.memory_space<vmem>>, vector<1x256x32xbf16>
    %27 = vector.shape_cast %26 : vector<1x256x32xbf16> to vector<256x32xbf16>
    %28 = vector.shape_cast %25 : vector<256x32xbf16> to vector<1x256x32xbf16>
    tpu.vector_store %arg7[%c0_14, %c0_15, %c0_16], %28 {strides = array<i32>} : memref<1x256x32xbf16, #tpu.memory_space<vmem>>, vector<1x256x32xbf16>,
    return
  }
  func.func @transform_0(%arg0: i32, %arg1: i32) -> (i32, i32, i32) {
    %c0_i32 = arith.constant 0 : i32
    %c0_i32_0 = arith.constant 0 : i32
    return %arg0, %c0_i32, %arg1 : i32, i32, i32
  }
  func.func @transform_1(%arg0: i32, %arg1: i32) -> (i32, i32, i32) {
    %c0_i32 = arith.constant 0 : i32
    %c0_i32_0 = arith.constant 0 : i32
    return %arg0, %c0_i32, %arg1 : i32, i32, i32
  }
  func.func @transform_2(%arg0: i32, %arg1: i32) -> (i32, i32) {
    %c0_i32 = arith.constant 0 : i32
    %c0_i32_0 = arith.constant 0 : i32
    %c0_i32_1 = arith.constant 0 : i32
    return %c0_i32, %c0_i32_0 : i32, i32
  }
  func.func @transform_3(%arg0: i32, %arg1: i32) -> (i32, i32) {
    %c0_i32 = arith.constant 0 : i32
    %c0_i32_0 = arith.constant 0 : i32
    %c0_i32_1 = arith.constant 0 : i32
    return %c0_i32, %c0_i32_0 : i32, i32
  }
  func.func @transform_4(%arg0: i32, %arg1: i32) -> (i32, i32, i32) {
    %c0_i32 = arith.constant 0 : i32
    %c0_i32_0 = arith.constant 0 : i32
    return %arg0, %c0_i32, %arg1 : i32, i32, i32
  }
  func.func @transform_5(%arg0: i32, %arg1: i32) -> (i32, i32, i32) {
    %c0_i32 = arith.constant 0 : i32
    %c0_i32_0 = arith.constant 0 : i32
    return %arg0, %arg1, %c0_i32 : i32, i32, i32
  }
}

module attributes {stable_mosaic.version = 11 : i64} {
  func.func @_flash_kernel(%arg0: i32, %arg1: i32, %arg2: i32, %arg3: memref<1x16x256xbf16, #tpu.memory_space<vmem>>, %arg4: memref<1x16x256xbf16, #tpu.memory_space<vmem>>, %arg5: memref<1x256x32xbf16, #tpu.memory_space<vmem>>, %arg6: memref<1x32x256xf32, #tpu.memory_space<vmem>>, %arg7: memref<1xf32, #tpu.memory_space<smem>>, %arg8: memref<1x32x256xf32, #tpu.memory_space<vmem>>, %arg9: memref<256x1xf32, #tpu.memory_space<vmem>>, %arg10: memref<256x1xf32, #tpu.memory_space<vmem>>, %arg11: memref<256x32xf32, #tpu.memory_space<vmem>>) attributes {dimension_semantics = [#tpu.dimension_semantics<parallel>, #tpu.dimension_semantics<parallel>, #tpu.dimension_semantics<arbitrary>], iteration_bounds = array<i64: 2, 1, 1>, scalar_prefetch = 0 : i64, scratch_operands = 3 : i64, tpu.core_type = #tpu.core_type<tc>, window_params = [{transform_indices = @transform_0, window_bounds = array<i64: 1, 16, 256>}, {transform_indices = @transform_1, window_bounds = array<i64: 1, 16, 256>}, {transform_indices = @transform_2, window_bounds = array<i64: 1, 256, 32>}, {transform_indices = @transform_3, window_bounds = array<i64: 1, 32, 256>}, {transform_indices = @transform_4, window_bounds = array<i64: 1>}, {transform_indices = @transform_5, window_bounds = array<i64: 1, 32, 256>}]} {
    %c0_i32 = arith.constant 0 : i32
    %0 = arith.cmpi eq, %arg2, %c0_i32 : i32
    %1 = arith.extui %0 : i1 to i32
    %c0_i32_0 = arith.constant 0 : i32
    %2 = arith.cmpi ne, %1, %c0_i32_0 : i32
    scf.if %2 {
      %cst_26 = arith.constant 0xFF800000 : f32
      %36 = vector.broadcast %cst_26 : f32 to vector<256x1xf32>
      %c0_27 = arith.constant 0 : index
      %c0_28 = arith.constant 0 : index
      %37 = vector.load %arg9[%c0_27, %c0_28] : memref<256x1xf32, #tpu.memory_space<vmem>>, vector<256x1xf32>
      tpu.vector_store %arg9[%c0_27, %c0_28], %36 {strides = array<i32>} : memref<256x1xf32, #tpu.memory_space<vmem>>, vector<256x1xf32>,
      %cst_29 = arith.constant 0.000000e+00 : f32
      %38 = vector.broadcast %cst_29 : f32 to vector<256x1xf32>
      %c0_30 = arith.constant 0 : index
      %c0_31 = arith.constant 0 : index
      %39 = vector.load %arg10[%c0_30, %c0_31] : memref<256x1xf32, #tpu.memory_space<vmem>>, vector<256x1xf32>
      tpu.vector_store %arg10[%c0_30, %c0_31], %38 {strides = array<i32>} : memref<256x1xf32, #tpu.memory_space<vmem>>, vector<256x1xf32>,
      %cst_32 = arith.constant 0.000000e+00 : f32
      %40 = vector.broadcast %cst_32 : f32 to vector<256x32xf32>
      %c0_33 = arith.constant 0 : index
      %c0_34 = arith.constant 0 : index
      %41 = vector.load %arg11[%c0_33, %c0_34] : memref<256x32xf32, #tpu.memory_space<vmem>>, vector<256x32xf32>
      tpu.vector_store %arg11[%c0_33, %c0_34], %40 {strides = array<i32>} : memref<256x32xf32, #tpu.memory_space<vmem>>, vector<256x32xf32>,
    } else {
    }
    %c0 = arith.constant 0 : index
    %c0_1 = arith.constant 0 : index
    %c0_2 = arith.constant 0 : index
    %3 = vector.load %arg3[%c0, %c0_1, %c0_2] : memref<1x16x256xbf16, #tpu.memory_space<vmem>>, vector<1x16x256xbf16>
    %4 = vector.shape_cast %3 : vector<1x16x256xbf16> to vector<16x256xbf16>
    %c0_3 = arith.constant 0 : index
    %c0_4 = arith.constant 0 : index
    %c0_5 = arith.constant 0 : index
    %5 = vector.load %arg4[%c0_3, %c0_4, %c0_5] : memref<1x16x256xbf16, #tpu.memory_space<vmem>>, vector<1x16x256xbf16>
    %6 = vector.shape_cast %5 : vector<1x16x256xbf16> to vector<16x256xbf16>
    %cst = arith.constant dense<0.000000e+00> : vector<256x256xf32>
    %7 = tpu.matmul %4, %6, %cst {dimension_numbers = #tpu.dot_dimension_numbers<[0], [0], [1], [1], [0, 1, 1, 1], [], []>} : vector<16x256xbf16>, vector<16x256xbf16>, vector<256x256xf32> -> vector<256x256xf32>
    %c0_6 = arith.constant 0 : index
    %c0_7 = arith.constant 0 : index
    %8 = vector.load %arg9[%c0_6, %c0_7] : memref<256x1xf32, #tpu.memory_space<vmem>>, vector<256x1xf32>
    %cst_8 = arith.constant dense<0xFF800000> : vector<256xf32>
    %9 = vector.multi_reduction <maximumf>, %7, %cst_8 [1] : vector<256x256xf32> to vector<256xf32>
    %10 = vector.shape_cast %9 : vector<256xf32> to vector<256x1xf32>
    %11 = arith.maximumf %8, %10 : vector<256x1xf32>
    %12 = arith.subf %8, %11 : vector<256x1xf32>
    %13 = math.exp %12 : vector<256x1xf32>
    %14 = vector.broadcast %11 : vector<256x1xf32> to vector<256x256xf32>
    %15 = arith.subf %7, %14 : vector<256x256xf32>
    %16 = math.exp %15 : vector<256x256xf32>
    %c0_9 = arith.constant 0 : index
    %c0_10 = arith.constant 0 : index
    %17 = vector.load %arg10[%c0_9, %c0_10] : memref<256x1xf32, #tpu.memory_space<vmem>>, vector<256x1xf32>
    %18 = arith.mulf %13, %17 : vector<256x1xf32>
    %cst_11 = arith.constant dense<0.000000e+00> : vector<256xf32>
    %19 = vector.multi_reduction <add>, %16, %cst_11 [1] : vector<256x256xf32> to vector<256xf32>
    %20 = vector.shape_cast %19 : vector<256xf32> to vector<256x1xf32>
    %21 = arith.addf %18, %20 : vector<256x1xf32>
    %c0_12 = arith.constant 0 : index
    %c0_13 = arith.constant 0 : index
    %22 = vector.load %arg10[%c0_12, %c0_13] : memref<256x1xf32, #tpu.memory_space<vmem>>, vector<256x1xf32>
    tpu.vector_store %arg10[%c0_12, %c0_13], %21 {strides = array<i32>} : memref<256x1xf32, #tpu.memory_space<vmem>>, vector<256x1xf32>,
    %c0_14 = arith.constant 0 : index
    %c0_15 = arith.constant 0 : index
    %23 = vector.load %arg11[%c0_14, %c0_15] : memref<256x32xf32, #tpu.memory_space<vmem>>, vector<256x32xf32>
    %24 = vector.broadcast %13 : vector<256x1xf32> to vector<256x32xf32>
    %25 = arith.mulf %24, %23 : vector<256x32xf32>
    %26 = arith.truncf %16 : vector<256x256xf32> to vector<256x256xbf16>
    %c0_16 = arith.constant 0 : index
    %c0_17 = arith.constant 0 : index
    %c0_18 = arith.constant 0 : index
    %27 = vector.load %arg5[%c0_16, %c0_17, %c0_18] : memref<1x256x32xbf16, #tpu.memory_space<vmem>>, vector<1x256x32xbf16>
    %28 = vector.shape_cast %27 : vector<1x256x32xbf16> to vector<256x32xbf16>
    %cst_19 = arith.constant dense<0.000000e+00> : vector<256x32xf32>
    %29 = tpu.matmul %26, %28, %cst_19 {dimension_numbers = #tpu.dot_dimension_numbers<[1], [0], [0], [1], [0, 0, 1, 1], [], []>} : vector<256x256xbf16>, vector<256x32xbf16>, vector<256x32xf32> -> vector<256x32xf32>
    %30 = arith.addf %25, %29 : vector<256x32xf32>
    %c0_20 = arith.constant 0 : index
    %c0_21 = arith.constant 0 : index
    %31 = vector.load %arg11[%c0_20, %c0_21] : memref<256x32xf32, #tpu.memory_space<vmem>>, vector<256x32xf32>
    tpu.vector_store %arg11[%c0_20, %c0_21], %30 {strides = array<i32>} : memref<256x32xf32, #tpu.memory_space<vmem>>, vector<256x32xf32>,
    %c0_22 = arith.constant 0 : index
    %c0_23 = arith.constant 0 : index
    %32 = vector.load %arg9[%c0_22, %c0_23] : memref<256x1xf32, #tpu.memory_space<vmem>>, vector<256x1xf32>
    tpu.vector_store %arg9[%c0_22, %c0_23], %11 {strides = array<i32>} : memref<256x1xf32, #tpu.memory_space<vmem>>, vector<256x1xf32>,
    %c0_i32_24 = arith.constant 0 : i32
    %33 = arith.cmpi eq, %arg2, %c0_i32_24 : i32
    %34 = arith.extui %33 : i1 to i32
    %c0_i32_25 = arith.constant 0 : i32
    %35 = arith.cmpi ne, %34, %c0_i32_25 : i32
    scf.if %35 {
      %c0_26 = arith.constant 0 : index
      %c0_27 = arith.constant 0 : index
      %36 = vector.load %arg11[%c0_26, %c0_27] : memref<256x32xf32, #tpu.memory_space<vmem>>, vector<256x32xf32>
      %c0_28 = arith.constant 0 : index
      %c0_29 = arith.constant 0 : index
      %37 = vector.load %arg10[%c0_28, %c0_29] : memref<256x1xf32, #tpu.memory_space<vmem>>, vector<256x1xf32>
      %38 = tpu.reciprocal %37 {approx = true} : vector<256x1xf32> -> vector<256x1xf32>
      %39 = vector.broadcast %38 : vector<256x1xf32> to vector<256x32xf32>
      %40 = arith.mulf %36, %39 : vector<256x32xf32>
      %c0_30 = arith.constant 0 : index
      %41 = memref.load %arg7[%c0_30] : memref<1xf32, #tpu.memory_space<smem>>
      %42 = tpu.transpose %40, [1, 0] : vector<256x32xf32> -> vector<32x256xf32>
      %43 = vector.broadcast %41 : f32 to vector<32x256xf32>
      %44 = arith.mulf %43, %42 : vector<32x256xf32>
      %c0_31 = arith.constant 0 : index
      %c0_32 = arith.constant 0 : index
      %c0_33 = arith.constant 0 : index
      %45 = vector.load %arg6[%c0_31, %c0_32, %c0_33] : memref<1x32x256xf32, #tpu.memory_space<vmem>>, vector<1x32x256xf32>
      %46 = vector.shape_cast %45 : vector<1x32x256xf32> to vector<32x256xf32>
      %47 = arith.addf %44, %46 : vector<32x256xf32>
      %c0_34 = arith.constant 0 : index
      %c0_35 = arith.constant 0 : index
      %c0_36 = arith.constant 0 : index
      %48 = vector.load %arg8[%c0_34, %c0_35, %c0_36] : memref<1x32x256xf32, #tpu.memory_space<vmem>>, vector<1x32x256xf32>
      %49 = vector.shape_cast %48 : vector<1x32x256xf32> to vector<32x256xf32>
      %50 = vector.shape_cast %47 : vector<32x256xf32> to vector<1x32x256xf32>
      tpu.vector_store %arg8[%c0_34, %c0_35, %c0_36], %50 {strides = array<i32>} : memref<1x32x256xf32, #tpu.memory_space<vmem>>, vector<1x32x256xf32>,
    } else {
    }
    return
  }
  func.func @transform_0(%arg0: i32, %arg1: i32, %arg2: i32) -> (i32, i32, i32) {
    %c0_i32 = arith.constant 0 : i32
    %c0_i32_0 = arith.constant 0 : i32
    return %arg0, %c0_i32, %arg1 : i32, i32, i32
  }
  func.func @transform_1(%arg0: i32, %arg1: i32, %arg2: i32) -> (i32, i32, i32) {
    %c1_i32 = arith.constant 1 : i32
    %c0_i32 = arith.constant 0 : i32
    return %arg0, %c1_i32, %arg2 : i32, i32, i32
  }
  func.func @transform_2(%arg0: i32, %arg1: i32, %arg2: i32) -> (i32, i32, i32) {
    %c0_i32 = arith.constant 0 : i32
    %c0_i32_0 = arith.constant 0 : i32
    return %arg0, %arg2, %c0_i32 : i32, i32, i32
  }
  func.func @transform_3(%arg0: i32, %arg1: i32, %arg2: i32) -> (i32, i32, i32) {
    %c0_i32 = arith.constant 0 : i32
    %c0_i32_0 = arith.constant 0 : i32
    return %arg0, %c0_i32, %arg1 : i32, i32, i32
  }
  func.func @transform_4(%arg0: i32, %arg1: i32, %arg2: i32) -> i32 {
    %c0_i32 = arith.constant 0 : i32
    %c0_i32_0 = arith.constant 0 : i32
    return %c0_i32 : i32
  }
  func.func @transform_5(%arg0: i32, %arg1: i32, %arg2: i32) -> (i32, i32, i32) {
    %c0_i32 = arith.constant 0 : i32
    %c0_i32_0 = arith.constant 0 : i32
    return %arg0, %c0_i32, %arg1 : i32, i32, i32
  }
}

</mosaic_0001>

<llo_original>
// kernel: change_guide_forward.2
$region0: #{change_guide_forward.2}
  #allocation0 [shape = 'u32[]', space=smem, size = 0x4, offset = 0x4, fixed_abs, tag = 'smem constant byte address 0x4 - core index']
  #allocation1 [shape = 'u32[72,128]{1,0:T(1,128)}', space=vmem, size = 0x9000, scoped, tag = 'internal scratch']
  %s0 = inlined_call_operand.vmem [shape: f32[2,32,256], index: 0, kind: input, shape index: {}]
  %s1 = inlined_call_operand.vmem [shape: f32[2,1,256], index: 1, kind: input, shape index: {}]
  %s2 = inlined_call_operand.vmem [shape: f32[64,32], index: 2, kind: input, shape index: {}]
  %s3 = inlined_call_operand.vmem [shape: f32[64,1], index: 3, kind: input, shape index: {}]
  %s4 = inlined_call_operand.vmem [shape: bf16[2,32,256], index: 4, kind: output, shape index: {0}]
  %s5 = inlined_call_operand.vmem [shape: bf16[2,256,32], index: 5, kind: output, shape index: {1}]
  %6 = xla_tuple %s4, %s5
  %s7 = sld [smem:[#allocation0]]
  $region57: #{change_guide_forward.2} parent=0
    _
  %s9 = ssub.s32 1, %s7
  %s10 = scalar_select 0, %s9, %s7
  loop: start=0, step=1, limit=4
  $region2: #{change_guide_forward.2} parent=0 // loop_pre_header
    _
  $region3: #{change_guide_forward.2} parent=0 // loop_header
    %s12 = sphi 0, %s16
    %p13 = scmp.ge.s32.totalorder %s12, 4
    %s19 = sphi 0, %s31
    %s20 = sphi 0, %s27
    %s21 = sphi 0, %s19
    %s22 = sphi 0, %s20
    %s23 = sphi 0, %s21
    %s24 = sphi 0, %s22
    %s36 = sphi 0, %s38
    %s39 = sphi 0, %s36
    %s40 = sphi 0, %s39
    %s56 = sphi 0, %s40
    %s64 = sphi 0, %s66
    %s67 = sphi 0, %s64
    %s68 = sphi 0, %s67
    %s84 = sphi 0, %s68
    %s88 = sphi 0, %s88
    %s90 = sphi 0, %s88
    %s91 = sphi 0, %s90
    %s105 = sphi 0, %s91
    %s109 = sphi 0, %s109
    %s111 = sphi 0, %s109
    %s112 = sphi 0, %s111
    %s126 = sphi 0, %s112
    %s134 = sphi 0, %s136
    %s137 = sphi 0, %s134
    %s138 = sphi 0, %s137
    %s154 = sphi 0, %s138
    %s162 = sphi 0, %s164
    %s165 = sphi 0, %s162
    %s166 = sphi 0, %s165
    %s182 = sphi 0, %s166
  $region4: #{change_guide_forward.2} parent=0 // loop_header_branch
    %15 = sbr.rel (%p13) target = $region8
  $region5: #{change_guide_forward.2} parent=0 // loop_body
    %s17 = ssub.s32 %s12, 1
    %s18 = ssub.s32 %s12, 2
    %s25 = sadd.s32 1, %s20
    %p26 = scmp.ge.s32.totalorder %s25, 1
    %s27 = scalar_select %p26, 0, %s25
    %s28 = sadd.s32 1, %s19
    %s29 = scalar_select %p26, %s28, %s19
    %p30 = scmp.ge.s32.totalorder %s29, 2
    %s31 = scalar_select %p30, 0, %s29
    %s32 = ssub.s32 %s19, %s31
    %s33 = ssub.s32 %s20, %s27
    %s34 = sor.u32 %s32, %s33
    %p35 = scmp.eq.s32.totalorder %s34, 0
    %s37 = sadd.s32 %s36, 1
    %s38 = scalar_select %p35, %s36, %s37
    %p41 = pneg %p35
    %p42 = scmp.eq.s32.totalorder %s12, 1
    %p43 = por %p41, %p42
    %p44 = scmp.ne.s32.totalorder %s36, %s39
    %p45 = scmp.eq.s32.totalorder %s12, 0
    %p46 = por %p44, %p45
    %p47 = scmp.ne.s32.totalorder %s36, %s39
    %p48 = scmp.eq.s32.totalorder %s17, 1
    %p49 = por %p47, %p48
    %p50 = scmp.ne.s32.totalorder %s39, %s40
    %p51 = scmp.eq.s32.totalorder %s17, 0
    %p52 = por %p50, %p51
    %p53 = scmp.ne.s32.totalorder %s39, %s40
    %p54 = scmp.eq.s32.totalorder %s18, 1
    %p55 = por %p53, %p54
    %p57 = scmp.ne.s32.totalorder %s40, %s56
    %p58 = scmp.eq.s32.totalorder %s18, 0
    %p59 = por %p57, %p58
    %s60 = ssub.s32 %s19, %s31
    %s61 = ssub.s32 %s20, %s27
    %s62 = sor.u32 %s60, %s61
    %p63 = scmp.eq.s32.totalorder %s62, 0
    %s65 = sadd.s32 %s64, 1
    %s66 = scalar_select %p63, %s64, %s65
    %p69 = pneg %p63
    %p70 = scmp.eq.s32.totalorder %s12, 1
    %p71 = por %p69, %p70
    %p72 = scmp.ne.s32.totalorder %s64, %s67
    %p73 = scmp.eq.s32.totalorder %s12, 0
    %p74 = por %p72, %p73
    %p75 = scmp.ne.s32.totalorder %s64, %s67
    %p76 = scmp.eq.s32.totalorder %s17, 1
    %p77 = por %p75, %p76
    %p78 = scmp.ne.s32.totalorder %s67, %s68
    %p79 = scmp.eq.s32.totalorder %s17, 0
    %p80 = por %p78, %p79
    %p81 = scmp.ne.s32.totalorder %s67, %s68
    %p82 = scmp.eq.s32.totalorder %s18, 1
    %p83 = por %p81, %p82
    %p85 = scmp.ne.s32.totalorder %s68, %s84
    %p86 = scmp.eq.s32.totalorder %s18, 0
    %p87 = por %p85, %p86
    %s89 = sadd.s32 %s88, 1
    %p92 = scmp.eq.s32.totalorder %s12, 1
    %p93 = scmp.ne.s32.totalorder %s88, %s90
    %p94 = scmp.eq.s32.totalorder %s12, 0
    %p95 = por %p93, %p94
    %p96 = scmp.ne.s32.totalorder %s88, %s90
    %p97 = scmp.eq.s32.totalorder %s17, 1
    %p98 = por %p96, %p97
    %p99 = scmp.ne.s32.totalorder %s90, %s91
    %p100 = scmp.eq.s32.totalorder %s17, 0
    %p101 = por %p99, %p100
    %p102 = scmp.ne.s32.totalorder %s90, %s91
    %p103 = scmp.eq.s32.totalorder %s18, 1
    %p104 = por %p102, %p103
    %p106 = scmp.ne.s32.totalorder %s91, %s105
    %p107 = scmp.eq.s32.totalorder %s18, 0
    %p108 = por %p106, %p107
    %s110 = sadd.s32 %s109, 1
    %p113 = scmp.eq.s32.totalorder %s12, 1
    %p114 = scmp.ne.s32.totalorder %s109, %s111
    %p115 = scmp.eq.s32.totalorder %s12, 0
    %p116 = por %p114, %p115
    %p117 = scmp.ne.s32.totalorder %s109, %s111
    %p118 = scmp.eq.s32.totalorder %s17, 1
    %p119 = por %p117, %p118
    %p120 = scmp.ne.s32.totalorder %s111, %s112
    %p121 = scmp.eq.s32.totalorder %s17, 0
    %p122 = por %p120, %p121
    %p123 = scmp.ne.s32.totalorder %s111, %s112
    %p124 = scmp.eq.s32.totalorder %s18, 1
    %p125 = por %p123, %p124
    %p127 = scmp.ne.s32.totalorder %s112, %s126
    %p128 = scmp.eq.s32.totalorder %s18, 0
    %p129 = por %p127, %p128
    %s130 = ssub.s32 %s19, %s31
    %s131 = ssub.s32 %s20, %s27
    %s132 = sor.u32 %s130, %s131
    %p133 = scmp.eq.s32.totalorder %s132, 0
    %s135 = sadd.s32 %s134, 1
    %s136 = scalar_select %p133, %s134, %s135
    %p139 = pneg %p133
    %p140 = scmp.eq.s32.totalorder %s12, 1
    %p141 = por %p139, %p140
    %p142 = scmp.ne.s32.totalorder %s134, %s137
    %p143 = scmp.eq.s32.totalorder %s12, 0
    %p144 = por %p142, %p143
    %p145 = scmp.ne.s32.totalorder %s134, %s137
    %p146 = scmp.eq.s32.totalorder %s17, 1
    %p147 = por %p145, %p146
    %p148 = scmp.ne.s32.totalorder %s137, %s138
    %p149 = scmp.eq.s32.totalorder %s17, 0
    %p150 = por %p148, %p149
    %p151 = scmp.ne.s32.totalorder %s137, %s138
    %p152 = scmp.eq.s32.totalorder %s18, 1
    %p153 = por %p151, %p152
    %p155 = scmp.ne.s32.totalorder %s138, %s154
    %p156 = scmp.eq.s32.totalorder %s18, 0
    %p157 = por %p155, %p156
    %s158 = ssub.s32 %s19, %s31
    %s159 = ssub.s32 %s20, %s27
    %s160 = sor.u32 %s158, %s159
    %p161 = scmp.eq.s32.totalorder %s160, 0
    %s163 = sadd.s32 %s162, 1
    %s164 = scalar_select %p161, %s162, %s163
    %p167 = pneg %p161
    %p168 = scmp.eq.s32.totalorder %s12, 1
    %p169 = por %p167, %p168
    %p170 = scmp.ne.s32.totalorder %s162, %s165
    %p171 = scmp.eq.s32.totalorder %s12, 0
    %p172 = por %p170, %p171
    %p173 = scmp.ne.s32.totalorder %s162, %s165
    %p174 = scmp.eq.s32.totalorder %s17, 1
    %p175 = por %p173, %p174
    %p176 = scmp.ne.s32.totalorder %s165, %s166
    %p177 = scmp.eq.s32.totalorder %s17, 0
    %p178 = por %p176, %p177
    %p179 = scmp.ne.s32.totalorder %s165, %s166
    %p180 = scmp.eq.s32.totalorder %s18, 1
    %p181 = por %p179, %p180
    %p183 = scmp.ne.s32.totalorder %s166, %s182
    %p184 = scmp.eq.s32.totalorder %s18, 0
    %p185 = por %p183, %p184
    %p186 = scmp.le.s32.totalorder 1, %s12
    %p187 = scmp.lt.s32.totalorder %s12, 3
    %p188 = pnand %p186, %p187
    %p189 = pneg %p188
    // Predicated region
    $region9: #{change_guide_forward.2} parent=5 // pred_check
      _
    $region10: #{change_guide_forward.2} parent=5 // pred_check_branch
      %191 = sbr.rel (%p188) target = $region12
    $region11: #{change_guide_forward.2} parent=5 // pred_region
      %s192 = ssub.s32 %s12, 1
      // Predicated region
      $region13: #{change_guide_forward.2} parent=11 // pred_check
        %p193 = pneg %p101
      $region14: #{change_guide_forward.2} parent=11 // pred_check_branch
        %195 = sbr.rel (%p193) target = $region16
      $region15: #{change_guide_forward.2} parent=11 // pred_region
        _
      $region16: #{change_guide_forward.2} parent=11 // pred_fallthru
        _
      // Predicated region
      $region17: #{change_guide_forward.2} parent=11 // pred_check
        %p196 = pneg %p122
      $region18: #{change_guide_forward.2} parent=11 // pred_check_branch
        %198 = sbr.rel (%p196) target = $region20
      $region19: #{change_guide_forward.2} parent=11 // pred_region
        _
      $region20: #{change_guide_forward.2} parent=11 // pred_fallthru
        _
    $region12: #{change_guide_forward.2} parent=5 // pred_fallthru
      _
    %p199 = scmp.lt.s32.totalorder %s12, 2
    // Predicated region
    $region21: #{change_guide_forward.2} parent=5 // pred_check
      %p200 = pneg %p199
    $region22: #{change_guide_forward.2} parent=5 // pred_check_branch
      %202 = sbr.rel (%p200) target = $region24
    $region23: #{change_guide_forward.2} parent=5 // pred_region
      // Predicated region
      $region25: #{change_guide_forward.2} parent=23 // pred_check
        %p203 = pneg %p46
      $region26: #{change_guide_forward.2} parent=23 // pred_check_branch
        %205 = sbr.rel (%p203) target = $region28
      $region27: #{change_guide_forward.2} parent=23 // pred_region
        %s206 = smul.u32 2, %s20
        %p207 = scmp.lt.s32.totalorder %s19, 1
        %s208 = scalar_select %p207, %s19, 1
        %p209 = scmp.lt.s32.totalorder %s206, 1
        %s210 = scalar_select %p209, %s206, 1
        %s211 = smul.addr %s208, 8
        %s212 = sadd.s32 %s210, %s211
        %s213 = smul.addr %s212, 8
        %s214 = scalar_lea.vmem %s0, %s213
        %s215 = smul.u32 2, %s20
      $region28: #{change_guide_forward.2} parent=23 // pred_fallthru
        _
      // Predicated region
      $region29: #{change_guide_forward.2} parent=23 // pred_check
        %p216 = pneg %p74
      $region30: #{change_guide_forward.2} parent=23 // pred_check_branch
        %218 = sbr.rel (%p216) target = $region32
      $region31: #{change_guide_forward.2} parent=23 // pred_region
        %s219 = smul.u32 2, %s20
        %p220 = scmp.lt.s32.totalorder %s19, 1
        %s221 = scalar_select %p220, %s19, 1
        %p222 = scmp.lt.s32.totalorder %s219, 1
        %s223 = scalar_select %p222, %s219, 1
        %s224 = smul.addr %s221, 2
        %s225 = sadd.s32 %s223, %s224
        %s226 = scalar_lea.vmem %s1, %s225
        %s227 = smul.u32 2, %s20
      $region32: #{change_guide_forward.2} parent=23 // pred_fallthru
        _
    $region24: #{change_guide_forward.2} parent=5 // pred_fallthru
      _
    %p228 = scmp.le.s32.totalorder 1, %s12
    %p229 = scmp.lt.s32.totalorder %s12, 3
    %p230 = pnand %p228, %p229
    %p231 = pneg %p230
    // Predicated region
    $region33: #{change_guide_forward.2} parent=5 // pred_check
      _
    $region34: #{change_guide_forward.2} parent=5 // pred_check_branch
      %233 = sbr.rel (%p230) target = $region36
    $region35: #{change_guide_forward.2} parent=5 // pred_region
      %s234 = ssub.s32 %s12, 1
      %s235 = smul.u32 2, %s22
      %p236 = scmp.lt.s32.totalorder %s21, 1
      %s237 = scalar_select %p236, %s21, 1
      %p238 = scmp.lt.s32.totalorder %s235, 1
      %s239 = scalar_select %p238, %s235, 1
      %s240 = smul.addr %s237, 8
      %s241 = sadd.s32 %s239, %s240
      %s242 = smul.addr %s241, 8
      %s243 = scalar_lea.vmem %s0, %s242
      %p244 = pneg %p52
      %p245 = pneg %p49
      %s246 = smul.u32 2, %s22
      %p247 = scmp.lt.s32.totalorder %s21, 1
      %s248 = scalar_select %p247, %s21, 1
      %p249 = scmp.lt.s32.totalorder %s246, 1
      %s250 = scalar_select %p249, %s246, 1
      %s251 = smul.addr %s248, 2
      %s252 = sadd.s32 %s250, %s251
      %s253 = scalar_lea.vmem %s1, %s252
      %p254 = pneg %p80
      %p255 = pneg %p77
      %p256 = pneg %p101
      %p257 = pneg %p98
      %p258 = pneg %p122
      %p259 = pneg %p119
      %p260 = pneg %p150
      %p261 = pneg %p147
      %s262 = smul.u32 2, %s22
      %p263 = scmp.lt.s32.totalorder %s21, 1
      %s264 = scalar_select %p263, %s21, 1
      %p265 = scmp.lt.s32.totalorder %s262, 1
      %s266 = scalar_select %p265, %s262, 1
      %s267 = smul.addr %s264, 8
      %s268 = sadd.s32 %s266, %s267
      %s269 = smul.addr %s268, 4
      %s270 = scalar_lea.vmem %s4, %s269
      %p271 = pneg %p178
      %p272 = pneg %p175
      %s273 = smul.u32 32, %s22
      %p274 = scmp.lt.s32.totalorder %s21, 1
      %s275 = scalar_select %p274, %s21, 1
      %p276 = scmp.lt.s32.totalorder %s273, 31
      %s277 = scalar_select %p276, %s273, 31
      %s278 = smul.addr %s275, 32
      %s279 = sadd.s32 %s277, %s278
      %s280 = smul.addr %s279, 4
      %s281 = scalar_lea.vmem %s5, %s280
      %s282 = smul.u32 2, %s22
      %p283 = scmp.lt.s32.totalorder %s21, 1
      %s284 = scalar_select %p283, %s21, 1
      %p285 = scmp.lt.s32.totalorder %s282, 1
      %s286 = scalar_select %p285, %s282, 1
      %s287 = smul.addr %s284, 8
      %s288 = sadd.s32 %s286, %s287
      %s289 = smul.addr %s288, 8
      %s290 = scalar_lea.vmem %s0, %s289
      %s291 = smul.u32 2, %s22
      %s292 = smul.u32 2, %s22
      %p293 = scmp.lt.s32.totalorder %s21, 1
      %s294 = scalar_select %p293, %s21, 1
      %p295 = scmp.lt.s32.totalorder %s292, 1
      %s296 = scalar_select %p295, %s292, 1
      %s297 = smul.addr %s294, 2
      %s298 = sadd.s32 %s296, %s297
      %s299 = scalar_lea.vmem %s1, %s298
      %s300 = smul.u32 2, %s22
      %s301 = smul.u32 2, %s22
      %p302 = scmp.lt.s32.totalorder %s21, 1
      %s303 = scalar_select %p302, %s21, 1
      %p304 = scmp.lt.s32.totalorder %s301, 1
      %s305 = scalar_select %p304, %s301, 1
      %s306 = smul.addr %s303, 8
      %s307 = sadd.s32 %s305, %s306
      %s308 = smul.addr %s307, 4
      %s309 = scalar_lea.vmem %s4, %s308
      %s310 = smul.u32 2, %s22
      %s311 = smul.u32 32, %s22
      %p312 = scmp.lt.s32.totalorder %s21, 1
      %s313 = scalar_select %p312, %s21, 1
      %p314 = scmp.lt.s32.totalorder %s311, 31
      %s315 = scalar_select %p314, %s311, 31
      %s316 = smul.addr %s313, 32
      %s317 = sadd.s32 %s315, %s316
      %s318 = smul.addr %s317, 4
      %s319 = scalar_lea.vmem %s5, %s318
      %s320 = smul.u32 32, %s22
      %v321 = vld [vmem:[%s290] sm:$0xff]
      %v322 = vld [vmem:[%s290 + $0x8] sm:$0xff]
      %v323 = vld [vmem:[%s290 + $0x10] sm:$0xff]
      %v324 = vld [vmem:[%s290 + $0x18] sm:$0xff]
      %v325 = vld [vmem:[%s290 + $0x20] sm:$0xff]
      %v326 = vld [vmem:[%s290 + $0x28] sm:$0xff]
      %v327 = vld [vmem:[%s290 + $0x30] sm:$0xff]
      %v328 = vld [vmem:[%s290 + $0x38] sm:$0xff]
      %v329 = vld [vmem:[%s299] sm:$0x3]
      %v330 = vxor.u32 %v329, 2147483648
      %v331 = vmul.f32 %v330, 1.442695
      %v332 = vpow.pop %v331
      %v333 = vadd.f32 %v332, 1.0
      %v334 = vrcp.pop %v333
      %v335 = vmul.f32 %v333, %v334
      %v336 = vsub.f32 1.0, %v335
      %v337 = vmul.f32 %v334, %v336
      %v338 = vadd.f32 %v334, %v337
      %vm339 = vweird.f32 %v333
      %vm340 = vweird.f32 %v334
      %vm341 = vmor %vm339, %vm340
      %v342 = vsel %vm341, %v334, %v338
      %v343 = vand.u32 2147483647, %v333
      %vm344 = vcmp.eq.f32.partialorder %v343, 8.507059e+37
      %v345 = vand.u32 %v333, 2147483648
      %v346 = vor.u32 1.1754944e-38, %v345
      %v347 = vsel %vm344, %v346, %v342
      %v348 = vmul.f32 1.0, %v347
      %v349 = vadd.f32 %v348, 1.0
      %v350 = vld [vmem:[%s2] sm:$0xff]
      %v351 = vld [vmem:[%s2 + $0x8] sm:$0xff]
      %v352 = vld [vmem:[%s2 + $0x10] sm:$0xff]
      %v353 = vld [vmem:[%s2 + $0x18] sm:$0xff]
      %v354 = vld [vmem:[%s2 + $0x20] sm:$0xff]
      %v355 = vld [vmem:[%s2 + $0x28] sm:$0xff]
      %v356 = vld [vmem:[%s2 + $0x30] sm:$0xff]
      %v357 = vld [vmem:[%s2 + $0x38] sm:$0xff]
      %v358 = vld [vmem:[%s3] sm:$0xff]
      %v359 = vld [vmem:[%s3 + $0x8] sm:$0xff]
      %v360 = vld [vmem:[%s3 + $0x10] sm:$0xff]
      %v361 = vld [vmem:[%s3 + $0x18] sm:$0xff]
      %v362 = vld [vmem:[%s3 + $0x20] sm:$0xff]
      %v363 = vld [vmem:[%s3 + $0x28] sm:$0xff]
      %v364 = vld [vmem:[%s3 + $0x30] sm:$0xff]
      %v365 = vld [vmem:[%s3 + $0x38] sm:$0xff]
      %367 = vset.pattern.permute.xlu0 0
      %368 = vperm.xlu0 %367, %v358
      %v369 = vpop.permute.xlu0 %368
      %372 = vset.pattern.permute.xlu0 0
      %373 = vperm.xlu0 %372, %v359
      %v374 = vpop.permute.xlu0 %373
      %377 = vset.pattern.permute.xlu0 0
      %378 = vperm.xlu0 %377, %v360
      %v379 = vpop.permute.xlu0 %378
      %382 = vset.pattern.permute.xlu0 0
      %383 = vperm.xlu0 %382, %v361
      %v384 = vpop.permute.xlu0 %383
      %387 = vset.pattern.permute.xlu0 0
      %388 = vperm.xlu0 %387, %v362
      %v389 = vpop.permute.xlu0 %388
      %392 = vset.pattern.permute.xlu0 0
      %393 = vperm.xlu0 %392, %v363
      %v394 = vpop.permute.xlu0 %393
      %397 = vset.pattern.permute.xlu0 0
      %398 = vperm.xlu0 %397, %v364
      %v399 = vpop.permute.xlu0 %398
      %402 = vset.pattern.permute.xlu0 0
      %403 = vperm.xlu0 %402, %v365
      %v404 = vpop.permute.xlu0 %403
      %vm406 = vcmask 261120
      %v408 = vsel %vm406, %v350, 0
      %v411 = vsel %vm406, %v351, 0
      %v414 = vsel %vm406, %v352, 0
      %v417 = vsel %vm406, %v353, 0
      %v420 = vsel %vm406, %v354, 0
      %v423 = vsel %vm406, %v355, 0
      %v426 = vsel %vm406, %v356, 0
      %v429 = vsel %vm406, %v357, 0
      %431 = vmatpush.msra.mxu0 0.0
      %432 = vmatpush.msra.mxu0 0.0
      %433 = vmatpush.msra.mxu0 0.0
      %434 = vmatpush.msra.mxu0 0.0
      %435 = vmatpush.msra.mxu0 0.0
      %436 = vmatpush.msra.mxu0 0.0
      %437 = vmatpush.msra.mxu0 0.0
      %438 = vmatpush.msra.mxu0 0.0
      %439 = vmatpush.msra.mxu0 0.0
      %440 = vmatpush.msra.mxu0 0.0
      %441 = vmatpush.msra.mxu0 0.0
      %442 = vmatpush.msra.mxu0 0.0
      %443 = vmatpush.msra.mxu0 %v327
      %444 = vmatpush.msra.mxu0 %v325
      %445 = vmatpush.msra.mxu0 %v323
      %446 = vmatpush.msra.mxu0 %v321
      %447 = vmatmul.f32.gmra.mxu0 %v408
      %v448 = vpop.f32.mrf.mxu0
      %v449 = vadd.f32 %v369, %v448
      %450 = vmatmul.f32.gmra.mxu0 %v411
      %v451 = vpop.f32.mrf.mxu0
      %v452 = vadd.f32 %v374, %v451
      %453 = vmatmul.f32.gmra.mxu0 %v414
      %v454 = vpop.f32.mrf.mxu0
      %v455 = vadd.f32 %v379, %v454
      %456 = vmatmul.f32.gmra.mxu0 %v417
      %v457 = vpop.f32.mrf.mxu0
      %v458 = vadd.f32 %v384, %v457
      %459 = vmatmul.f32.gmra.mxu0 %v420
      %v460 = vpop.f32.mrf.mxu0
      %v461 = vadd.f32 %v389, %v460
      %462 = vmatmul.f32.gmra.mxu0 %v423
      %v463 = vpop.f32.mrf.mxu0
      %v464 = vadd.f32 %v394, %v463
      %465 = vmatmul.f32.gmra.mxu0 %v426
      %v466 = vpop.f32.mrf.mxu0
      %v467 = vadd.f32 %v399, %v466
      %468 = vmatmul.f32.gmra.mxu0 %v429
      %v469 = vpop.f32.mrf.mxu0
      %v470 = vadd.f32 %v404, %v469
      %471 = vdwg.mxu0
      %472 = vmatpush.msra.mxu0 0.0
      %473 = vmatpush.msra.mxu0 0.0
      %474 = vmatpush.msra.mxu0 0.0
      %475 = vmatpush.msra.mxu0 0.0
      %476 = vmatpush.msra.mxu0 0.0
      %477 = vmatpush.msra.mxu0 0.0
      %478 = vmatpush.msra.mxu0 0.0
      %479 = vmatpush.msra.mxu0 0.0
      %480 = vmatpush.msra.mxu0 0.0
      %481 = vmatpush.msra.mxu0 0.0
      %482 = vmatpush.msra.mxu0 0.0
      %483 = vmatpush.msra.mxu0 0.0
      %484 = vmatpush.msra.mxu0 %v328
      %485 = vmatpush.msra.mxu0 %v326
      %486 = vmatpush.msra.mxu0 %v324
      %487 = vmatpush.msra.mxu0 %v322
      %488 = vmatmul.f32.gmra.mxu0 %v408
      %v489 = vpop.f32.mrf.mxu0
      %v490 = vadd.f32 %v369, %v489
      %491 = vmatmul.f32.gmra.mxu0 %v411
      %v492 = vpop.f32.mrf.mxu0
      %v493 = vadd.f32 %v374, %v492
      %494 = vmatmul.f32.gmra.mxu0 %v414
      %v495 = vpop.f32.mrf.mxu0
      %v496 = vadd.f32 %v379, %v495
      %497 = vmatmul.f32.gmra.mxu0 %v417
      %v498 = vpop.f32.mrf.mxu0
      %v499 = vadd.f32 %v384, %v498
      %500 = vmatmul.f32.gmra.mxu0 %v420
      %v501 = vpop.f32.mrf.mxu0
      %v502 = vadd.f32 %v389, %v501
      %503 = vmatmul.f32.gmra.mxu0 %v423
      %v504 = vpop.f32.mrf.mxu0
      %v505 = vadd.f32 %v394, %v504
      %506 = vmatmul.f32.gmra.mxu0 %v426
      %v507 = vpop.f32.mrf.mxu0
      %v508 = vadd.f32 %v399, %v507
      %509 = vmatmul.f32.gmra.mxu0 %v429
      %v510 = vpop.f32.mrf.mxu0
      %v511 = vadd.f32 %v404, %v510
      %512 = vdwg.mxu0
      %v514 = vperm.slane %v349, 0
      %v515 = vperm.slane %v349, 1
      %v518 = vmul.f32 %v449, %v514
      %v519 = vmul.f32 %v490, %v515
      %v520 = vmul.f32 %v452, %v514
      %v521 = vmul.f32 %v493, %v515
      %v522 = vmul.f32 %v455, %v514
      %v523 = vmul.f32 %v496, %v515
      %v524 = vmul.f32 %v458, %v514
      %v525 = vmul.f32 %v499, %v515
      %v526 = vmul.f32 %v461, %v514
      %v527 = vmul.f32 %v502, %v515
      %v528 = vmul.f32 %v464, %v514
      %v529 = vmul.f32 %v505, %v515
      %v530 = vmul.f32 %v467, %v514
      %v531 = vmul.f32 %v508, %v515
      %v532 = vmul.f32 %v470, %v514
      %v533 = vmul.f32 %v511, %v515
      %v534 = vpack.c.bf16 %v519, %v518
      %v535 = vpack.c.bf16 %v521, %v520
      %v536 = vpack.c.bf16 %v523, %v522
      %v537 = vpack.c.bf16 %v525, %v524
      %538 = vst [vmem:[%s309] sm:$0xff] %v534
      %539 = vst [vmem:[%s309 + $0x8] sm:$0xff] %v535
      %540 = vst [vmem:[%s309 + $0x10] sm:$0xff] %v536
      %541 = vst [vmem:[%s309 + $0x18] sm:$0xff] %v537
      %542 = vxpose.xlu0.b32.start [1/16] %v526, 128
      %543 = vxpose.xlu0.b32.cont [2/16] %v528, 128
      %544 = vxpose.xlu0.b32.cont [3/16] %v530, 128
      %545 = vxpose.xlu0.b32.cont [4/16] %v532, 128
      %546 = vxpose.xlu0.b32.cont [5/16] 0.0, 128
      %547 = vxpose.xlu0.b32.cont [6/16] 0.0, 128
      %548 = vxpose.xlu0.b32.cont [7/16] 0.0, 128
      %549 = vxpose.xlu0.b32.cont [8/16] 0.0, 128
      %550 = vxpose.xlu0.b32.cont [9/16] 0.0, 128
      %551 = vxpose.xlu0.b32.cont [10/16] 0.0, 128
      %552 = vxpose.xlu0.b32.cont [11/16] 0.0, 128
      %553 = vxpose.xlu0.b32.cont [12/16] 0.0, 128
      %554 = vxpose.xlu0.b32.cont [13/16] 0.0, 128
      %555 = vxpose.xlu0.b32.cont [14/16] 0.0, 128
      %556 = vxpose.xlu0.b32.cont [15/16] 0.0, 128
      %557 = vxpose.xlu0.b32.end [16/16] 0.0, 128
      %v558 = vpop.trf.xlu0
      %v559 = vpop.trf.xlu0
      %v560 = vpop.trf.xlu0
      %v561 = vpop.trf.xlu0
      %v562 = vpop.trf.xlu0
      %v563 = vpop.trf.xlu0
      %v564 = vpop.trf.xlu0
      %v565 = vpop.trf.xlu0
      %v566 = vpop.trf.xlu0
      %v567 = vpop.trf.xlu0
      %v568 = vpop.trf.xlu0
      %v569 = vpop.trf.xlu0
      %v570 = vpop.trf.xlu0
      %v571 = vpop.trf.xlu0
      %v572 = vpop.trf.xlu0
      %v573 = vpop.trf.xlu0
      %574 = vxpose.xlu0.b32.start [1/16] %v527, 128
      %575 = vxpose.xlu0.b32.cont [2/16] %v529, 128
      %576 = vxpose.xlu0.b32.cont [3/16] %v531, 128
      %577 = vxpose.xlu0.b32.cont [4/16] %v533, 128
      %578 = vxpose.xlu0.b32.cont [5/16] 0.0, 128
      %579 = vxpose.xlu0.b32.cont [6/16] 0.0, 128
      %580 = vxpose.xlu0.b32.cont [7/16] 0.0, 128
      %581 = vxpose.xlu0.b32.cont [8/16] 0.0, 128
      %582 = vxpose.xlu0.b32.cont [9/16] 0.0, 128
      %583 = vxpose.xlu0.b32.cont [10/16] 0.0, 128
      %584 = vxpose.xlu0.b32.cont [11/16] 0.0, 128
      %585 = vxpose.xlu0.b32.cont [12/16] 0.0, 128
      %586 = vxpose.xlu0.b32.cont [13/16] 0.0, 128
      %587 = vxpose.xlu0.b32.cont [14/16] 0.0, 128
      %588 = vxpose.xlu0.b32.cont [15/16] 0.0, 128
      %589 = vxpose.xlu0.b32.end [16/16] 0.0, 128
      %v590 = vpop.trf.xlu0
      %v591 = vpop.trf.xlu0
      %v592 = vpop.trf.xlu0
      %v593 = vpop.trf.xlu0
      %v594 = vpop.trf.xlu0
      %v595 = vpop.trf.xlu0
      %v596 = vpop.trf.xlu0
      %v597 = vpop.trf.xlu0
      %v598 = vpop.trf.xlu0
      %v599 = vpop.trf.xlu0
      %v600 = vpop.trf.xlu0
      %v601 = vpop.trf.xlu0
      %v602 = vpop.trf.xlu0
      %v603 = vpop.trf.xlu0
      %v604 = vpop.trf.xlu0
      %v605 = vpop.trf.xlu0
      %v606 = vpack.c.bf16 %v558, %v558
      %v607 = vpack.c.bf16 %v559, %v559
      %v608 = vpack.c.bf16 %v560, %v560
      %v609 = vpack.c.bf16 %v561, %v561
      %v610 = vpack.c.bf16 %v562, %v562
      %v611 = vpack.c.bf16 %v563, %v563
      %v612 = vpack.c.bf16 %v564, %v564
      %v613 = vpack.c.bf16 %v565, %v565
      %v614 = vpack.c.bf16 %v566, %v566
      %v615 = vpack.c.bf16 %v567, %v567
      %v616 = vpack.c.bf16 %v568, %v568
      %v617 = vpack.c.bf16 %v569, %v569
      %v618 = vpack.c.bf16 %v570, %v570
      %v619 = vpack.c.bf16 %v571, %v571
      %v620 = vpack.c.bf16 %v572, %v572
      %v621 = vpack.c.bf16 %v573, %v573
      %v622 = vpack.c.bf16 %v590, %v590
      %v623 = vpack.c.bf16 %v591, %v591
      %v624 = vpack.c.bf16 %v592, %v592
      %v625 = vpack.c.bf16 %v593, %v593
      %v626 = vpack.c.bf16 %v594, %v594
      %v627 = vpack.c.bf16 %v595, %v595
      %v628 = vpack.c.bf16 %v596, %v596
      %v629 = vpack.c.bf16 %v597, %v597
      %v630 = vpack.c.bf16 %v598, %v598
      %v631 = vpack.c.bf16 %v599, %v599
      %v632 = vpack.c.bf16 %v600, %v600
      %v633 = vpack.c.bf16 %v601, %v601
      %v634 = vpack.c.bf16 %v602, %v602
      %v635 = vpack.c.bf16 %v603, %v603
      %v636 = vpack.c.bf16 %v604, %v604
      %v637 = vpack.c.bf16 %v605, %v605
      %vm638 = vcmask 257024
      %639 = vst.msk [vmem:[%s319] sm:$0xf] %vm638, %v606
      %640 = vst.msk [vmem:[%s319 + $0x4] sm:$0xf] %vm638, %v607
      %641 = vst.msk [vmem:[%s319 + $0x8] sm:$0xf] %vm638, %v608
      %642 = vst.msk [vmem:[%s319 + $0xc] sm:$0xf] %vm638, %v609
      %643 = vst.msk [vmem:[%s319 + $0x10] sm:$0xf] %vm638, %v610
      %644 = vst.msk [vmem:[%s319 + $0x14] sm:$0xf] %vm638, %v611
      %645 = vst.msk [vmem:[%s319 + $0x18] sm:$0xf] %vm638, %v612
      %646 = vst.msk [vmem:[%s319 + $0x1c] sm:$0xf] %vm638, %v613
      %647 = vst.msk [vmem:[%s319 + $0x20] sm:$0xf] %vm638, %v614
      %648 = vst.msk [vmem:[%s319 + $0x24] sm:$0xf] %vm638, %v615
      %649 = vst.msk [vmem:[%s319 + $0x28] sm:$0xf] %vm638, %v616
      %650 = vst.msk [vmem:[%s319 + $0x2c] sm:$0xf] %vm638, %v617
      %651 = vst.msk [vmem:[%s319 + $0x30] sm:$0xf] %vm638, %v618
      %652 = vst.msk [vmem:[%s319 + $0x34] sm:$0xf] %vm638, %v619
      %653 = vst.msk [vmem:[%s319 + $0x38] sm:$0xf] %vm638, %v620
      %654 = vst.msk [vmem:[%s319 + $0x3c] sm:$0xf] %vm638, %v621
      %655 = vst.msk [vmem:[%s319 + $0x40] sm:$0xf] %vm638, %v622
      %656 = vst.msk [vmem:[%s319 + $0x44] sm:$0xf] %vm638, %v623
      %657 = vst.msk [vmem:[%s319 + $0x48] sm:$0xf] %vm638, %v624
      %658 = vst.msk [vmem:[%s319 + $0x4c] sm:$0xf] %vm638, %v625
      %659 = vst.msk [vmem:[%s319 + $0x50] sm:$0xf] %vm638, %v626
      %660 = vst.msk [vmem:[%s319 + $0x54] sm:$0xf] %vm638, %v627
      %661 = vst.msk [vmem:[%s319 + $0x58] sm:$0xf] %vm638, %v628
      %662 = vst.msk [vmem:[%s319 + $0x5c] sm:$0xf] %vm638, %v629
      %663 = vst.msk [vmem:[%s319 + $0x60] sm:$0xf] %vm638, %v630
      %664 = vst.msk [vmem:[%s319 + $0x64] sm:$0xf] %vm638, %v631
      %665 = vst.msk [vmem:[%s319 + $0x68] sm:$0xf] %vm638, %v632
      %666 = vst.msk [vmem:[%s319 + $0x6c] sm:$0xf] %vm638, %v633
      %667 = vst.msk [vmem:[%s319 + $0x70] sm:$0xf] %vm638, %v634
      %668 = vst.msk [vmem:[%s319 + $0x74] sm:$0xf] %vm638, %v635
      %669 = vst.msk [vmem:[%s319 + $0x78] sm:$0xf] %vm638, %v636
      %670 = vst.msk [vmem:[%s319 + $0x7c] sm:$0xf] %vm638, %v637
      %s671 = smul.u32 2, %s22
      %p672 = scmp.lt.s32.totalorder %s21, 1
      %s673 = scalar_select %p672, %s21, 1
      %p674 = scmp.lt.s32.totalorder %s671, 1
      %s675 = scalar_select %p674, %s671, 1
      %s676 = smul.addr %s673, 8
      %s677 = sadd.s32 %s675, %s676
      %s678 = smul.addr %s677, 4
      %s679 = scalar_lea.vmem %s4, %s678
      %s680 = smul.u32 32, %s22
      %p681 = scmp.lt.s32.totalorder %s21, 1
      %s682 = scalar_select %p681, %s21, 1
      %p683 = scmp.lt.s32.totalorder %s680, 31
      %s684 = scalar_select %p683, %s680, 31
      %s685 = smul.addr %s682, 32
      %s686 = sadd.s32 %s684, %s685
      %s687 = smul.addr %s686, 4
      %s688 = scalar_lea.vmem %s5, %s687
      // Predicated region
      $region37: #{change_guide_forward.2} parent=35 // pred_check
        %p689 = pneg %p147
      $region38: #{change_guide_forward.2} parent=35 // pred_check_branch
        %691 = sbr.rel (%p689) target = $region40
      $region39: #{change_guide_forward.2} parent=35 // pred_region
        %s692 = smul.u32 2, %s22
      $region40: #{change_guide_forward.2} parent=35 // pred_fallthru
        _
      // Predicated region
      $region41: #{change_guide_forward.2} parent=35 // pred_check
        %p693 = pneg %p175
      $region42: #{change_guide_forward.2} parent=35 // pred_check_branch
        %695 = sbr.rel (%p693) target = $region44
      $region43: #{change_guide_forward.2} parent=35 // pred_region
        %s696 = smul.u32 32, %s22
      $region44: #{change_guide_forward.2} parent=35 // pred_fallthru
        _
    $region36: #{change_guide_forward.2} parent=5 // pred_fallthru
      _
    %p697 = scmp.le.s32.totalorder 2, %s12
    // Predicated region
    $region45: #{change_guide_forward.2} parent=5 // pred_check
      %p698 = pneg %p697
    $region46: #{change_guide_forward.2} parent=5 // pred_check_branch
      %700 = sbr.rel (%p698) target = $region48
    $region47: #{change_guide_forward.2} parent=5 // pred_region
      %s701 = ssub.s32 %s12, 2
      // Predicated region
      $region49: #{change_guide_forward.2} parent=47 // pred_check
        %p702 = pneg %p153
      $region50: #{change_guide_forward.2} parent=47 // pred_check_branch
        %704 = sbr.rel (%p702) target = $region52
      $region51: #{change_guide_forward.2} parent=47 // pred_region
        %s705 = smul.u32 2, %s24
        %p706 = scmp.lt.s32.totalorder %s23, 1
        %s707 = scalar_select %p706, %s23, 1
        %p708 = scmp.lt.s32.totalorder %s705, 1
        %s709 = scalar_select %p708, %s705, 1
        %s710 = smul.addr %s707, 8
        %s711 = sadd.s32 %s709, %s710
        %s712 = smul.addr %s711, 4
        %s713 = scalar_lea.vmem %s4, %s712
      $region52: #{change_guide_forward.2} parent=47 // pred_fallthru
        _
      // Predicated region
      $region53: #{change_guide_forward.2} parent=47 // pred_check
        %p714 = pneg %p181
      $region54: #{change_guide_forward.2} parent=47 // pred_check_branch
        %716 = sbr.rel (%p714) target = $region56
      $region55: #{change_guide_forward.2} parent=47 // pred_region
        %s717 = smul.u32 32, %s24
        %p718 = scmp.lt.s32.totalorder %s23, 1
        %s719 = scalar_select %p718, %s23, 1
        %p720 = scmp.lt.s32.totalorder %s717, 31
        %s721 = scalar_select %p720, %s717, 31
        %s722 = smul.addr %s719, 32
        %s723 = sadd.s32 %s721, %s722
        %s724 = smul.addr %s723, 4
        %s725 = scalar_lea.vmem %s5, %s724
      $region56: #{change_guide_forward.2} parent=47 // pred_fallthru
        _
    $region48: #{change_guide_forward.2} parent=5 // pred_fallthru
      _
  $region6: #{change_guide_forward.2} parent=0 // loop_footer
    %s16 = sadd.s32 1, %s12
  $region7: #{change_guide_forward.2} parent=0 // loop_footer_branch
    %11 = sbr.rel target = $region3
  $region8: #{change_guide_forward.2} parent=0 // loop_exit
    _

// kernel: change_guide_forward.3
$region0: #{change_guide_forward.3}
  #allocation0 [shape = 'u32[]', space=smem, size = 0x4, offset = 0x4, fixed_abs, tag = 'smem constant byte address 0x4 - core index']
  #allocation1 [shape = 'u32[72,128]{1,0:T(1,128)}', space=vmem, size = 0x9000, scoped, tag = 'internal scratch']
  #allocation2 [shape = 'f32[256,1]{1,0:T(8,128)}', space=vmem, size = 0x20000, scoped, tag = 'scratch operand']
  #allocation3 [shape = 'f32[256,1]{1,0:T(8,128)}', space=vmem, size = 0x20000, scoped, tag = 'scratch operand']
  #allocation4 [shape = 'f32[256,32]{1,0:T(8,128)}', space=vmem, size = 0x20000, scoped, tag = 'scratch operand']
  #allocation5 [shape = 'f32[1]{0:T(128)S(6)}', space=smem, size = 0x200, scoped, tag = 'scoped memory for change_guide_forward.3']
  %s0 = inlined_call_operand.vmem [shape: bf16[2,32,256], index: 0, kind: input, shape index: {}, may-alias: {0,1}]
  %s1 = inlined_call_operand.vmem [shape: bf16[2,32,256], index: 1, kind: input, shape index: {}, may-alias: {0,1}]
  %s2 = inlined_call_operand.vmem [shape: bf16[2,256,32], index: 2, kind: input, shape index: {}]
  %s3 = inlined_call_operand.vmem [shape: f32[2,32,256], index: 3, kind: input, shape index: {}]
  %s4 = inlined_call_operand.<no memory space> [shape: f32[1], index: 4, kind: input, shape index: {}]
  %s5 = inlined_call_operand.vmem [shape: f32[2,32,256], index: 5, kind: output, shape index: {}]
  %s6 = sld [smem:[#allocation0]]
  $region61: #{change_guide_forward.3} parent=0
    _
  %s8 = ssub.s32 1, %s6
  %s9 = scalar_select 0, %s8, %s6
  %10 = sst [smem:[#allocation5]] %s4
  loop: start=0, step=1, limit=4
  $region2: #{change_guide_forward.3} parent=0 // loop_pre_header
    _
  $region3: #{change_guide_forward.3} parent=0 // loop_header
    %s12 = sphi 0, %s16
    %p13 = scmp.ge.s32.totalorder %s12, 4
    %s19 = sphi 0, %s38
    %s20 = sphi 0, %s34
    %s21 = sphi 0, %s30
    %s22 = sphi 0, %s19
    %s23 = sphi 0, %s20
    %s24 = sphi 0, %s21
    %s25 = sphi 0, %s22
    %s26 = sphi 0, %s23
    %s27 = sphi 0, %s24
    %s43 = sphi 0, %s45
    %s46 = sphi 0, %s43
    %s47 = sphi 0, %s46
    %s63 = sphi 0, %s47
    %s71 = sphi 0, %s73
    %s74 = sphi 0, %s71
    %s75 = sphi 0, %s74
    %s91 = sphi 0, %s75
    %s99 = sphi 0, %s101
    %s102 = sphi 0, %s99
    %s103 = sphi 0, %s102
    %s119 = sphi 0, %s103
    %s127 = sphi 0, %s129
    %s130 = sphi 0, %s127
    %s131 = sphi 0, %s130
    %s147 = sphi 0, %s131
    %s151 = sphi 0, %s151
    %s153 = sphi 0, %s151
    %s154 = sphi 0, %s153
    %s168 = sphi 0, %s154
    %s176 = sphi 0, %s178
    %s179 = sphi 0, %s176
    %s180 = sphi 0, %s179
    %s196 = sphi 0, %s180
  $region4: #{change_guide_forward.3} parent=0 // loop_header_branch
    %15 = sbr.rel (%p13) target = $region8
  $region5: #{change_guide_forward.3} parent=0 // loop_body
    %s17 = ssub.s32 %s12, 1
    %s18 = ssub.s32 %s12, 2
    %s28 = sadd.s32 1, %s21
    %p29 = scmp.ge.s32.totalorder %s28, 1
    %s30 = scalar_select %p29, 0, %s28
    %s31 = sadd.s32 1, %s20
    %s32 = scalar_select %p29, %s31, %s20
    %p33 = scmp.ge.s32.totalorder %s32, 1
    %s34 = scalar_select %p33, 0, %s32
    %s35 = sadd.s32 1, %s19
    %s36 = scalar_select %p33, %s35, %s19
    %p37 = scmp.ge.s32.totalorder %s36, 2
    %s38 = scalar_select %p37, 0, %s36
    %s39 = ssub.s32 %s19, %s38
    %s40 = ssub.s32 %s20, %s34
    %s41 = sor.u32 %s39, %s40
    %p42 = scmp.eq.s32.totalorder %s41, 0
    %s44 = sadd.s32 %s43, 1
    %s45 = scalar_select %p42, %s43, %s44
    %p48 = pneg %p42
    %p49 = scmp.eq.s32.totalorder %s12, 1
    %p50 = por %p48, %p49
    %p51 = scmp.ne.s32.totalorder %s43, %s46
    %p52 = scmp.eq.s32.totalorder %s12, 0
    %p53 = por %p51, %p52
    %p54 = scmp.ne.s32.totalorder %s43, %s46
    %p55 = scmp.eq.s32.totalorder %s17, 1
    %p56 = por %p54, %p55
    %p57 = scmp.ne.s32.totalorder %s46, %s47
    %p58 = scmp.eq.s32.totalorder %s17, 0
    %p59 = por %p57, %p58
    %p60 = scmp.ne.s32.totalorder %s46, %s47
    %p61 = scmp.eq.s32.totalorder %s18, 1
    %p62 = por %p60, %p61
    %p64 = scmp.ne.s32.totalorder %s47, %s63
    %p65 = scmp.eq.s32.totalorder %s18, 0
    %p66 = por %p64, %p65
    %s67 = ssub.s32 %s19, %s38
    %s68 = ssub.s32 %s21, %s30
    %s69 = sor.u32 %s67, %s68
    %p70 = scmp.eq.s32.totalorder %s69, 0
    %s72 = sadd.s32 %s71, 1
    %s73 = scalar_select %p70, %s71, %s72
    %p76 = pneg %p70
    %p77 = scmp.eq.s32.totalorder %s12, 1
    %p78 = por %p76, %p77
    %p79 = scmp.ne.s32.totalorder %s71, %s74
    %p80 = scmp.eq.s32.totalorder %s12, 0
    %p81 = por %p79, %p80
    %p82 = scmp.ne.s32.totalorder %s71, %s74
    %p83 = scmp.eq.s32.totalorder %s17, 1
    %p84 = por %p82, %p83
    %p85 = scmp.ne.s32.totalorder %s74, %s75
    %p86 = scmp.eq.s32.totalorder %s17, 0
    %p87 = por %p85, %p86
    %p88 = scmp.ne.s32.totalorder %s74, %s75
    %p89 = scmp.eq.s32.totalorder %s18, 1
    %p90 = por %p88, %p89
    %p92 = scmp.ne.s32.totalorder %s75, %s91
    %p93 = scmp.eq.s32.totalorder %s18, 0
    %p94 = por %p92, %p93
    %s95 = ssub.s32 %s19, %s38
    %s96 = ssub.s32 %s21, %s30
    %s97 = sor.u32 %s95, %s96
    %p98 = scmp.eq.s32.totalorder %s97, 0
    %s100 = sadd.s32 %s99, 1
    %s101 = scalar_select %p98, %s99, %s100
    %p104 = pneg %p98
    %p105 = scmp.eq.s32.totalorder %s12, 1
    %p106 = por %p104, %p105
    %p107 = scmp.ne.s32.totalorder %s99, %s102
    %p108 = scmp.eq.s32.totalorder %s12, 0
    %p109 = por %p107, %p108
    %p110 = scmp.ne.s32.totalorder %s99, %s102
    %p111 = scmp.eq.s32.totalorder %s17, 1
    %p112 = por %p110, %p111
    %p113 = scmp.ne.s32.totalorder %s102, %s103
    %p114 = scmp.eq.s32.totalorder %s17, 0
    %p115 = por %p113, %p114
    %p116 = scmp.ne.s32.totalorder %s102, %s103
    %p117 = scmp.eq.s32.totalorder %s18, 1
    %p118 = por %p116, %p117
    %p120 = scmp.ne.s32.totalorder %s103, %s119
    %p121 = scmp.eq.s32.totalorder %s18, 0
    %p122 = por %p120, %p121
    %s123 = ssub.s32 %s19, %s38
    %s124 = ssub.s32 %s20, %s34
    %s125 = sor.u32 %s123, %s124
    %p126 = scmp.eq.s32.totalorder %s125, 0
    %s128 = sadd.s32 %s127, 1
    %s129 = scalar_select %p126, %s127, %s128
    %p132 = pneg %p126
    %p133 = scmp.eq.s32.totalorder %s12, 1
    %p134 = por %p132, %p133
    %p135 = scmp.ne.s32.totalorder %s127, %s130
    %p136 = scmp.eq.s32.totalorder %s12, 0
    %p137 = por %p135, %p136
    %p138 = scmp.ne.s32.totalorder %s127, %s130
    %p139 = scmp.eq.s32.totalorder %s17, 1
    %p140 = por %p138, %p139
    %p141 = scmp.ne.s32.totalorder %s130, %s131
    %p142 = scmp.eq.s32.totalorder %s17, 0
    %p143 = por %p141, %p142
    %p144 = scmp.ne.s32.totalorder %s130, %s131
    %p145 = scmp.eq.s32.totalorder %s18, 1
    %p146 = por %p144, %p145
    %p148 = scmp.ne.s32.totalorder %s131, %s147
    %p149 = scmp.eq.s32.totalorder %s18, 0
    %p150 = por %p148, %p149
    %s152 = sadd.s32 %s151, 1
    %p155 = scmp.eq.s32.totalorder %s12, 1
    %p156 = scmp.ne.s32.totalorder %s151, %s153
    %p157 = scmp.eq.s32.totalorder %s12, 0
    %p158 = por %p156, %p157
    %p159 = scmp.ne.s32.totalorder %s151, %s153
    %p160 = scmp.eq.s32.totalorder %s17, 1
    %p161 = por %p159, %p160
    %p162 = scmp.ne.s32.totalorder %s153, %s154
    %p163 = scmp.eq.s32.totalorder %s17, 0
    %p164 = por %p162, %p163
    %p165 = scmp.ne.s32.totalorder %s153, %s154
    %p166 = scmp.eq.s32.totalorder %s18, 1
    %p167 = por %p165, %p166
    %p169 = scmp.ne.s32.totalorder %s154, %s168
    %p170 = scmp.eq.s32.totalorder %s18, 0
    %p171 = por %p169, %p170
    %s172 = ssub.s32 %s19, %s38
    %s173 = ssub.s32 %s20, %s34
    %s174 = sor.u32 %s172, %s173
    %p175 = scmp.eq.s32.totalorder %s174, 0
    %s177 = sadd.s32 %s176, 1
    %s178 = scalar_select %p175, %s176, %s177
    %p181 = pneg %p175
    %p182 = scmp.eq.s32.totalorder %s12, 1
    %p183 = por %p181, %p182
    %p184 = scmp.ne.s32.totalorder %s176, %s179
    %p185 = scmp.eq.s32.totalorder %s12, 0
    %p186 = por %p184, %p185
    %p187 = scmp.ne.s32.totalorder %s176, %s179
    %p188 = scmp.eq.s32.totalorder %s17, 1
    %p189 = por %p187, %p188
    %p190 = scmp.ne.s32.totalorder %s179, %s180
    %p191 = scmp.eq.s32.totalorder %s17, 0
    %p192 = por %p190, %p191
    %p193 = scmp.ne.s32.totalorder %s179, %s180
    %p194 = scmp.eq.s32.totalorder %s18, 1
    %p195 = por %p193, %p194
    %p197 = scmp.ne.s32.totalorder %s180, %s196
    %p198 = scmp.eq.s32.totalorder %s18, 0
    %p199 = por %p197, %p198
    %p200 = scmp.le.s32.totalorder 1, %s12
    %p201 = scmp.lt.s32.totalorder %s12, 3
    %p202 = pnand %p200, %p201
    %p203 = pneg %p202
    // Predicated region
    $region9: #{change_guide_forward.3} parent=5 // pred_check
      _
    $region10: #{change_guide_forward.3} parent=5 // pred_check_branch
      %205 = sbr.rel (%p202) target = $region12
    $region11: #{change_guide_forward.3} parent=5 // pred_region
      %s206 = ssub.s32 %s12, 1
      // Predicated region
      $region13: #{change_guide_forward.3} parent=11 // pred_check
        %p207 = pneg %p164
      $region14: #{change_guide_forward.3} parent=11 // pred_check_branch
        %209 = sbr.rel (%p207) target = $region16
      $region15: #{change_guide_forward.3} parent=11 // pred_region
        _
      $region16: #{change_guide_forward.3} parent=11 // pred_fallthru
        _
    $region12: #{change_guide_forward.3} parent=5 // pred_fallthru
      _
    %p210 = scmp.lt.s32.totalorder %s12, 2
    // Predicated region
    $region17: #{change_guide_forward.3} parent=5 // pred_check
      %p211 = pneg %p210
    $region18: #{change_guide_forward.3} parent=5 // pred_check_branch
      %213 = sbr.rel (%p211) target = $region20
    $region19: #{change_guide_forward.3} parent=5 // pred_region
      // Predicated region
      $region21: #{change_guide_forward.3} parent=19 // pred_check
        %p214 = pneg %p53
      $region22: #{change_guide_forward.3} parent=19 // pred_check_branch
        %216 = sbr.rel (%p214) target = $region24
      $region23: #{change_guide_forward.3} parent=19 // pred_region
        %s217 = smul.u32 2, %s20
        %p218 = scmp.lt.s32.totalorder %s19, 1
        %s219 = scalar_select %p218, %s19, 1
        %p220 = scmp.lt.s32.totalorder %s217, 1
        %s221 = scalar_select %p220, %s217, 1
        %s222 = smul.addr %s219, 8
        %s223 = sadd.s32 %s221, %s222
        %s224 = smul.addr %s223, 4
        %s225 = scalar_lea.vmem %s0, %s224
        %s226 = smul.u32 2, %s20
      $region24: #{change_guide_forward.3} parent=19 // pred_fallthru
        _
      // Predicated region
      $region25: #{change_guide_forward.3} parent=19 // pred_check
        %p227 = pneg %p81
      $region26: #{change_guide_forward.3} parent=19 // pred_check_branch
        %229 = sbr.rel (%p227) target = $region28
      $region27: #{change_guide_forward.3} parent=19 // pred_region
        %s230 = smul.u32 2, %s21
        %p231 = scmp.lt.s32.totalorder %s19, 1
        %s232 = scalar_select %p231, %s19, 1
        %p233 = scmp.lt.s32.totalorder %s230, 1
        %s234 = scalar_select %p233, %s230, 1
        %s235 = sadd.s32 %s234, 4
        %s236 = smul.addr %s232, 8
        %s237 = sadd.s32 %s235, %s236
        %s238 = smul.addr %s237, 4
        %s239 = scalar_lea.vmem %s1, %s238
        %s240 = smul.u32 2, %s21
      $region28: #{change_guide_forward.3} parent=19 // pred_fallthru
        _
      // Predicated region
      $region29: #{change_guide_forward.3} parent=19 // pred_check
        %p241 = pneg %p109
      $region30: #{change_guide_forward.3} parent=19 // pred_check_branch
        %243 = sbr.rel (%p241) target = $region32
      $region31: #{change_guide_forward.3} parent=19 // pred_region
        %s244 = smul.u32 32, %s21
        %p245 = scmp.lt.s32.totalorder %s19, 1
        %s246 = scalar_select %p245, %s19, 1
        %p247 = scmp.lt.s32.totalorder %s244, 31
        %s248 = scalar_select %p247, %s244, 31
        %s249 = smul.addr %s246, 32
        %s250 = sadd.s32 %s248, %s249
        %s251 = smul.addr %s250, 4
        %s252 = scalar_lea.vmem %s2, %s251
        %s253 = smul.u32 32, %s21
      $region32: #{change_guide_forward.3} parent=19 // pred_fallthru
        _
      // Predicated region
      $region33: #{change_guide_forward.3} parent=19 // pred_check
        %p254 = pneg %p137
      $region34: #{change_guide_forward.3} parent=19 // pred_check_branch
        %256 = sbr.rel (%p254) target = $region36
      $region35: #{change_guide_forward.3} parent=19 // pred_region
        %s257 = smul.u32 2, %s20
        %p258 = scmp.lt.s32.totalorder %s19, 1
        %s259 = scalar_select %p258, %s19, 1
        %p260 = scmp.lt.s32.totalorder %s257, 1
        %s261 = scalar_select %p260, %s257, 1
        %s262 = smul.addr %s259, 8
        %s263 = sadd.s32 %s261, %s262
        %s264 = smul.addr %s263, 8
        %s265 = scalar_lea.vmem %s3, %s264
        %s266 = smul.u32 2, %s20
      $region36: #{change_guide_forward.3} parent=19 // pred_fallthru
        _
    $region20: #{change_guide_forward.3} parent=5 // pred_fallthru
      _
    %p267 = scmp.le.s32.totalorder 1, %s12
    %p268 = scmp.lt.s32.totalorder %s12, 3
    %p269 = pnand %p267, %p268
    %p270 = pneg %p269
    // Predicated region
    $region37: #{change_guide_forward.3} parent=5 // pred_check
      _
    $region38: #{change_guide_forward.3} parent=5 // pred_check_branch
      %272 = sbr.rel (%p269) target = $region40
    $region39: #{change_guide_forward.3} parent=5 // pred_region
      %s273 = ssub.s32 %s12, 1
      %s274 = smul.u32 2, %s23
      %p275 = scmp.lt.s32.totalorder %s22, 1
      %s276 = scalar_select %p275, %s22, 1
      %p277 = scmp.lt.s32.totalorder %s274, 1
      %s278 = scalar_select %p277, %s274, 1
      %s279 = smul.addr %s276, 8
      %s280 = sadd.s32 %s278, %s279
      %s281 = smul.addr %s280, 4
      %s282 = scalar_lea.vmem %s0, %s281
      %p283 = pneg %p59
      %p284 = pneg %p56
      %s285 = smul.u32 2, %s24
      %p286 = scmp.lt.s32.totalorder %s22, 1
      %s287 = scalar_select %p286, %s22, 1
      %p288 = scmp.lt.s32.totalorder %s285, 1
      %s289 = scalar_select %p288, %s285, 1
      %s290 = sadd.s32 %s289, 4
      %s291 = smul.addr %s287, 8
      %s292 = sadd.s32 %s290, %s291
      %s293 = smul.addr %s292, 4
      %s294 = scalar_lea.vmem %s1, %s293
      %p295 = pneg %p87
      %p296 = pneg %p84
      %s297 = smul.u32 32, %s24
      %p298 = scmp.lt.s32.totalorder %s22, 1
      %s299 = scalar_select %p298, %s22, 1
      %p300 = scmp.lt.s32.totalorder %s297, 31
      %s301 = scalar_select %p300, %s297, 31
      %s302 = smul.addr %s299, 32
      %s303 = sadd.s32 %s301, %s302
      %s304 = smul.addr %s303, 4
      %s305 = scalar_lea.vmem %s2, %s304
      %p306 = pneg %p115
      %p307 = pneg %p112
      %s308 = smul.u32 2, %s23
      %p309 = scmp.lt.s32.totalorder %s22, 1
      %s310 = scalar_select %p309, %s22, 1
      %p311 = scmp.lt.s32.totalorder %s308, 1
      %s312 = scalar_select %p311, %s308, 1
      %s313 = smul.addr %s310, 8
      %s314 = sadd.s32 %s312, %s313
      %s315 = smul.addr %s314, 8
      %s316 = scalar_lea.vmem %s3, %s315
      %p317 = pneg %p143
      %p318 = pneg %p140
      %p319 = pneg %p164
      %p320 = pneg %p161
      %p321 = pneg %p192
      %p322 = pneg %p189
      %s323 = smul.u32 2, %s23
      %p324 = scmp.lt.s32.totalorder %s22, 1
      %s325 = scalar_select %p324, %s22, 1
      %p326 = scmp.lt.s32.totalorder %s323, 1
      %s327 = scalar_select %p326, %s323, 1
      %s328 = smul.addr %s325, 8
      %s329 = sadd.s32 %s327, %s328
      %s330 = smul.addr %s329, 8
      %s331 = scalar_lea.vmem %s5, %s330
      %s332 = smul.u32 2, %s23
      %p333 = scmp.lt.s32.totalorder %s22, 1
      %s334 = scalar_select %p333, %s22, 1
      %p335 = scmp.lt.s32.totalorder %s332, 1
      %s336 = scalar_select %p335, %s332, 1
      %s337 = smul.addr %s334, 8
      %s338 = sadd.s32 %s336, %s337
      %s339 = smul.addr %s338, 4
      %s340 = scalar_lea.vmem %s0, %s339
      %s341 = smul.u32 2, %s23
      %s342 = smul.u32 2, %s24
      %p343 = scmp.lt.s32.totalorder %s22, 1
      %s344 = scalar_select %p343, %s22, 1
      %p345 = scmp.lt.s32.totalorder %s342, 1
      %s346 = scalar_select %p345, %s342, 1
      %s347 = sadd.s32 %s346, 4
      %s348 = smul.addr %s344, 8
      %s349 = sadd.s32 %s347, %s348
      %s350 = smul.addr %s349, 4
      %s351 = scalar_lea.vmem %s1, %s350
      %s352 = smul.u32 2, %s24
      %s353 = smul.u32 32, %s24
      %p354 = scmp.lt.s32.totalorder %s22, 1
      %s355 = scalar_select %p354, %s22, 1
      %p356 = scmp.lt.s32.totalorder %s353, 31
      %s357 = scalar_select %p356, %s353, 31
      %s358 = smul.addr %s355, 32
      %s359 = sadd.s32 %s357, %s358
      %s360 = smul.addr %s359, 4
      %s361 = scalar_lea.vmem %s2, %s360
      %s362 = smul.u32 32, %s24
      %s363 = smul.u32 2, %s23
      %p364 = scmp.lt.s32.totalorder %s22, 1
      %s365 = scalar_select %p364, %s22, 1
      %p366 = scmp.lt.s32.totalorder %s363, 1
      %s367 = scalar_select %p366, %s363, 1
      %s368 = smul.addr %s365, 8
      %s369 = sadd.s32 %s367, %s368
      %s370 = smul.addr %s369, 8
      %s371 = scalar_lea.vmem %s3, %s370
      %s372 = smul.u32 2, %s23
      %s373 = smul.u32 2, %s23
      %p374 = scmp.lt.s32.totalorder %s22, 1
      %s375 = scalar_select %p374, %s22, 1
      %p376 = scmp.lt.s32.totalorder %s373, 1
      %s377 = scalar_select %p376, %s373, 1
      %s378 = smul.addr %s375, 8
      %s379 = sadd.s32 %s377, %s378
      %s380 = smul.addr %s379, 8
      %s381 = scalar_lea.vmem %s5, %s380
      %s382 = smul.u32 2, %s23
      %p384 = scmp.eq.s32.totalorder %s24, 0
      // Predicated region
      $region41: #{change_guide_forward.3} parent=39 // pred_check
        %p385 = pneg %p384
      $region42: #{change_guide_forward.3} parent=39 // pred_check_branch
        %387 = sbr.rel (%p385) target = $region44
      $region43: #{change_guide_forward.3} parent=39 // pred_region
        %vm388 = vcmask 7168
        %389 = vst.msk [vmem:[#allocation2] sm:$0xff] %vm388, -inf
        %390 = vst.msk [vmem:[#allocation2 + $0x8] sm:$0xff] %vm388, -inf
        %391 = vst.msk [vmem:[#allocation2 + $0x10] sm:$0xff] %vm388, -inf
        %392 = vst.msk [vmem:[#allocation2 + $0x18] sm:$0xff] %vm388, -inf
        %393 = vst.msk [vmem:[#allocation2 + $0x20] sm:$0xff] %vm388, -inf
        %394 = vst.msk [vmem:[#allocation2 + $0x28] sm:$0xff] %vm388, -inf
        %395 = vst.msk [vmem:[#allocation2 + $0x30] sm:$0xff] %vm388, -inf
        %396 = vst.msk [vmem:[#allocation2 + $0x38] sm:$0xff] %vm388, -inf
        %397 = vst.msk [vmem:[#allocation2 + $0x40] sm:$0xff] %vm388, -inf
        %398 = vst.msk [vmem:[#allocation2 + $0x48] sm:$0xff] %vm388, -inf
        %399 = vst.msk [vmem:[#allocation2 + $0x50] sm:$0xff] %vm388, -inf
        %400 = vst.msk [vmem:[#allocation2 + $0x58] sm:$0xff] %vm388, -inf
        %401 = vst.msk [vmem:[#allocation2 + $0x60] sm:$0xff] %vm388, -inf
        %402 = vst.msk [vmem:[#allocation2 + $0x68] sm:$0xff] %vm388, -inf
        %403 = vst.msk [vmem:[#allocation2 + $0x70] sm:$0xff] %vm388, -inf
        %404 = vst.msk [vmem:[#allocation2 + $0x78] sm:$0xff] %vm388, -inf
        %405 = vst.msk [vmem:[#allocation2 + $0x80] sm:$0xff] %vm388, -inf
        %406 = vst.msk [vmem:[#allocation2 + $0x88] sm:$0xff] %vm388, -inf
        %407 = vst.msk [vmem:[#allocation2 + $0x90] sm:$0xff] %vm388, -inf
        %408 = vst.msk [vmem:[#allocation2 + $0x98] sm:$0xff] %vm388, -inf
        %409 = vst.msk [vmem:[#allocation2 + $0xa0] sm:$0xff] %vm388, -inf
        %410 = vst.msk [vmem:[#allocation2 + $0xa8] sm:$0xff] %vm388, -inf
        %411 = vst.msk [vmem:[#allocation2 + $0xb0] sm:$0xff] %vm388, -inf
        %412 = vst.msk [vmem:[#allocation2 + $0xb8] sm:$0xff] %vm388, -inf
        %413 = vst.msk [vmem:[#allocation2 + $0xc0] sm:$0xff] %vm388, -inf
        %414 = vst.msk [vmem:[#allocation2 + $0xc8] sm:$0xff] %vm388, -inf
        %415 = vst.msk [vmem:[#allocation2 + $0xd0] sm:$0xff] %vm388, -inf
        %416 = vst.msk [vmem:[#allocation2 + $0xd8] sm:$0xff] %vm388, -inf
        %417 = vst.msk [vmem:[#allocation2 + $0xe0] sm:$0xff] %vm388, -inf
        %418 = vst.msk [vmem:[#allocation2 + $0xe8] sm:$0xff] %vm388, -inf
        %419 = vst.msk [vmem:[#allocation2 + $0xf0] sm:$0xff] %vm388, -inf
        %420 = vst.msk [vmem:[#allocation2 + $0xf8] sm:$0xff] %vm388, -inf
        %421 = vst.msk [vmem:[#allocation3] sm:$0xff] %vm388, 0.0
        %422 = vst.msk [vmem:[#allocation3 + $0x8] sm:$0xff] %vm388, 0.0
        %423 = vst.msk [vmem:[#allocation3 + $0x10] sm:$0xff] %vm388, 0.0
        %424 = vst.msk [vmem:[#allocation3 + $0x18] sm:$0xff] %vm388, 0.0
        %425 = vst.msk [vmem:[#allocation3 + $0x20] sm:$0xff] %vm388, 0.0
        %426 = vst.msk [vmem:[#allocation3 + $0x28] sm:$0xff] %vm388, 0.0
        %427 = vst.msk [vmem:[#allocation3 + $0x30] sm:$0xff] %vm388, 0.0
        %428 = vst.msk [vmem:[#allocation3 + $0x38] sm:$0xff] %vm388, 0.0
        %429 = vst.msk [vmem:[#allocation3 + $0x40] sm:$0xff] %vm388, 0.0
        %430 = vst.msk [vmem:[#allocation3 + $0x48] sm:$0xff] %vm388, 0.0
        %431 = vst.msk [vmem:[#allocation3 + $0x50] sm:$0xff] %vm388, 0.0
        %432 = vst.msk [vmem:[#allocation3 + $0x58] sm:$0xff] %vm388, 0.0
        %433 = vst.msk [vmem:[#allocation3 + $0x60] sm:$0xff] %vm388, 0.0
        %434 = vst.msk [vmem:[#allocation3 + $0x68] sm:$0xff] %vm388, 0.0
        %435 = vst.msk [vmem:[#allocation3 + $0x70] sm:$0xff] %vm388, 0.0
        %436 = vst.msk [vmem:[#allocation3 + $0x78] sm:$0xff] %vm388, 0.0
        %437 = vst.msk [vmem:[#allocation3 + $0x80] sm:$0xff] %vm388, 0.0
        %438 = vst.msk [vmem:[#allocation3 + $0x88] sm:$0xff] %vm388, 0.0
        %439 = vst.msk [vmem:[#allocation3 + $0x90] sm:$0xff] %vm388, 0.0
        %440 = vst.msk [vmem:[#allocation3 + $0x98] sm:$0xff] %vm388, 0.0
        %441 = vst.msk [vmem:[#allocation3 + $0xa0] sm:$0xff] %vm388, 0.0
        %442 = vst.msk [vmem:[#allocation3 + $0xa8] sm:$0xff] %vm388, 0.0
        %443 = vst.msk [vmem:[#allocation3 + $0xb0] sm:$0xff] %vm388, 0.0
        %444 = vst.msk [vmem:[#allocation3 + $0xb8] sm:$0xff] %vm388, 0.0
        %445 = vst.msk [vmem:[#allocation3 + $0xc0] sm:$0xff] %vm388, 0.0
        %446 = vst.msk [vmem:[#allocation3 + $0xc8] sm:$0xff] %vm388, 0.0
        %447 = vst.msk [vmem:[#allocation3 + $0xd0] sm:$0xff] %vm388, 0.0
        %448 = vst.msk [vmem:[#allocation3 + $0xd8] sm:$0xff] %vm388, 0.0
        %449 = vst.msk [vmem:[#allocation3 + $0xe0] sm:$0xff] %vm388, 0.0
        %450 = vst.msk [vmem:[#allocation3 + $0xe8] sm:$0xff] %vm388, 0.0
        %451 = vst.msk [vmem:[#allocation3 + $0xf0] sm:$0xff] %vm388, 0.0
        %452 = vst.msk [vmem:[#allocation3 + $0xf8] sm:$0xff] %vm388, 0.0
        %vm453 = vcmask 261120
        %454 = vst.msk [vmem:[#allocation4] sm:$0xff] %vm453, 0.0
        %455 = vst.msk [vmem:[#allocation4 + $0x8] sm:$0xff] %vm453, 0.0
        %456 = vst.msk [vmem:[#allocation4 + $0x10] sm:$0xff] %vm453, 0.0
        %457 = vst.msk [vmem:[#allocation4 + $0x18] sm:$0xff] %vm453, 0.0
        %458 = vst.msk [vmem:[#allocation4 + $0x20] sm:$0xff] %vm453, 0.0
        %459 = vst.msk [vmem:[#allocation4 + $0x28] sm:$0xff] %vm453, 0.0
        %460 = vst.msk [vmem:[#allocation4 + $0x30] sm:$0xff] %vm453, 0.0
        %461 = vst.msk [vmem:[#allocation4 + $0x38] sm:$0xff] %vm453, 0.0
        %462 = vst.msk [vmem:[#allocation4 + $0x40] sm:$0xff] %vm453, 0.0
        %463 = vst.msk [vmem:[#allocation4 + $0x48] sm:$0xff] %vm453, 0.0
        %464 = vst.msk [vmem:[#allocation4 + $0x50] sm:$0xff] %vm453, 0.0
        %465 = vst.msk [vmem:[#allocation4 + $0x58] sm:$0xff] %vm453, 0.0
        %466 = vst.msk [vmem:[#allocation4 + $0x60] sm:$0xff] %vm453, 0.0
        %467 = vst.msk [vmem:[#allocation4 + $0x68] sm:$0xff] %vm453, 0.0
        %468 = vst.msk [vmem:[#allocation4 + $0x70] sm:$0xff] %vm453, 0.0
        %469 = vst.msk [vmem:[#allocation4 + $0x78] sm:$0xff] %vm453, 0.0
        %470 = vst.msk [vmem:[#allocation4 + $0x80] sm:$0xff] %vm453, 0.0
        %471 = vst.msk [vmem:[#allocation4 + $0x88] sm:$0xff] %vm453, 0.0
        %472 = vst.msk [vmem:[#allocation4 + $0x90] sm:$0xff] %vm453, 0.0
        %473 = vst.msk [vmem:[#allocation4 + $0x98] sm:$0xff] %vm453, 0.0
        %474 = vst.msk [vmem:[#allocation4 + $0xa0] sm:$0xff] %vm453, 0.0
        %475 = vst.msk [vmem:[#allocation4 + $0xa8] sm:$0xff] %vm453, 0.0
        %476 = vst.msk [vmem:[#allocation4 + $0xb0] sm:$0xff] %vm453, 0.0
        %477 = vst.msk [vmem:[#allocation4 + $0xb8] sm:$0xff] %vm453, 0.0
        %478 = vst.msk [vmem:[#allocation4 + $0xc0] sm:$0xff] %vm453, 0.0
        %479 = vst.msk [vmem:[#allocation4 + $0xc8] sm:$0xff] %vm453, 0.0
        %480 = vst.msk [vmem:[#allocation4 + $0xd0] sm:$0xff] %vm453, 0.0
        %481 = vst.msk [vmem:[#allocation4 + $0xd8] sm:$0xff] %vm453, 0.0
        %482 = vst.msk [vmem:[#allocation4 + $0xe0] sm:$0xff] %vm453, 0.0
        %483 = vst.msk [vmem:[#allocation4 + $0xe8] sm:$0xff] %vm453, 0.0
        %484 = vst.msk [vmem:[#allocation4 + $0xf0] sm:$0xff] %vm453, 0.0
        %485 = vst.msk [vmem:[#allocation4 + $0xf8] sm:$0xff] %vm453, 0.0
      $region44: #{change_guide_forward.3} parent=39 // pred_fallthru
        _
      %v486 = vld [vmem:[%s340] sm:$0xff]
      %v487 = vld [vmem:[%s340 + $0x8] sm:$0xff]
      %v488 = vld [vmem:[%s351] sm:$0xff]
      %v489 = vld [vmem:[%s351 + $0x8] sm:$0xff]
      %v492 = vunpack.c.l.b16 %v486
      %v493 = vunpack.c.h.b16 %v486
      %v494 = vunpack.c.l.b16 %v487
      %v495 = vunpack.c.h.b16 %v487
      %v496 = vpack.c.b16 %v494, %v492
      %v497 = vpack.c.b16 %v495, %v493
      %500 = vxpose.binary.xlu0.c.b16.start [1/16] %v497, %v496, 128
      %501 = vxpose.binary.xlu0.c.b16.cont [2/16] 0, 0, 128
      %502 = vxpose.binary.xlu0.c.b16.cont [3/16] 0, 0, 128
      %503 = vxpose.binary.xlu0.c.b16.cont [4/16] 0, 0, 128
      %504 = vxpose.binary.xlu0.c.b16.cont [5/16] 0, 0, 128
      %505 = vxpose.binary.xlu0.c.b16.cont [6/16] 0, 0, 128
      %506 = vxpose.binary.xlu0.c.b16.cont [7/16] 0, 0, 128
      %507 = vxpose.binary.xlu0.c.b16.end [8/16] 0, 0, 128
      %v508 = vpop.trf.xlu0
      %v509 = vpop.trf.xlu0
      %v510 = vpop.trf.xlu0
      %v511 = vpop.trf.xlu0
      %v512 = vpop.trf.xlu0
      %v513 = vpop.trf.xlu0
      %v514 = vpop.trf.xlu0
      %v515 = vpop.trf.xlu0
      %v516 = vpop.trf.xlu0
      %v517 = vpop.trf.xlu0
      %v518 = vpop.trf.xlu0
      %v519 = vpop.trf.xlu0
      %v520 = vpop.trf.xlu0
      %v521 = vpop.trf.xlu0
      %v522 = vpop.trf.xlu0
      %v523 = vpop.trf.xlu0
      %v526 = vunpack.c.l.b16 %v488
      %v527 = vunpack.c.h.b16 %v488
      %v528 = vunpack.c.l.b16 %v489
      %v529 = vunpack.c.h.b16 %v489
      %v530 = vpack.c.b16 %v528, %v526
      %v531 = vpack.c.b16 %v529, %v527
      %vm534 = vcmask 130048
      %v536 = vsel %vm534, %v508, 0
      %v539 = vsel %vm534, %v510, 0
      %v542 = vsel %vm534, %v512, 0
      %v545 = vsel %vm534, %v514, 0
      %v548 = vsel %vm534, %v516, 0
      %v551 = vsel %vm534, %v518, 0
      %v554 = vsel %vm534, %v520, 0
      %v557 = vsel %vm534, %v522, 0
      %v560 = vsel %vm534, %v509, 0
      %v563 = vsel %vm534, %v511, 0
      %v566 = vsel %vm534, %v513, 0
      %v569 = vsel %vm534, %v515, 0
      %v572 = vsel %vm534, %v517, 0
      %v575 = vsel %vm534, %v519, 0
      %v578 = vsel %vm534, %v521, 0
      %v581 = vsel %vm534, %v523, 0
      %583 = vmatpush.bf16.msra.mxu0 0
      %584 = vmatpush.bf16.msra.mxu0 0
      %585 = vmatpush.bf16.msra.mxu0 0
      %586 = vmatpush.bf16.msra.mxu0 0
      %587 = vmatpush.bf16.msra.mxu0 0
      %588 = vmatpush.bf16.msra.mxu0 0
      %589 = vmatpush.bf16.msra.mxu0 0
      %590 = vmatpush.bf16.msra.mxu0 %v530
      %591 = vmatmul.bf16.gmra.mxu0 %v536
      %v592 = vpop.f32.mrf.mxu0
      %v593 = vadd.f32 0.0, %v592
      %v594 = vpop.f32.mrf.mxu0
      %v595 = vadd.f32 0.0, %v594
      %596 = vmatmul.bf16.gmra.mxu0 %v539
      %v597 = vpop.f32.mrf.mxu0
      %v598 = vadd.f32 0.0, %v597
      %v599 = vpop.f32.mrf.mxu0
      %v600 = vadd.f32 0.0, %v599
      %601 = vmatmul.bf16.gmra.mxu0 %v542
      %v602 = vpop.f32.mrf.mxu0
      %v603 = vadd.f32 0.0, %v602
      %v604 = vpop.f32.mrf.mxu0
      %v605 = vadd.f32 0.0, %v604
      %606 = vmatmul.bf16.gmra.mxu0 %v545
      %v607 = vpop.f32.mrf.mxu0
      %v608 = vadd.f32 0.0, %v607
      %v609 = vpop.f32.mrf.mxu0
      %v610 = vadd.f32 0.0, %v609
      %611 = vmatmul.bf16.gmra.mxu0 %v548
      %v612 = vpop.f32.mrf.mxu0
      %v613 = vadd.f32 0.0, %v612
      %v614 = vpop.f32.mrf.mxu0
      %v615 = vadd.f32 0.0, %v614
      %616 = vmatmul.bf16.gmra.mxu0 %v551
      %v617 = vpop.f32.mrf.mxu0
      %v618 = vadd.f32 0.0, %v617
      %v619 = vpop.f32.mrf.mxu0
      %v620 = vadd.f32 0.0, %v619
      %621 = vmatmul.bf16.gmra.mxu0 %v554
      %v622 = vpop.f32.mrf.mxu0
      %v623 = vadd.f32 0.0, %v622
      %v624 = vpop.f32.mrf.mxu0
      %v625 = vadd.f32 0.0, %v624
      %626 = vmatmul.bf16.gmra.mxu0 %v557
      %v627 = vpop.f32.mrf.mxu0
      %v628 = vadd.f32 0.0, %v627
      %v629 = vpop.f32.mrf.mxu0
      %v630 = vadd.f32 0.0, %v629
      %631 = vmatmul.bf16.gmra.mxu0 %v560
      %v632 = vpop.f32.mrf.mxu0
      %v633 = vadd.f32 0.0, %v632
      %v634 = vpop.f32.mrf.mxu0
      %v635 = vadd.f32 0.0, %v634
      %636 = vmatmul.bf16.gmra.mxu0 %v563
      %v637 = vpop.f32.mrf.mxu0
      %v638 = vadd.f32 0.0, %v637
      %v639 = vpop.f32.mrf.mxu0
      %v640 = vadd.f32 0.0, %v639
      %641 = vmatmul.bf16.gmra.mxu0 %v566
      %v642 = vpop.f32.mrf.mxu0
      %v643 = vadd.f32 0.0, %v642
      %v644 = vpop.f32.mrf.mxu0
      %v645 = vadd.f32 0.0, %v644
      %646 = vmatmul.bf16.gmra.mxu0 %v569
      %v647 = vpop.f32.mrf.mxu0
      %v648 = vadd.f32 0.0, %v647
      %v649 = vpop.f32.mrf.mxu0
      %v650 = vadd.f32 0.0, %v649
      %651 = vmatmul.bf16.gmra.mxu0 %v572
      %v652 = vpop.f32.mrf.mxu0
      %v653 = vadd.f32 0.0, %v652
      %v654 = vpop.f32.mrf.mxu0
      %v655 = vadd.f32 0.0, %v654
      %656 = vmatmul.bf16.gmra.mxu0 %v575
      %v657 = vpop.f32.mrf.mxu0
      %v658 = vadd.f32 0.0, %v657
      %v659 = vpop.f32.mrf.mxu0
      %v660 = vadd.f32 0.0, %v659
      %661 = vmatmul.bf16.gmra.mxu0 %v578
      %v662 = vpop.f32.mrf.mxu0
      %v663 = vadd.f32 0.0, %v662
      %v664 = vpop.f32.mrf.mxu0
      %v665 = vadd.f32 0.0, %v664
      %666 = vmatmul.bf16.gmra.mxu0 %v581
      %v667 = vpop.f32.mrf.mxu0
      %v668 = vadd.f32 0.0, %v667
      %v669 = vpop.f32.mrf.mxu0
      %v670 = vadd.f32 0.0, %v669
      %671 = vdwg.mxu0
      %672 = vmatpush.bf16.msra.mxu0 0
      %673 = vmatpush.bf16.msra.mxu0 0
      %674 = vmatpush.bf16.msra.mxu0 0
      %675 = vmatpush.bf16.msra.mxu0 0
      %676 = vmatpush.bf16.msra.mxu0 0
      %677 = vmatpush.bf16.msra.mxu0 0
      %678 = vmatpush.bf16.msra.mxu0 0
      %679 = vmatpush.bf16.msra.mxu0 %v531
      %680 = vmatmul.bf16.gmra.mxu0 %v536
      %v681 = vpop.f32.mrf.mxu0
      %v682 = vadd.f32 0.0, %v681
      %v683 = vpop.f32.mrf.mxu0
      %v684 = vadd.f32 0.0, %v683
      %685 = vmatmul.bf16.gmra.mxu0 %v539
      %v686 = vpop.f32.mrf.mxu0
      %v687 = vadd.f32 0.0, %v686
      %v688 = vpop.f32.mrf.mxu0
      %v689 = vadd.f32 0.0, %v688
      %690 = vmatmul.bf16.gmra.mxu0 %v542
      %v691 = vpop.f32.mrf.mxu0
      %v692 = vadd.f32 0.0, %v691
      %v693 = vpop.f32.mrf.mxu0
      %v694 = vadd.f32 0.0, %v693
      %695 = vmatmul.bf16.gmra.mxu0 %v545
      %v696 = vpop.f32.mrf.mxu0
      %v697 = vadd.f32 0.0, %v696
      %v698 = vpop.f32.mrf.mxu0
      %v699 = vadd.f32 0.0, %v698
      %700 = vmatmul.bf16.gmra.mxu0 %v548
      %v701 = vpop.f32.mrf.mxu0
      %v702 = vadd.f32 0.0, %v701
      %v703 = vpop.f32.mrf.mxu0
      %v704 = vadd.f32 0.0, %v703
      %705 = vmatmul.bf16.gmra.mxu0 %v551
      %v706 = vpop.f32.mrf.mxu0
      %v707 = vadd.f32 0.0, %v706
      %v708 = vpop.f32.mrf.mxu0
      %v709 = vadd.f32 0.0, %v708
      %710 = vmatmul.bf16.gmra.mxu0 %v554
      %v711 = vpop.f32.mrf.mxu0
      %v712 = vadd.f32 0.0, %v711
      %v713 = vpop.f32.mrf.mxu0
      %v714 = vadd.f32 0.0, %v713
      %715 = vmatmul.bf16.gmra.mxu0 %v557
      %v716 = vpop.f32.mrf.mxu0
      %v717 = vadd.f32 0.0, %v716
      %v718 = vpop.f32.mrf.mxu0
      %v719 = vadd.f32 0.0, %v718
      %720 = vmatmul.bf16.gmra.mxu0 %v560
      %v721 = vpop.f32.mrf.mxu0
      %v722 = vadd.f32 0.0, %v721
      %v723 = vpop.f32.mrf.mxu0
      %v724 = vadd.f32 0.0, %v723
      %725 = vmatmul.bf16.gmra.mxu0 %v563
      %v726 = vpop.f32.mrf.mxu0
      %v727 = vadd.f32 0.0, %v726
      %v728 = vpop.f32.mrf.mxu0
      %v729 = vadd.f32 0.0, %v728
      %730 = vmatmul.bf16.gmra.mxu0 %v566
      %v731 = vpop.f32.mrf.mxu0
      %v732 = vadd.f32 0.0, %v731
      %v733 = vpop.f32.mrf.mxu0
      %v734 = vadd.f32 0.0, %v733
      %735 = vmatmul.bf16.gmra.mxu0 %v569
      %v736 = vpop.f32.mrf.mxu0
      %v737 = vadd.f32 0.0, %v736
      %v738 = vpop.f32.mrf.mxu0
      %v739 = vadd.f32 0.0, %v738
      %740 = vmatmul.bf16.gmra.mxu0 %v572
      %v741 = vpop.f32.mrf.mxu0
      %v742 = vadd.f32 0.0, %v741
      %v743 = vpop.f32.mrf.mxu0
      %v744 = vadd.f32 0.0, %v743
      %745 = vmatmul.bf16.gmra.mxu0 %v575
      %v746 = vpop.f32.mrf.mxu0
      %v747 = vadd.f32 0.0, %v746
      %v748 = vpop.f32.mrf.mxu0
      %v749 = vadd.f32 0.0, %v748
      %750 = vmatmul.bf16.gmra.mxu0 %v578
      %v751 = vpop.f32.mrf.mxu0
      %v752 = vadd.f32 0.0, %v751
      %v753 = vpop.f32.mrf.mxu0
      %v754 = vadd.f32 0.0, %v753
      %755 = vmatmul.bf16.gmra.mxu0 %v581
      %v756 = vpop.f32.mrf.mxu0
      %v757 = vadd.f32 0.0, %v756
      %v758 = vpop.f32.mrf.mxu0
      %v759 = vadd.f32 0.0, %v758
      %760 = vdwg.mxu0
      %v761 = vld [vmem:[#allocation2] sm:$0xff]
      %v762 = vld [vmem:[#allocation2 + $0x8] sm:$0xff]
      %v763 = vld [vmem:[#allocation2 + $0x10] sm:$0xff]
      %v764 = vld [vmem:[#allocation2 + $0x18] sm:$0xff]
      %v765 = vld [vmem:[#allocation2 + $0x20] sm:$0xff]
      %v766 = vld [vmem:[#allocation2 + $0x28] sm:$0xff]
      %v767 = vld [vmem:[#allocation2 + $0x30] sm:$0xff]
      %v768 = vld [vmem:[#allocation2 + $0x38] sm:$0xff]
      %v769 = vld [vmem:[#allocation2 + $0x40] sm:$0xff]
      %v770 = vld [vmem:[#allocation2 + $0x48] sm:$0xff]
      %v771 = vld [vmem:[#allocation2 + $0x50] sm:$0xff]
      %v772 = vld [vmem:[#allocation2 + $0x58] sm:$0xff]
      %v773 = vld [vmem:[#allocation2 + $0x60] sm:$0xff]
      %v774 = vld [vmem:[#allocation2 + $0x68] sm:$0xff]
      %v775 = vld [vmem:[#allocation2 + $0x70] sm:$0xff]
      %v776 = vld [vmem:[#allocation2 + $0x78] sm:$0xff]
      %v777 = vld [vmem:[#allocation2 + $0x80] sm:$0xff]
      %v778 = vld [vmem:[#allocation2 + $0x88] sm:$0xff]
      %v779 = vld [vmem:[#allocation2 + $0x90] sm:$0xff]
      %v780 = vld [vmem:[#allocation2 + $0x98] sm:$0xff]
      %v781 = vld [vmem:[#allocation2 + $0xa0] sm:$0xff]
      %v782 = vld [vmem:[#allocation2 + $0xa8] sm:$0xff]
      %v783 = vld [vmem:[#allocation2 + $0xb0] sm:$0xff]
      %v784 = vld [vmem:[#allocation2 + $0xb8] sm:$0xff]
      %v785 = vld [vmem:[#allocation2 + $0xc0] sm:$0xff]
      %v786 = vld [vmem:[#allocation2 + $0xc8] sm:$0xff]
      %v787 = vld [vmem:[#allocation2 + $0xd0] sm:$0xff]
      %v788 = vld [vmem:[#allocation2 + $0xd8] sm:$0xff]
      %v789 = vld [vmem:[#allocation2 + $0xe0] sm:$0xff]
      %v790 = vld [vmem:[#allocation2 + $0xe8] sm:$0xff]
      %v791 = vld [vmem:[#allocation2 + $0xf0] sm:$0xff]
      %v792 = vld [vmem:[#allocation2 + $0xf8] sm:$0xff]
      %v793 = vmax.f32 %v593, %v682
      %794 = vmax.xlane.f32.xlu0 %v793
      %v795 = vpop.xlane.xlu0 %794
      %v796 = vmax.f32 %v595, %v684
      %797 = vmax.xlane.f32.xlu0 %v796
      %v798 = vpop.xlane.xlu0 %797
      %v799 = vmax.f32 %v598, %v687
      %800 = vmax.xlane.f32.xlu0 %v799
      %v801 = vpop.xlane.xlu0 %800
      %v802 = vmax.f32 %v600, %v689
      %803 = vmax.xlane.f32.xlu0 %v802
      %v804 = vpop.xlane.xlu0 %803
      %v805 = vmax.f32 %v603, %v692
      %806 = vmax.xlane.f32.xlu0 %v805
      %v807 = vpop.xlane.xlu0 %806
      %v808 = vmax.f32 %v605, %v694
      %809 = vmax.xlane.f32.xlu0 %v808
      %v810 = vpop.xlane.xlu0 %809
      %v811 = vmax.f32 %v608, %v697
      %812 = vmax.xlane.f32.xlu0 %v811
      %v813 = vpop.xlane.xlu0 %812
      %v814 = vmax.f32 %v610, %v699
      %815 = vmax.xlane.f32.xlu0 %v814
      %v816 = vpop.xlane.xlu0 %815
      %v817 = vmax.f32 %v613, %v702
      %818 = vmax.xlane.f32.xlu0 %v817
      %v819 = vpop.xlane.xlu0 %818
      %v820 = vmax.f32 %v615, %v704
      %821 = vmax.xlane.f32.xlu0 %v820
      %v822 = vpop.xlane.xlu0 %821
      %v823 = vmax.f32 %v618, %v707
      %824 = vmax.xlane.f32.xlu0 %v823
      %v825 = vpop.xlane.xlu0 %824
      %v826 = vmax.f32 %v620, %v709
      %827 = vmax.xlane.f32.xlu0 %v826
      %v828 = vpop.xlane.xlu0 %827
      %v829 = vmax.f32 %v623, %v712
      %830 = vmax.xlane.f32.xlu0 %v829
      %v831 = vpop.xlane.xlu0 %830
      %v832 = vmax.f32 %v625, %v714
      %833 = vmax.xlane.f32.xlu0 %v832
      %v834 = vpop.xlane.xlu0 %833
      %v835 = vmax.f32 %v628, %v717
      %836 = vmax.xlane.f32.xlu0 %v835
      %v837 = vpop.xlane.xlu0 %836
      %v838 = vmax.f32 %v630, %v719
      %839 = vmax.xlane.f32.xlu0 %v838
      %v840 = vpop.xlane.xlu0 %839
      %v841 = vmax.f32 %v633, %v722
      %842 = vmax.xlane.f32.xlu0 %v841
      %v843 = vpop.xlane.xlu0 %842
      %v844 = vmax.f32 %v635, %v724
      %845 = vmax.xlane.f32.xlu0 %v844
      %v846 = vpop.xlane.xlu0 %845
      %v847 = vmax.f32 %v638, %v727
      %848 = vmax.xlane.f32.xlu0 %v847
      %v849 = vpop.xlane.xlu0 %848
      %v850 = vmax.f32 %v640, %v729
      %851 = vmax.xlane.f32.xlu0 %v850
      %v852 = vpop.xlane.xlu0 %851
      %v853 = vmax.f32 %v643, %v732
      %854 = vmax.xlane.f32.xlu0 %v853
      %v855 = vpop.xlane.xlu0 %854
      %v856 = vmax.f32 %v645, %v734
      %857 = vmax.xlane.f32.xlu0 %v856
      %v858 = vpop.xlane.xlu0 %857
      %v859 = vmax.f32 %v648, %v737
      %860 = vmax.xlane.f32.xlu0 %v859
      %v861 = vpop.xlane.xlu0 %860
      %v862 = vmax.f32 %v650, %v739
      %863 = vmax.xlane.f32.xlu0 %v862
      %v864 = vpop.xlane.xlu0 %863
      %v865 = vmax.f32 %v653, %v742
      %866 = vmax.xlane.f32.xlu0 %v865
      %v867 = vpop.xlane.xlu0 %866
      %v868 = vmax.f32 %v655, %v744
      %869 = vmax.xlane.f32.xlu0 %v868
      %v870 = vpop.xlane.xlu0 %869
      %v871 = vmax.f32 %v658, %v747
      %872 = vmax.xlane.f32.xlu0 %v871
      %v873 = vpop.xlane.xlu0 %872
      %v874 = vmax.f32 %v660, %v749
      %875 = vmax.xlane.f32.xlu0 %v874
      %v876 = vpop.xlane.xlu0 %875
      %v877 = vmax.f32 %v663, %v752
      %878 = vmax.xlane.f32.xlu0 %v877
      %v879 = vpop.xlane.xlu0 %878
      %v880 = vmax.f32 %v665, %v754
      %881 = vmax.xlane.f32.xlu0 %v880
      %v882 = vpop.xlane.xlu0 %881
      %v883 = vmax.f32 %v668, %v757
      %884 = vmax.xlane.f32.xlu0 %v883
      %v885 = vpop.xlane.xlu0 %884
      %v886 = vmax.f32 %v670, %v759
      %887 = vmax.xlane.f32.xlu0 %v886
      %v888 = vpop.xlane.xlu0 %887
      %v889 = vmax.f32 %v761, %v795
      %v890 = vmax.f32 %v762, %v798
      %v891 = vmax.f32 %v763, %v801
      %v892 = vmax.f32 %v764, %v804
      %v893 = vmax.f32 %v765, %v807
      %v894 = vmax.f32 %v766, %v810
      %v895 = vmax.f32 %v767, %v813
      %v896 = vmax.f32 %v768, %v816
      %v897 = vmax.f32 %v769, %v819
      %v898 = vmax.f32 %v770, %v822
      %v899 = vmax.f32 %v771, %v825
      %v900 = vmax.f32 %v772, %v828
      %v901 = vmax.f32 %v773, %v831
      %v902 = vmax.f32 %v774, %v834
      %v903 = vmax.f32 %v775, %v837
      %v904 = vmax.f32 %v776, %v840
      %v905 = vmax.f32 %v777, %v843
      %v906 = vmax.f32 %v778, %v846
      %v907 = vmax.f32 %v779, %v849
      %v908 = vmax.f32 %v780, %v852
      %v909 = vmax.f32 %v781, %v855
      %v910 = vmax.f32 %v782, %v858
      %v911 = vmax.f32 %v783, %v861
      %v912 = vmax.f32 %v784, %v864
      %v913 = vmax.f32 %v785, %v867
      %v914 = vmax.f32 %v786, %v870
      %v915 = vmax.f32 %v787, %v873
      %v916 = vmax.f32 %v788, %v876
      %v917 = vmax.f32 %v789, %v879
      %v918 = vmax.f32 %v790, %v882
      %v919 = vmax.f32 %v791, %v885
      %v920 = vmax.f32 %v792, %v888
      %v921 = vsub.f32 %v761, %v889
      %v922 = vsub.f32 %v762, %v890
      %v923 = vsub.f32 %v763, %v891
      %v924 = vsub.f32 %v764, %v892
      %v925 = vsub.f32 %v765, %v893
      %v926 = vsub.f32 %v766, %v894
      %v927 = vsub.f32 %v767, %v895
      %v928 = vsub.f32 %v768, %v896
      %v929 = vsub.f32 %v769, %v897
      %v930 = vsub.f32 %v770, %v898
      %v931 = vsub.f32 %v771, %v899
      %v932 = vsub.f32 %v772, %v900
      %v933 = vsub.f32 %v773, %v901
      %v934 = vsub.f32 %v774, %v902
      %v935 = vsub.f32 %v775, %v903
      %v936 = vsub.f32 %v776, %v904
      %v937 = vsub.f32 %v777, %v905
      %v938 = vsub.f32 %v778, %v906
      %v939 = vsub.f32 %v779, %v907
      %v940 = vsub.f32 %v780, %v908
      %v941 = vsub.f32 %v781, %v909
      %v942 = vsub.f32 %v782, %v910
      %v943 = vsub.f32 %v783, %v911
      %v944 = vsub.f32 %v784, %v912
      %v945 = vsub.f32 %v785, %v913
      %v946 = vsub.f32 %v786, %v914
      %v947 = vsub.f32 %v787, %v915
      %v948 = vsub.f32 %v788, %v916
      %v949 = vsub.f32 %v789, %v917
      %v950 = vsub.f32 %v790, %v918
      %v951 = vsub.f32 %v791, %v919
      %v952 = vsub.f32 %v792, %v920
      %v953 = vmul.f32 %v921, 1.442695
      %v954 = vpow.pop %v953
      %v955 = vmul.f32 %v922, 1.442695
      %v956 = vpow.pop %v955
      %v957 = vmul.f32 %v923, 1.442695
      %v958 = vpow.pop %v957
      %v959 = vmul.f32 %v924, 1.442695
      %v960 = vpow.pop %v959
      %v961 = vmul.f32 %v925, 1.442695
      %v962 = vpow.pop %v961
      %v963 = vmul.f32 %v926, 1.442695
      %v964 = vpow.pop %v963
      %v965 = vmul.f32 %v927, 1.442695
      %v966 = vpow.pop %v965
      %v967 = vmul.f32 %v928, 1.442695
      %v968 = vpow.pop %v967
      %v969 = vmul.f32 %v929, 1.442695
      %v970 = vpow.pop %v969
      %v971 = vmul.f32 %v930, 1.442695
      %v972 = vpow.pop %v971
      %v973 = vmul.f32 %v931, 1.442695
      %v974 = vpow.pop %v973
      %v975 = vmul.f32 %v932, 1.442695
      %v976 = vpow.pop %v975
      %v977 = vmul.f32 %v933, 1.442695
      %v978 = vpow.pop %v977
      %v979 = vmul.f32 %v934, 1.442695
      %v980 = vpow.pop %v979
      %v981 = vmul.f32 %v935, 1.442695
      %v982 = vpow.pop %v981
      %v983 = vmul.f32 %v936, 1.442695
      %v984 = vpow.pop %v983
      %v985 = vmul.f32 %v937, 1.442695
      %v986 = vpow.pop %v985
      %v987 = vmul.f32 %v938, 1.442695
      %v988 = vpow.pop %v987
      %v989 = vmul.f32 %v939, 1.442695
      %v990 = vpow.pop %v989
      %v991 = vmul.f32 %v940, 1.442695
      %v992 = vpow.pop %v991
      %v993 = vmul.f32 %v941, 1.442695
      %v994 = vpow.pop %v993
      %v995 = vmul.f32 %v942, 1.442695
      %v996 = vpow.pop %v995
      %v997 = vmul.f32 %v943, 1.442695
      %v998 = vpow.pop %v997
      %v999 = vmul.f32 %v944, 1.442695
      %v1000 = vpow.pop %v999
      %v1001 = vmul.f32 %v945, 1.442695
      %v1002 = vpow.pop %v1001
      %v1003 = vmul.f32 %v946, 1.442695
      %v1004 = vpow.pop %v1003
      %v1005 = vmul.f32 %v947, 1.442695
      %v1006 = vpow.pop %v1005
      %v1007 = vmul.f32 %v948, 1.442695
      %v1008 = vpow.pop %v1007
      %v1009 = vmul.f32 %v949, 1.442695
      %v1010 = vpow.pop %v1009
      %v1011 = vmul.f32 %v950, 1.442695
      %v1012 = vpow.pop %v1011
      %v1013 = vmul.f32 %v951, 1.442695
      %v1014 = vpow.pop %v1013
      %v1015 = vmul.f32 %v952, 1.442695
      %v1016 = vpow.pop %v1015
      %1018 = vset.pattern.permute.xlu0 0
      %1019 = vperm.xlu0 %1018, %v889
      %v1020 = vpop.permute.xlu0 %1019
      %1023 = vset.pattern.permute.xlu0 0
      %1024 = vperm.xlu0 %1023, %v890
      %v1025 = vpop.permute.xlu0 %1024
      %1028 = vset.pattern.permute.xlu0 0
      %1029 = vperm.xlu0 %1028, %v891
      %v1030 = vpop.permute.xlu0 %1029
      %1033 = vset.pattern.permute.xlu0 0
      %1034 = vperm.xlu0 %1033, %v892
      %v1035 = vpop.permute.xlu0 %1034
      %1038 = vset.pattern.permute.xlu0 0
      %1039 = vperm.xlu0 %1038, %v893
      %v1040 = vpop.permute.xlu0 %1039
      %1043 = vset.pattern.permute.xlu0 0
      %1044 = vperm.xlu0 %1043, %v894
      %v1045 = vpop.permute.xlu0 %1044
      %1048 = vset.pattern.permute.xlu0 0
      %1049 = vperm.xlu0 %1048, %v895
      %v1050 = vpop.permute.xlu0 %1049
      %1053 = vset.pattern.permute.xlu0 0
      %1054 = vperm.xlu0 %1053, %v896
      %v1055 = vpop.permute.xlu0 %1054
      %1058 = vset.pattern.permute.xlu0 0
      %1059 = vperm.xlu0 %1058, %v897
      %v1060 = vpop.permute.xlu0 %1059
      %1063 = vset.pattern.permute.xlu0 0
      %1064 = vperm.xlu0 %1063, %v898
      %v1065 = vpop.permute.xlu0 %1064
      %1068 = vset.pattern.permute.xlu0 0
      %1069 = vperm.xlu0 %1068, %v899
      %v1070 = vpop.permute.xlu0 %1069
      %1073 = vset.pattern.permute.xlu0 0
      %1074 = vperm.xlu0 %1073, %v900
      %v1075 = vpop.permute.xlu0 %1074
      %1078 = vset.pattern.permute.xlu0 0
      %1079 = vperm.xlu0 %1078, %v901
      %v1080 = vpop.permute.xlu0 %1079
      %1083 = vset.pattern.permute.xlu0 0
      %1084 = vperm.xlu0 %1083, %v902
      %v1085 = vpop.permute.xlu0 %1084
      %1088 = vset.pattern.permute.xlu0 0
      %1089 = vperm.xlu0 %1088, %v903
      %v1090 = vpop.permute.xlu0 %1089
      %1093 = vset.pattern.permute.xlu0 0
      %1094 = vperm.xlu0 %1093, %v904
      %v1095 = vpop.permute.xlu0 %1094
      %1098 = vset.pattern.permute.xlu0 0
      %1099 = vperm.xlu0 %1098, %v905
      %v1100 = vpop.permute.xlu0 %1099
      %1103 = vset.pattern.permute.xlu0 0
      %1104 = vperm.xlu0 %1103, %v906
      %v1105 = vpop.permute.xlu0 %1104
      %1108 = vset.pattern.permute.xlu0 0
      %1109 = vperm.xlu0 %1108, %v907
      %v1110 = vpop.permute.xlu0 %1109
      %1113 = vset.pattern.permute.xlu0 0
      %1114 = vperm.xlu0 %1113, %v908
      %v1115 = vpop.permute.xlu0 %1114
      %1118 = vset.pattern.permute.xlu0 0
      %1119 = vperm.xlu0 %1118, %v909
      %v1120 = vpop.permute.xlu0 %1119
      %1123 = vset.pattern.permute.xlu0 0
      %1124 = vperm.xlu0 %1123, %v910
      %v1125 = vpop.permute.xlu0 %1124
      %1128 = vset.pattern.permute.xlu0 0
      %1129 = vperm.xlu0 %1128, %v911
      %v1130 = vpop.permute.xlu0 %1129
      %1133 = vset.pattern.permute.xlu0 0
      %1134 = vperm.xlu0 %1133, %v912
      %v1135 = vpop.permute.xlu0 %1134
      %1138 = vset.pattern.permute.xlu0 0
      %1139 = vperm.xlu0 %1138, %v913
      %v1140 = vpop.permute.xlu0 %1139
      %1143 = vset.pattern.permute.xlu0 0
      %1144 = vperm.xlu0 %1143, %v914
      %v1145 = vpop.permute.xlu0 %1144
      %1148 = vset.pattern.permute.xlu0 0
      %1149 = vperm.xlu0 %1148, %v915
      %v1150 = vpop.permute.xlu0 %1149
      %1153 = vset.pattern.permute.xlu0 0
      %1154 = vperm.xlu0 %1153, %v916
      %v1155 = vpop.permute.xlu0 %1154
      %1158 = vset.pattern.permute.xlu0 0
      %1159 = vperm.xlu0 %1158, %v917
      %v1160 = vpop.permute.xlu0 %1159
      %1163 = vset.pattern.permute.xlu0 0
      %1164 = vperm.xlu0 %1163, %v918
      %v1165 = vpop.permute.xlu0 %1164
      %1168 = vset.pattern.permute.xlu0 0
      %1169 = vperm.xlu0 %1168, %v919
      %v1170 = vpop.permute.xlu0 %1169
      %1173 = vset.pattern.permute.xlu0 0
      %1174 = vperm.xlu0 %1173, %v920
      %v1175 = vpop.permute.xlu0 %1174
      %v1177 = vsub.f32 %v593, %v1020
      %v1178 = vsub.f32 %v682, %v1020
      %v1179 = vsub.f32 %v595, %v1025
      %v1180 = vsub.f32 %v684, %v1025
      %v1181 = vsub.f32 %v598, %v1030
      %v1182 = vsub.f32 %v687, %v1030
      %v1183 = vsub.f32 %v600, %v1035
      %v1184 = vsub.f32 %v689, %v1035
      %v1185 = vsub.f32 %v603, %v1040
      %v1186 = vsub.f32 %v692, %v1040
      %v1187 = vsub.f32 %v605, %v1045
      %v1188 = vsub.f32 %v694, %v1045
      %v1189 = vsub.f32 %v608, %v1050
      %v1190 = vsub.f32 %v697, %v1050
      %v1191 = vsub.f32 %v610, %v1055
      %v1192 = vsub.f32 %v699, %v1055
      %v1193 = vsub.f32 %v613, %v1060
      %v1194 = vsub.f32 %v702, %v1060
      %v1195 = vsub.f32 %v615, %v1065
      %v1196 = vsub.f32 %v704, %v1065
      %v1197 = vsub.f32 %v618, %v1070
      %v1198 = vsub.f32 %v707, %v1070
      %v1199 = vsub.f32 %v620, %v1075
      %v1200 = vsub.f32 %v709, %v1075
      %v1201 = vsub.f32 %v623, %v1080
      %v1202 = vsub.f32 %v712, %v1080
      %v1203 = vsub.f32 %v625, %v1085
      %v1204 = vsub.f32 %v714, %v1085
      %v1205 = vsub.f32 %v628, %v1090
      %v1206 = vsub.f32 %v717, %v1090
      %v1207 = vsub.f32 %v630, %v1095
      %v1208 = vsub.f32 %v719, %v1095
      %v1209 = vsub.f32 %v633, %v1100
      %v1210 = vsub.f32 %v722, %v1100
      %v1211 = vsub.f32 %v635, %v1105
      %v1212 = vsub.f32 %v724, %v1105
      %v1213 = vsub.f32 %v638, %v1110
      %v1214 = vsub.f32 %v727, %v1110
      %v1215 = vsub.f32 %v640, %v1115
      %v1216 = vsub.f32 %v729, %v1115
      %v1217 = vsub.f32 %v643, %v1120
      %v1218 = vsub.f32 %v732, %v1120
      %v1219 = vsub.f32 %v645, %v1125
      %v1220 = vsub.f32 %v734, %v1125
      %v1221 = vsub.f32 %v648, %v1130
      %v1222 = vsub.f32 %v737, %v1130
      %v1223 = vsub.f32 %v650, %v1135
      %v1224 = vsub.f32 %v739, %v1135
      %v1225 = vsub.f32 %v653, %v1140
      %v1226 = vsub.f32 %v742, %v1140
      %v1227 = vsub.f32 %v655, %v1145
      %v1228 = vsub.f32 %v744, %v1145
      %v1229 = vsub.f32 %v658, %v1150
      %v1230 = vsub.f32 %v747, %v1150
      %v1231 = vsub.f32 %v660, %v1155
      %v1232 = vsub.f32 %v749, %v1155
      %v1233 = vsub.f32 %v663, %v1160
      %v1234 = vsub.f32 %v752, %v1160
      %v1235 = vsub.f32 %v665, %v1165
      %v1236 = vsub.f32 %v754, %v1165
      %v1237 = vsub.f32 %v668, %v1170
      %v1238 = vsub.f32 %v757, %v1170
      %v1239 = vsub.f32 %v670, %v1175
      %v1240 = vsub.f32 %v759, %v1175
      %v1241 = vmul.f32 %v1177, 1.442695
      %v1242 = vpow.pop %v1241
      %v1243 = vmul.f32 %v1178, 1.442695
      %v1244 = vpow.pop %v1243
      %v1245 = vmul.f32 %v1179, 1.442695
      %v1246 = vpow.pop %v1245
      %v1247 = vmul.f32 %v1180, 1.442695
      %v1248 = vpow.pop %v1247
      %v1249 = vmul.f32 %v1181, 1.442695
      %v1250 = vpow.pop %v1249
      %v1251 = vmul.f32 %v1182, 1.442695
      %v1252 = vpow.pop %v1251
      %v1253 = vmul.f32 %v1183, 1.442695
      %v1254 = vpow.pop %v1253
      %v1255 = vmul.f32 %v1184, 1.442695
      %v1256 = vpow.pop %v1255
      %v1257 = vmul.f32 %v1185, 1.442695
      %v1258 = vpow.pop %v1257
      %v1259 = vmul.f32 %v1186, 1.442695
      %v1260 = vpow.pop %v1259
      %v1261 = vmul.f32 %v1187, 1.442695
      %v1262 = vpow.pop %v1261
      %v1263 = vmul.f32 %v1188, 1.442695
      %v1264 = vpow.pop %v1263
      %v1265 = vmul.f32 %v1189, 1.442695
      %v1266 = vpow.pop %v1265
      %v1267 = vmul.f32 %v1190, 1.442695
      %v1268 = vpow.pop %v1267
      %v1269 = vmul.f32 %v1191, 1.442695
      %v1270 = vpow.pop %v1269
      %v1271 = vmul.f32 %v1192, 1.442695
      %v1272 = vpow.pop %v1271
      %v1273 = vmul.f32 %v1193, 1.442695
      %v1274 = vpow.pop %v1273
      %v1275 = vmul.f32 %v1194, 1.442695
      %v1276 = vpow.pop %v1275
      %v1277 = vmul.f32 %v1195, 1.442695
      %v1278 = vpow.pop %v1277
      %v1279 = vmul.f32 %v1196, 1.442695
      %v1280 = vpow.pop %v1279
      %v1281 = vmul.f32 %v1197, 1.442695
      %v1282 = vpow.pop %v1281
      %v1283 = vmul.f32 %v1198, 1.442695
      %v1284 = vpow.pop %v1283
      %v1285 = vmul.f32 %v1199, 1.442695
      %v1286 = vpow.pop %v1285
      %v1287 = vmul.f32 %v1200, 1.442695
      %v1288 = vpow.pop %v1287
      %v1289 = vmul.f32 %v1201, 1.442695
      %v1290 = vpow.pop %v1289
      %v1291 = vmul.f32 %v1202, 1.442695
      %v1292 = vpow.pop %v1291
      %v1293 = vmul.f32 %v1203, 1.442695
      %v1294 = vpow.pop %v1293
      %v1295 = vmul.f32 %v1204, 1.442695
      %v1296 = vpow.pop %v1295
      %v1297 = vmul.f32 %v1205, 1.442695
      %v1298 = vpow.pop %v1297
      %v1299 = vmul.f32 %v1206, 1.442695
      %v1300 = vpow.pop %v1299
      %v1301 = vmul.f32 %v1207, 1.442695
      %v1302 = vpow.pop %v1301
      %v1303 = vmul.f32 %v1208, 1.442695
      %v1304 = vpow.pop %v1303
      %v1305 = vmul.f32 %v1209, 1.442695
      %v1306 = vpow.pop %v1305
      %v1307 = vmul.f32 %v1210, 1.442695
      %v1308 = vpow.pop %v1307
      %v1309 = vmul.f32 %v1211, 1.442695
      %v1310 = vpow.pop %v1309
      %v1311 = vmul.f32 %v1212, 1.442695
      %v1312 = vpow.pop %v1311
      %v1313 = vmul.f32 %v1213, 1.442695
      %v1314 = vpow.pop %v1313
      %v1315 = vmul.f32 %v1214, 1.442695
      %v1316 = vpow.pop %v1315
      %v1317 = vmul.f32 %v1215, 1.442695
      %v1318 = vpow.pop %v1317
      %v1319 = vmul.f32 %v1216, 1.442695
      %v1320 = vpow.pop %v1319
      %v1321 = vmul.f32 %v1217, 1.442695
      %v1322 = vpow.pop %v1321
      %v1323 = vmul.f32 %v1218, 1.442695
      %v1324 = vpow.pop %v1323
      %v1325 = vmul.f32 %v1219, 1.442695
      %v1326 = vpow.pop %v1325
      %v1327 = vmul.f32 %v1220, 1.442695
      %v1328 = vpow.pop %v1327
      %v1329 = vmul.f32 %v1221, 1.442695
      %v1330 = vpow.pop %v1329
      %v1331 = vmul.f32 %v1222, 1.442695
      %v1332 = vpow.pop %v1331
      %v1333 = vmul.f32 %v1223, 1.442695
      %v1334 = vpow.pop %v1333
      %v1335 = vmul.f32 %v1224, 1.442695
      %v1336 = vpow.pop %v1335
      %v1337 = vmul.f32 %v1225, 1.442695
      %v1338 = vpow.pop %v1337
      %v1339 = vmul.f32 %v1226, 1.442695
      %v1340 = vpow.pop %v1339
      %v1341 = vmul.f32 %v1227, 1.442695
      %v1342 = vpow.pop %v1341
      %v1343 = vmul.f32 %v1228, 1.442695
      %v1344 = vpow.pop %v1343
      %v1345 = vmul.f32 %v1229, 1.442695
      %v1346 = vpow.pop %v1345
      %v1347 = vmul.f32 %v1230, 1.442695
      %v1348 = vpow.pop %v1347
      %v1349 = vmul.f32 %v1231, 1.442695
      %v1350 = vpow.pop %v1349
      %v1351 = vmul.f32 %v1232, 1.442695
      %v1352 = vpow.pop %v1351
      %v1353 = vmul.f32 %v1233, 1.442695
      %v1354 = vpow.pop %v1353
      %v1355 = vmul.f32 %v1234, 1.442695
      %v1356 = vpow.pop %v1355
      %v1357 = vmul.f32 %v1235, 1.442695
      %v1358 = vpow.pop %v1357
      %v1359 = vmul.f32 %v1236, 1.442695
      %v1360 = vpow.pop %v1359
      %v1361 = vmul.f32 %v1237, 1.442695
      %v1362 = vpow.pop %v1361
      %v1363 = vmul.f32 %v1238, 1.442695
      %v1364 = vpow.pop %v1363
      %v1365 = vmul.f32 %v1239, 1.442695
      %v1366 = vpow.pop %v1365
      %v1367 = vmul.f32 %v1240, 1.442695
      %v1368 = vpow.pop %v1367
      %v1369 = vld [vmem:[#allocation3] sm:$0xff]
      %v1370 = vld [vmem:[#allocation3 + $0x8] sm:$0xff]
      %v1371 = vld [vmem:[#allocation3 + $0x10] sm:$0xff]
      %v1372 = vld [vmem:[#allocation3 + $0x18] sm:$0xff]
      %v1373 = vld [vmem:[#allocation3 + $0x20] sm:$0xff]
      %v1374 = vld [vmem:[#allocation3 + $0x28] sm:$0xff]
      %v1375 = vld [vmem:[#allocation3 + $0x30] sm:$0xff]
      %v1376 = vld [vmem:[#allocation3 + $0x38] sm:$0xff]
      %v1377 = vld [vmem:[#allocation3 + $0x40] sm:$0xff]
      %v1378 = vld [vmem:[#allocation3 + $0x48] sm:$0xff]
      %v1379 = vld [vmem:[#allocation3 + $0x50] sm:$0xff]
      %v1380 = vld [vmem:[#allocation3 + $0x58] sm:$0xff]
      %v1381 = vld [vmem:[#allocation3 + $0x60] sm:$0xff]
      %v1382 = vld [vmem:[#allocation3 + $0x68] sm:$0xff]
      %v1383 = vld [vmem:[#allocation3 + $0x70] sm:$0xff]
      %v1384 = vld [vmem:[#allocation3 + $0x78] sm:$0xff]
      %v1385 = vld [vmem:[#allocation3 + $0x80] sm:$0xff]
      %v1386 = vld [vmem:[#allocation3 + $0x88] sm:$0xff]
      %v1387 = vld [vmem:[#allocation3 + $0x90] sm:$0xff]
      %v1388 = vld [vmem:[#allocation3 + $0x98] sm:$0xff]
      %v1389 = vld [vmem:[#allocation3 + $0xa0] sm:$0xff]
      %v1390 = vld [vmem:[#allocation3 + $0xa8] sm:$0xff]
      %v1391 = vld [vmem:[#allocation3 + $0xb0] sm:$0xff]
      %v1392 = vld [vmem:[#allocation3 + $0xb8] sm:$0xff]
      %v1393 = vld [vmem:[#allocation3 + $0xc0] sm:$0xff]
      %v1394 = vld [vmem:[#allocation3 + $0xc8] sm:$0xff]
      %v1395 = vld [vmem:[#allocation3 + $0xd0] sm:$0xff]
      %v1396 = vld [vmem:[#allocation3 + $0xd8] sm:$0xff]
      %v1397 = vld [vmem:[#allocation3 + $0xe0] sm:$0xff]
      %v1398 = vld [vmem:[#allocation3 + $0xe8] sm:$0xff]
      %v1399 = vld [vmem:[#allocation3 + $0xf0] sm:$0xff]
      %v1400 = vld [vmem:[#allocation3 + $0xf8] sm:$0xff]
      %v1401 = vmul.f32 %v954, %v1369
      %v1402 = vmul.f32 %v956, %v1370
      %v1403 = vmul.f32 %v958, %v1371
      %v1404 = vmul.f32 %v960, %v1372
      %v1405 = vmul.f32 %v962, %v1373
      %v1406 = vmul.f32 %v964, %v1374
      %v1407 = vmul.f32 %v966, %v1375
      %v1408 = vmul.f32 %v968, %v1376
      %v1409 = vmul.f32 %v970, %v1377
      %v1410 = vmul.f32 %v972, %v1378
      %v1411 = vmul.f32 %v974, %v1379
      %v1412 = vmul.f32 %v976, %v1380
      %v1413 = vmul.f32 %v978, %v1381
      %v1414 = vmul.f32 %v980, %v1382
      %v1415 = vmul.f32 %v982, %v1383
      %v1416 = vmul.f32 %v984, %v1384
      %v1417 = vmul.f32 %v986, %v1385
      %v1418 = vmul.f32 %v988, %v1386
      %v1419 = vmul.f32 %v990, %v1387
      %v1420 = vmul.f32 %v992, %v1388
      %v1421 = vmul.f32 %v994, %v1389
      %v1422 = vmul.f32 %v996, %v1390
      %v1423 = vmul.f32 %v998, %v1391
      %v1424 = vmul.f32 %v1000, %v1392
      %v1425 = vmul.f32 %v1002, %v1393
      %v1426 = vmul.f32 %v1004, %v1394
      %v1427 = vmul.f32 %v1006, %v1395
      %v1428 = vmul.f32 %v1008, %v1396
      %v1429 = vmul.f32 %v1010, %v1397
      %v1430 = vmul.f32 %v1012, %v1398
      %v1431 = vmul.f32 %v1014, %v1399
      %v1432 = vmul.f32 %v1016, %v1400
      %v1433 = vadd.f32 %v1242, %v1244
      %1434 = vadd.xlane.f32.xlu0 %v1433
      %v1435 = vpop.xlane.xlu0 %1434
      %v1436 = vadd.f32 %v1246, %v1248
      %1437 = vadd.xlane.f32.xlu0 %v1436
      %v1438 = vpop.xlane.xlu0 %1437
      %v1439 = vadd.f32 %v1250, %v1252
      %1440 = vadd.xlane.f32.xlu0 %v1439
      %v1441 = vpop.xlane.xlu0 %1440
      %v1442 = vadd.f32 %v1254, %v1256
      %1443 = vadd.xlane.f32.xlu0 %v1442
      %v1444 = vpop.xlane.xlu0 %1443
      %v1445 = vadd.f32 %v1258, %v1260
      %1446 = vadd.xlane.f32.xlu0 %v1445
      %v1447 = vpop.xlane.xlu0 %1446
      %v1448 = vadd.f32 %v1262, %v1264
      %1449 = vadd.xlane.f32.xlu0 %v1448
      %v1450 = vpop.xlane.xlu0 %1449
      %v1451 = vadd.f32 %v1266, %v1268
      %1452 = vadd.xlane.f32.xlu0 %v1451
      %v1453 = vpop.xlane.xlu0 %1452
      %v1454 = vadd.f32 %v1270, %v1272
      %1455 = vadd.xlane.f32.xlu0 %v1454
      %v1456 = vpop.xlane.xlu0 %1455
      %v1457 = vadd.f32 %v1274, %v1276
      %1458 = vadd.xlane.f32.xlu0 %v1457
      %v1459 = vpop.xlane.xlu0 %1458
      %v1460 = vadd.f32 %v1278, %v1280
      %1461 = vadd.xlane.f32.xlu0 %v1460
      %v1462 = vpop.xlane.xlu0 %1461
      %v1463 = vadd.f32 %v1282, %v1284
      %1464 = vadd.xlane.f32.xlu0 %v1463
      %v1465 = vpop.xlane.xlu0 %1464
      %v1466 = vadd.f32 %v1286, %v1288
      %1467 = vadd.xlane.f32.xlu0 %v1466
      %v1468 = vpop.xlane.xlu0 %1467
      %v1469 = vadd.f32 %v1290, %v1292
      %1470 = vadd.xlane.f32.xlu0 %v1469
      %v1471 = vpop.xlane.xlu0 %1470
      %v1472 = vadd.f32 %v1294, %v1296
      %1473 = vadd.xlane.f32.xlu0 %v1472
      %v1474 = vpop.xlane.xlu0 %1473
      %v1475 = vadd.f32 %v1298, %v1300
      %1476 = vadd.xlane.f32.xlu0 %v1475
      %v1477 = vpop.xlane.xlu0 %1476
      %v1478 = vadd.f32 %v1302, %v1304
      %1479 = vadd.xlane.f32.xlu0 %v1478
      %v1480 = vpop.xlane.xlu0 %1479
      %v1481 = vadd.f32 %v1306, %v1308
      %1482 = vadd.xlane.f32.xlu0 %v1481
      %v1483 = vpop.xlane.xlu0 %1482
      %v1484 = vadd.f32 %v1310, %v1312
      %1485 = vadd.xlane.f32.xlu0 %v1484
      %v1486 = vpop.xlane.xlu0 %1485
      %v1487 = vadd.f32 %v1314, %v1316
      %1488 = vadd.xlane.f32.xlu0 %v1487
      %v1489 = vpop.xlane.xlu0 %1488
      %v1490 = vadd.f32 %v1318, %v1320
      %1491 = vadd.xlane.f32.xlu0 %v1490
      %v1492 = vpop.xlane.xlu0 %1491
      %v1493 = vadd.f32 %v1322, %v1324
      %1494 = vadd.xlane.f32.xlu0 %v1493
      %v1495 = vpop.xlane.xlu0 %1494
      %v1496 = vadd.f32 %v1326, %v1328
      %1497 = vadd.xlane.f32.xlu0 %v1496
      %v1498 = vpop.xlane.xlu0 %1497
      %v1499 = vadd.f32 %v1330, %v1332
      %1500 = vadd.xlane.f32.xlu0 %v1499
      %v1501 = vpop.xlane.xlu0 %1500
      %v1502 = vadd.f32 %v1334, %v1336
      %1503 = vadd.xlane.f32.xlu0 %v1502
      %v1504 = vpop.xlane.xlu0 %1503
      %v1505 = vadd.f32 %v1338, %v1340
      %1506 = vadd.xlane.f32.xlu0 %v1505
      %v1507 = vpop.xlane.xlu0 %1506
      %v1508 = vadd.f32 %v1342, %v1344
      %1509 = vadd.xlane.f32.xlu0 %v1508
      %v1510 = vpop.xlane.xlu0 %1509
      %v1511 = vadd.f32 %v1346, %v1348
      %1512 = vadd.xlane.f32.xlu0 %v1511
      %v1513 = vpop.xlane.xlu0 %1512
      %v1514 = vadd.f32 %v1350, %v1352
      %1515 = vadd.xlane.f32.xlu0 %v1514
      %v1516 = vpop.xlane.xlu0 %1515
      %v1517 = vadd.f32 %v1354, %v1356
      %1518 = vadd.xlane.f32.xlu0 %v1517
      %v1519 = vpop.xlane.xlu0 %1518
      %v1520 = vadd.f32 %v1358, %v1360
      %1521 = vadd.xlane.f32.xlu0 %v1520
      %v1522 = vpop.xlane.xlu0 %1521
      %v1523 = vadd.f32 %v1362, %v1364
      %1524 = vadd.xlane.f32.xlu0 %v1523
      %v1525 = vpop.xlane.xlu0 %1524
      %v1526 = vadd.f32 %v1366, %v1368
      %1527 = vadd.xlane.f32.xlu0 %v1526
      %v1528 = vpop.xlane.xlu0 %1527
      %v1529 = vadd.f32 %v1401, %v1435
      %v1530 = vadd.f32 %v1402, %v1438
      %v1531 = vadd.f32 %v1403, %v1441
      %v1532 = vadd.f32 %v1404, %v1444
      %v1533 = vadd.f32 %v1405, %v1447
      %v1534 = vadd.f32 %v1406, %v1450
      %v1535 = vadd.f32 %v1407, %v1453
      %v1536 = vadd.f32 %v1408, %v1456
      %v1537 = vadd.f32 %v1409, %v1459
      %v1538 = vadd.f32 %v1410, %v1462
      %v1539 = vadd.f32 %v1411, %v1465
      %v1540 = vadd.f32 %v1412, %v1468
      %v1541 = vadd.f32 %v1413, %v1471
      %v1542 = vadd.f32 %v1414, %v1474
      %v1543 = vadd.f32 %v1415, %v1477
      %v1544 = vadd.f32 %v1416, %v1480
      %v1545 = vadd.f32 %v1417, %v1483
      %v1546 = vadd.f32 %v1418, %v1486
      %v1547 = vadd.f32 %v1419, %v1489
      %v1548 = vadd.f32 %v1420, %v1492
      %v1549 = vadd.f32 %v1421, %v1495
      %v1550 = vadd.f32 %v1422, %v1498
      %v1551 = vadd.f32 %v1423, %v1501
      %v1552 = vadd.f32 %v1424, %v1504
      %v1553 = vadd.f32 %v1425, %v1507
      %v1554 = vadd.f32 %v1426, %v1510
      %v1555 = vadd.f32 %v1427, %v1513
      %v1556 = vadd.f32 %v1428, %v1516
      %v1557 = vadd.f32 %v1429, %v1519
      %v1558 = vadd.f32 %v1430, %v1522
      %v1559 = vadd.f32 %v1431, %v1525
      %v1560 = vadd.f32 %v1432, %v1528
      %vm1561 = vcmask 7168
      %1562 = vst.msk [vmem:[#allocation3] sm:$0xff] %vm1561, %v1529
      %1563 = vst.msk [vmem:[#allocation3 + $0x8] sm:$0xff] %vm1561, %v1530
      %1564 = vst.msk [vmem:[#allocation3 + $0x10] sm:$0xff] %vm1561, %v1531
      %1565 = vst.msk [vmem:[#allocation3 + $0x18] sm:$0xff] %vm1561, %v1532
      %1566 = vst.msk [vmem:[#allocation3 + $0x20] sm:$0xff] %vm1561, %v1533
      %1567 = vst.msk [vmem:[#allocation3 + $0x28] sm:$0xff] %vm1561, %v1534
      %1568 = vst.msk [vmem:[#allocation3 + $0x30] sm:$0xff] %vm1561, %v1535
      %1569 = vst.msk [vmem:[#allocation3 + $0x38] sm:$0xff] %vm1561, %v1536
      %1570 = vst.msk [vmem:[#allocation3 + $0x40] sm:$0xff] %vm1561, %v1537
      %1571 = vst.msk [vmem:[#allocation3 + $0x48] sm:$0xff] %vm1561, %v1538
      %1572 = vst.msk [vmem:[#allocation3 + $0x50] sm:$0xff] %vm1561, %v1539
      %1573 = vst.msk [vmem:[#allocation3 + $0x58] sm:$0xff] %vm1561, %v1540
      %1574 = vst.msk [vmem:[#allocation3 + $0x60] sm:$0xff] %vm1561, %v1541
      %1575 = vst.msk [vmem:[#allocation3 + $0x68] sm:$0xff] %vm1561, %v1542
      %1576 = vst.msk [vmem:[#allocation3 + $0x70] sm:$0xff] %vm1561, %v1543
      %1577 = vst.msk [vmem:[#allocation3 + $0x78] sm:$0xff] %vm1561, %v1544
      %1578 = vst.msk [vmem:[#allocation3 + $0x80] sm:$0xff] %vm1561, %v1545
      %1579 = vst.msk [vmem:[#allocation3 + $0x88] sm:$0xff] %vm1561, %v1546
      %1580 = vst.msk [vmem:[#allocation3 + $0x90] sm:$0xff] %vm1561, %v1547
      %1581 = vst.msk [vmem:[#allocation3 + $0x98] sm:$0xff] %vm1561, %v1548
      %1582 = vst.msk [vmem:[#allocation3 + $0xa0] sm:$0xff] %vm1561, %v1549
      %1583 = vst.msk [vmem:[#allocation3 + $0xa8] sm:$0xff] %vm1561, %v1550
      %1584 = vst.msk [vmem:[#allocation3 + $0xb0] sm:$0xff] %vm1561, %v1551
      %1585 = vst.msk [vmem:[#allocation3 + $0xb8] sm:$0xff] %vm1561, %v1552
      %1586 = vst.msk [vmem:[#allocation3 + $0xc0] sm:$0xff] %vm1561, %v1553
      %1587 = vst.msk [vmem:[#allocation3 + $0xc8] sm:$0xff] %vm1561, %v1554
      %1588 = vst.msk [vmem:[#allocation3 + $0xd0] sm:$0xff] %vm1561, %v1555
      %1589 = vst.msk [vmem:[#allocation3 + $0xd8] sm:$0xff] %vm1561, %v1556
      %1590 = vst.msk [vmem:[#allocation3 + $0xe0] sm:$0xff] %vm1561, %v1557
      %1591 = vst.msk [vmem:[#allocation3 + $0xe8] sm:$0xff] %vm1561, %v1558
      %1592 = vst.msk [vmem:[#allocation3 + $0xf0] sm:$0xff] %vm1561, %v1559
      %1593 = vst.msk [vmem:[#allocation3 + $0xf8] sm:$0xff] %vm1561, %v1560
      %v1594 = vld [vmem:[#allocation4] sm:$0xff]
      %v1595 = vld [vmem:[#allocation4 + $0x8] sm:$0xff]
      %v1596 = vld [vmem:[#allocation4 + $0x10] sm:$0xff]
      %v1597 = vld [vmem:[#allocation4 + $0x18] sm:$0xff]
      %v1598 = vld [vmem:[#allocation4 + $0x20] sm:$0xff]
      %v1599 = vld [vmem:[#allocation4 + $0x28] sm:$0xff]
      %v1600 = vld [vmem:[#allocation4 + $0x30] sm:$0xff]
      %v1601 = vld [vmem:[#allocation4 + $0x38] sm:$0xff]
      %v1602 = vld [vmem:[#allocation4 + $0x40] sm:$0xff]
      %v1603 = vld [vmem:[#allocation4 + $0x48] sm:$0xff]
      %v1604 = vld [vmem:[#allocation4 + $0x50] sm:$0xff]
      %v1605 = vld [vmem:[#allocation4 + $0x58] sm:$0xff]
      %v1606 = vld [vmem:[#allocation4 + $0x60] sm:$0xff]
      %v1607 = vld [vmem:[#allocation4 + $0x68] sm:$0xff]
      %v1608 = vld [vmem:[#allocation4 + $0x70] sm:$0xff]
      %v1609 = vld [vmem:[#allocation4 + $0x78] sm:$0xff]
      %v1610 = vld [vmem:[#allocation4 + $0x80] sm:$0xff]
      %v1611 = vld [vmem:[#allocation4 + $0x88] sm:$0xff]
      %v1612 = vld [vmem:[#allocation4 + $0x90] sm:$0xff]
      %v1613 = vld [vmem:[#allocation4 + $0x98] sm:$0xff]
      %v1614 = vld [vmem:[#allocation4 + $0xa0] sm:$0xff]
      %v1615 = vld [vmem:[#allocation4 + $0xa8] sm:$0xff]
      %v1616 = vld [vmem:[#allocation4 + $0xb0] sm:$0xff]
      %v1617 = vld [vmem:[#allocation4 + $0xb8] sm:$0xff]
      %v1618 = vld [vmem:[#allocation4 + $0xc0] sm:$0xff]
      %v1619 = vld [vmem:[#allocation4 + $0xc8] sm:$0xff]
      %v1620 = vld [vmem:[#allocation4 + $0xd0] sm:$0xff]
      %v1621 = vld [vmem:[#allocation4 + $0xd8] sm:$0xff]
      %v1622 = vld [vmem:[#allocation4 + $0xe0] sm:$0xff]
      %v1623 = vld [vmem:[#allocation4 + $0xe8] sm:$0xff]
      %v1624 = vld [vmem:[#allocation4 + $0xf0] sm:$0xff]
      %v1625 = vld [vmem:[#allocation4 + $0xf8] sm:$0xff]
      %1627 = vset.pattern.permute.xlu0 0
      %1628 = vperm.xlu0 %1627, %v954
      %v1629 = vpop.permute.xlu0 %1628
      %1632 = vset.pattern.permute.xlu0 0
      %1633 = vperm.xlu0 %1632, %v956
      %v1634 = vpop.permute.xlu0 %1633
      %1637 = vset.pattern.permute.xlu0 0
      %1638 = vperm.xlu0 %1637, %v958
      %v1639 = vpop.permute.xlu0 %1638
      %1642 = vset.pattern.permute.xlu0 0
      %1643 = vperm.xlu0 %1642, %v960
      %v1644 = vpop.permute.xlu0 %1643
      %1647 = vset.pattern.permute.xlu0 0
      %1648 = vperm.xlu0 %1647, %v962
      %v1649 = vpop.permute.xlu0 %1648
      %1652 = vset.pattern.permute.xlu0 0
      %1653 = vperm.xlu0 %1652, %v964
      %v1654 = vpop.permute.xlu0 %1653
      %1657 = vset.pattern.permute.xlu0 0
      %1658 = vperm.xlu0 %1657, %v966
      %v1659 = vpop.permute.xlu0 %1658
      %1662 = vset.pattern.permute.xlu0 0
      %1663 = vperm.xlu0 %1662, %v968
      %v1664 = vpop.permute.xlu0 %1663
      %1667 = vset.pattern.permute.xlu0 0
      %1668 = vperm.xlu0 %1667, %v970
      %v1669 = vpop.permute.xlu0 %1668
      %1672 = vset.pattern.permute.xlu0 0
      %1673 = vperm.xlu0 %1672, %v972
      %v1674 = vpop.permute.xlu0 %1673
      %1677 = vset.pattern.permute.xlu0 0
      %1678 = vperm.xlu0 %1677, %v974
      %v1679 = vpop.permute.xlu0 %1678
      %1682 = vset.pattern.permute.xlu0 0
      %1683 = vperm.xlu0 %1682, %v976
      %v1684 = vpop.permute.xlu0 %1683
      %1687 = vset.pattern.permute.xlu0 0
      %1688 = vperm.xlu0 %1687, %v978
      %v1689 = vpop.permute.xlu0 %1688
      %1692 = vset.pattern.permute.xlu0 0
      %1693 = vperm.xlu0 %1692, %v980
      %v1694 = vpop.permute.xlu0 %1693
      %1697 = vset.pattern.permute.xlu0 0
      %1698 = vperm.xlu0 %1697, %v982
      %v1699 = vpop.permute.xlu0 %1698
      %1702 = vset.pattern.permute.xlu0 0
      %1703 = vperm.xlu0 %1702, %v984
      %v1704 = vpop.permute.xlu0 %1703
      %1707 = vset.pattern.permute.xlu0 0
      %1708 = vperm.xlu0 %1707, %v986
      %v1709 = vpop.permute.xlu0 %1708
      %1712 = vset.pattern.permute.xlu0 0
      %1713 = vperm.xlu0 %1712, %v988
      %v1714 = vpop.permute.xlu0 %1713
      %1717 = vset.pattern.permute.xlu0 0
      %1718 = vperm.xlu0 %1717, %v990
      %v1719 = vpop.permute.xlu0 %1718
      %1722 = vset.pattern.permute.xlu0 0
      %1723 = vperm.xlu0 %1722, %v992
      %v1724 = vpop.permute.xlu0 %1723
      %1727 = vset.pattern.permute.xlu0 0
      %1728 = vperm.xlu0 %1727, %v994
      %v1729 = vpop.permute.xlu0 %1728
      %1732 = vset.pattern.permute.xlu0 0
      %1733 = vperm.xlu0 %1732, %v996
      %v1734 = vpop.permute.xlu0 %1733
      %1737 = vset.pattern.permute.xlu0 0
      %1738 = vperm.xlu0 %1737, %v998
      %v1739 = vpop.permute.xlu0 %1738
      %1742 = vset.pattern.permute.xlu0 0
      %1743 = vperm.xlu0 %1742, %v1000
      %v1744 = vpop.permute.xlu0 %1743
      %1747 = vset.pattern.permute.xlu0 0
      %1748 = vperm.xlu0 %1747, %v1002
      %v1749 = vpop.permute.xlu0 %1748
      %1752 = vset.pattern.permute.xlu0 0
      %1753 = vperm.xlu0 %1752, %v1004
      %v1754 = vpop.permute.xlu0 %1753
      %1757 = vset.pattern.permute.xlu0 0
      %1758 = vperm.xlu0 %1757, %v1006
      %v1759 = vpop.permute.xlu0 %1758
      %1762 = vset.pattern.permute.xlu0 0
      %1763 = vperm.xlu0 %1762, %v1008
      %v1764 = vpop.permute.xlu0 %1763
      %1767 = vset.pattern.permute.xlu0 0
      %1768 = vperm.xlu0 %1767, %v1010
      %v1769 = vpop.permute.xlu0 %1768
      %1772 = vset.pattern.permute.xlu0 0
      %1773 = vperm.xlu0 %1772, %v1012
      %v1774 = vpop.permute.xlu0 %1773
      %1777 = vset.pattern.permute.xlu0 0
      %1778 = vperm.xlu0 %1777, %v1014
      %v1779 = vpop.permute.xlu0 %1778
      %1782 = vset.pattern.permute.xlu0 0
      %1783 = vperm.xlu0 %1782, %v1016
      %v1784 = vpop.permute.xlu0 %1783
      %v1786 = vmul.f32 %v1629, %v1594
      %v1787 = vmul.f32 %v1634, %v1595
      %v1788 = vmul.f32 %v1639, %v1596
      %v1789 = vmul.f32 %v1644, %v1597
      %v1790 = vmul.f32 %v1649, %v1598
      %v1791 = vmul.f32 %v1654, %v1599
      %v1792 = vmul.f32 %v1659, %v1600
      %v1793 = vmul.f32 %v1664, %v1601
      %v1794 = vmul.f32 %v1669, %v1602
      %v1795 = vmul.f32 %v1674, %v1603
      %v1796 = vmul.f32 %v1679, %v1604
      %v1797 = vmul.f32 %v1684, %v1605
      %v1798 = vmul.f32 %v1689, %v1606
      %v1799 = vmul.f32 %v1694, %v1607
      %v1800 = vmul.f32 %v1699, %v1608
      %v1801 = vmul.f32 %v1704, %v1609
      %v1802 = vmul.f32 %v1709, %v1610
      %v1803 = vmul.f32 %v1714, %v1611
      %v1804 = vmul.f32 %v1719, %v1612
      %v1805 = vmul.f32 %v1724, %v1613
      %v1806 = vmul.f32 %v1729, %v1614
      %v1807 = vmul.f32 %v1734, %v1615
      %v1808 = vmul.f32 %v1739, %v1616
      %v1809 = vmul.f32 %v1744, %v1617
      %v1810 = vmul.f32 %v1749, %v1618
      %v1811 = vmul.f32 %v1754, %v1619
      %v1812 = vmul.f32 %v1759, %v1620
      %v1813 = vmul.f32 %v1764, %v1621
      %v1814 = vmul.f32 %v1769, %v1622
      %v1815 = vmul.f32 %v1774, %v1623
      %v1816 = vmul.f32 %v1779, %v1624
      %v1817 = vmul.f32 %v1784, %v1625
      %v1818 = vpack.c.bf16 %v1246, %v1242
      %v1819 = vpack.c.bf16 %v1248, %v1244
      %v1820 = vpack.c.bf16 %v1254, %v1250
      %v1821 = vpack.c.bf16 %v1256, %v1252
      %v1822 = vpack.c.bf16 %v1262, %v1258
      %v1823 = vpack.c.bf16 %v1264, %v1260
      %v1824 = vpack.c.bf16 %v1270, %v1266
      %v1825 = vpack.c.bf16 %v1272, %v1268
      %v1826 = vpack.c.bf16 %v1278, %v1274
      %v1827 = vpack.c.bf16 %v1280, %v1276
      %v1828 = vpack.c.bf16 %v1286, %v1282
      %v1829 = vpack.c.bf16 %v1288, %v1284
      %v1830 = vpack.c.bf16 %v1294, %v1290
      %v1831 = vpack.c.bf16 %v1296, %v1292
      %v1832 = vpack.c.bf16 %v1302, %v1298
      %v1833 = vpack.c.bf16 %v1304, %v1300
      %v1834 = vpack.c.bf16 %v1310, %v1306
      %v1835 = vpack.c.bf16 %v1312, %v1308
      %v1836 = vpack.c.bf16 %v1318, %v1314
      %v1837 = vpack.c.bf16 %v1320, %v1316
      %v1838 = vpack.c.bf16 %v1326, %v1322
      %v1839 = vpack.c.bf16 %v1328, %v1324
      %v1840 = vpack.c.bf16 %v1334, %v1330
      %v1841 = vpack.c.bf16 %v1336, %v1332
      %v1842 = vpack.c.bf16 %v1342, %v1338
      %v1843 = vpack.c.bf16 %v1344, %v1340
      %v1844 = vpack.c.bf16 %v1350, %v1346
      %v1845 = vpack.c.bf16 %v1352, %v1348
      %v1846 = vpack.c.bf16 %v1358, %v1354
      %v1847 = vpack.c.bf16 %v1360, %v1356
      %v1848 = vpack.c.bf16 %v1366, %v1362
      %v1849 = vpack.c.bf16 %v1368, %v1364
      %v1850 = vld [vmem:[%s361] sm:$0xf]
      %v1851 = vld [vmem:[%s361 + $0x4] sm:$0xf]
      %v1852 = vld [vmem:[%s361 + $0x8] sm:$0xf]
      %v1853 = vld [vmem:[%s361 + $0xc] sm:$0xf]
      %v1854 = vld [vmem:[%s361 + $0x10] sm:$0xf]
      %v1855 = vld [vmem:[%s361 + $0x14] sm:$0xf]
      %v1856 = vld [vmem:[%s361 + $0x18] sm:$0xf]
      %v1857 = vld [vmem:[%s361 + $0x1c] sm:$0xf]
      %v1858 = vld [vmem:[%s361 + $0x20] sm:$0xf]
      %v1859 = vld [vmem:[%s361 + $0x24] sm:$0xf]
      %v1860 = vld [vmem:[%s361 + $0x28] sm:$0xf]
      %v1861 = vld [vmem:[%s361 + $0x2c] sm:$0xf]
      %v1862 = vld [vmem:[%s361 + $0x30] sm:$0xf]
      %v1863 = vld [vmem:[%s361 + $0x34] sm:$0xf]
      %v1864 = vld [vmem:[%s361 + $0x38] sm:$0xf]
      %v1865 = vld [vmem:[%s361 + $0x3c] sm:$0xf]
      %v1866 = vld [vmem:[%s361 + $0x40] sm:$0xf]
      %v1867 = vld [vmem:[%s361 + $0x44] sm:$0xf]
      %v1868 = vld [vmem:[%s361 + $0x48] sm:$0xf]
      %v1869 = vld [vmem:[%s361 + $0x4c] sm:$0xf]
      %v1870 = vld [vmem:[%s361 + $0x50] sm:$0xf]
      %v1871 = vld [vmem:[%s361 + $0x54] sm:$0xf]
      %v1872 = vld [vmem:[%s361 + $0x58] sm:$0xf]
      %v1873 = vld [vmem:[%s361 + $0x5c] sm:$0xf]
      %v1874 = vld [vmem:[%s361 + $0x60] sm:$0xf]
      %v1875 = vld [vmem:[%s361 + $0x64] sm:$0xf]
      %v1876 = vld [vmem:[%s361 + $0x68] sm:$0xf]
      %v1877 = vld [vmem:[%s361 + $0x6c] sm:$0xf]
      %v1878 = vld [vmem:[%s361 + $0x70] sm:$0xf]
      %v1879 = vld [vmem:[%s361 + $0x74] sm:$0xf]
      %v1880 = vld [vmem:[%s361 + $0x78] sm:$0xf]
      %v1881 = vld [vmem:[%s361 + $0x7c] sm:$0xf]
      %v1914 = vunpack.c.l.b16 %v1850
      %v1915 = vunpack.c.l.b16 %v1851
      %v1916 = vunpack.c.l.b16 %v1852
      %v1917 = vunpack.c.l.b16 %v1853
      %v1918 = vunpack.c.l.b16 %v1854
      %v1919 = vunpack.c.l.b16 %v1855
      %v1920 = vunpack.c.l.b16 %v1856
      %v1921 = vunpack.c.l.b16 %v1857
      %v1922 = vunpack.c.l.b16 %v1858
      %v1923 = vunpack.c.l.b16 %v1859
      %v1924 = vunpack.c.l.b16 %v1860
      %v1925 = vunpack.c.l.b16 %v1861
      %v1926 = vunpack.c.l.b16 %v1862
      %v1927 = vunpack.c.l.b16 %v1863
      %v1928 = vunpack.c.l.b16 %v1864
      %v1929 = vunpack.c.l.b16 %v1865
      %v1930 = vunpack.c.l.b16 %v1866
      %v1931 = vunpack.c.l.b16 %v1867
      %v1932 = vunpack.c.l.b16 %v1868
      %v1933 = vunpack.c.l.b16 %v1869
      %v1934 = vunpack.c.l.b16 %v1870
      %v1935 = vunpack.c.l.b16 %v1871
      %v1936 = vunpack.c.l.b16 %v1872
      %v1937 = vunpack.c.l.b16 %v1873
      %v1938 = vunpack.c.l.b16 %v1874
      %v1939 = vunpack.c.l.b16 %v1875
      %v1940 = vunpack.c.l.b16 %v1876
      %v1941 = vunpack.c.l.b16 %v1877
      %v1942 = vunpack.c.l.b16 %v1878
      %v1943 = vunpack.c.l.b16 %v1879
      %v1944 = vunpack.c.l.b16 %v1880
      %v1945 = vunpack.c.l.b16 %v1881
      %v1946 = vpack.c.b16 %v1915, %v1914
      %v1947 = vpack.c.b16 %v1917, %v1916
      %v1948 = vpack.c.b16 %v1919, %v1918
      %v1949 = vpack.c.b16 %v1921, %v1920
      %v1950 = vpack.c.b16 %v1923, %v1922
      %v1951 = vpack.c.b16 %v1925, %v1924
      %v1952 = vpack.c.b16 %v1927, %v1926
      %v1953 = vpack.c.b16 %v1929, %v1928
      %v1954 = vpack.c.b16 %v1931, %v1930
      %v1955 = vpack.c.b16 %v1933, %v1932
      %v1956 = vpack.c.b16 %v1935, %v1934
      %v1957 = vpack.c.b16 %v1937, %v1936
      %v1958 = vpack.c.b16 %v1939, %v1938
      %v1959 = vpack.c.b16 %v1941, %v1940
      %v1960 = vpack.c.b16 %v1943, %v1942
      %v1961 = vpack.c.b16 %v1945, %v1944
      %1978 = vmatpush.bf16.msra.mxu0 %v1953
      %1979 = vmatpush.bf16.msra.mxu0 %v1952
      %1980 = vmatpush.bf16.msra.mxu0 %v1951
      %1981 = vmatpush.bf16.msra.mxu0 %v1950
      %1982 = vmatpush.bf16.msra.mxu0 %v1949
      %1983 = vmatpush.bf16.msra.mxu0 %v1948
      %1984 = vmatpush.bf16.msra.mxu0 %v1947
      %1985 = vmatpush.bf16.msra.mxu0 %v1946
      %1986 = vmatmul.bf16.gmra.mxu0 %v1818
      %v1987 = vpop.f32.mrf.mxu0
      %v1988 = vadd.f32 0.0, %v1987
      %v1989 = vpop.f32.mrf.mxu0
      %v1990 = vadd.f32 0.0, %v1989
      %1991 = vmatmul.bf16.gmra.mxu0 %v1820
      %v1992 = vpop.f32.mrf.mxu0
      %v1993 = vadd.f32 0.0, %v1992
      %v1994 = vpop.f32.mrf.mxu0
      %v1995 = vadd.f32 0.0, %v1994
      %1996 = vmatmul.bf16.gmra.mxu0 %v1822
      %v1997 = vpop.f32.mrf.mxu0
      %v1998 = vadd.f32 0.0, %v1997
      %v1999 = vpop.f32.mrf.mxu0
      %v2000 = vadd.f32 0.0, %v1999
      %2001 = vmatmul.bf16.gmra.mxu0 %v1824
      %v2002 = vpop.f32.mrf.mxu0
      %v2003 = vadd.f32 0.0, %v2002
      %v2004 = vpop.f32.mrf.mxu0
      %v2005 = vadd.f32 0.0, %v2004
      %2006 = vmatmul.bf16.gmra.mxu0 %v1826
      %v2007 = vpop.f32.mrf.mxu0
      %v2008 = vadd.f32 0.0, %v2007
      %v2009 = vpop.f32.mrf.mxu0
      %v2010 = vadd.f32 0.0, %v2009
      %2011 = vmatmul.bf16.gmra.mxu0 %v1828
      %v2012 = vpop.f32.mrf.mxu0
      %v2013 = vadd.f32 0.0, %v2012
      %v2014 = vpop.f32.mrf.mxu0
      %v2015 = vadd.f32 0.0, %v2014
      %2016 = vmatmul.bf16.gmra.mxu0 %v1830
      %v2017 = vpop.f32.mrf.mxu0
      %v2018 = vadd.f32 0.0, %v2017
      %v2019 = vpop.f32.mrf.mxu0
      %v2020 = vadd.f32 0.0, %v2019
      %2021 = vmatmul.bf16.gmra.mxu0 %v1832
      %v2022 = vpop.f32.mrf.mxu0
      %v2023 = vadd.f32 0.0, %v2022
      %v2024 = vpop.f32.mrf.mxu0
      %v2025 = vadd.f32 0.0, %v2024
      %2026 = vmatmul.bf16.gmra.mxu0 %v1834
      %v2027 = vpop.f32.mrf.mxu0
      %v2028 = vadd.f32 0.0, %v2027
      %v2029 = vpop.f32.mrf.mxu0
      %v2030 = vadd.f32 0.0, %v2029
      %2031 = vmatmul.bf16.gmra.mxu0 %v1836
      %v2032 = vpop.f32.mrf.mxu0
      %v2033 = vadd.f32 0.0, %v2032
      %v2034 = vpop.f32.mrf.mxu0
      %v2035 = vadd.f32 0.0, %v2034
      %2036 = vmatmul.bf16.gmra.mxu0 %v1838
      %v2037 = vpop.f32.mrf.mxu0
      %v2038 = vadd.f32 0.0, %v2037
      %v2039 = vpop.f32.mrf.mxu0
      %v2040 = vadd.f32 0.0, %v2039
      %2041 = vmatmul.bf16.gmra.mxu0 %v1840
      %v2042 = vpop.f32.mrf.mxu0
      %v2043 = vadd.f32 0.0, %v2042
      %v2044 = vpop.f32.mrf.mxu0
      %v2045 = vadd.f32 0.0, %v2044
      %2046 = vmatmul.bf16.gmra.mxu0 %v1842
      %v2047 = vpop.f32.mrf.mxu0
      %v2048 = vadd.f32 0.0, %v2047
      %v2049 = vpop.f32.mrf.mxu0
      %v2050 = vadd.f32 0.0, %v2049
      %2051 = vmatmul.bf16.gmra.mxu0 %v1844
      %v2052 = vpop.f32.mrf.mxu0
      %v2053 = vadd.f32 0.0, %v2052
      %v2054 = vpop.f32.mrf.mxu0
      %v2055 = vadd.f32 0.0, %v2054
      %2056 = vmatmul.bf16.gmra.mxu0 %v1846
      %v2057 = vpop.f32.mrf.mxu0
      %v2058 = vadd.f32 0.0, %v2057
      %v2059 = vpop.f32.mrf.mxu0
      %v2060 = vadd.f32 0.0, %v2059
      %2061 = vmatmul.bf16.gmra.mxu0 %v1848
      %v2062 = vpop.f32.mrf.mxu0
      %v2063 = vadd.f32 0.0, %v2062
      %v2064 = vpop.f32.mrf.mxu0
      %v2065 = vadd.f32 0.0, %v2064
      %2066 = vdwg.mxu0
      %2067 = vmatpush.bf16.msra.mxu0 %v1961
      %2068 = vmatpush.bf16.msra.mxu0 %v1960
      %2069 = vmatpush.bf16.msra.mxu0 %v1959
      %2070 = vmatpush.bf16.msra.mxu0 %v1958
      %2071 = vmatpush.bf16.msra.mxu0 %v1957
      %2072 = vmatpush.bf16.msra.mxu0 %v1956
      %2073 = vmatpush.bf16.msra.mxu0 %v1955
      %2074 = vmatpush.bf16.msra.mxu0 %v1954
      %2075 = vmatmul.bf16.gmra.mxu0 %v1819
      %v2076 = vpop.f32.mrf.mxu0
      %v2077 = vadd.f32 %v1988, %v2076
      %v2078 = vpop.f32.mrf.mxu0
      %v2079 = vadd.f32 %v1990, %v2078
      %2080 = vmatmul.bf16.gmra.mxu0 %v1821
      %v2081 = vpop.f32.mrf.mxu0
      %v2082 = vadd.f32 %v1993, %v2081
      %v2083 = vpop.f32.mrf.mxu0
      %v2084 = vadd.f32 %v1995, %v2083
      %2085 = vmatmul.bf16.gmra.mxu0 %v1823
      %v2086 = vpop.f32.mrf.mxu0
      %v2087 = vadd.f32 %v1998, %v2086
      %v2088 = vpop.f32.mrf.mxu0
      %v2089 = vadd.f32 %v2000, %v2088
      %2090 = vmatmul.bf16.gmra.mxu0 %v1825
      %v2091 = vpop.f32.mrf.mxu0
      %v2092 = vadd.f32 %v2003, %v2091
      %v2093 = vpop.f32.mrf.mxu0
      %v2094 = vadd.f32 %v2005, %v2093
      %2095 = vmatmul.bf16.gmra.mxu0 %v1827
      %v2096 = vpop.f32.mrf.mxu0
      %v2097 = vadd.f32 %v2008, %v2096
      %v2098 = vpop.f32.mrf.mxu0
      %v2099 = vadd.f32 %v2010, %v2098
      %2100 = vmatmul.bf16.gmra.mxu0 %v1829
      %v2101 = vpop.f32.mrf.mxu0
      %v2102 = vadd.f32 %v2013, %v2101
      %v2103 = vpop.f32.mrf.mxu0
      %v2104 = vadd.f32 %v2015, %v2103
      %2105 = vmatmul.bf16.gmra.mxu0 %v1831
      %v2106 = vpop.f32.mrf.mxu0
      %v2107 = vadd.f32 %v2018, %v2106
      %v2108 = vpop.f32.mrf.mxu0
      %v2109 = vadd.f32 %v2020, %v2108
      %2110 = vmatmul.bf16.gmra.mxu0 %v1833
      %v2111 = vpop.f32.mrf.mxu0
      %v2112 = vadd.f32 %v2023, %v2111
      %v2113 = vpop.f32.mrf.mxu0
      %v2114 = vadd.f32 %v2025, %v2113
      %2115 = vmatmul.bf16.gmra.mxu0 %v1835
      %v2116 = vpop.f32.mrf.mxu0
      %v2117 = vadd.f32 %v2028, %v2116
      %v2118 = vpop.f32.mrf.mxu0
      %v2119 = vadd.f32 %v2030, %v2118
      %2120 = vmatmul.bf16.gmra.mxu0 %v1837
      %v2121 = vpop.f32.mrf.mxu0
      %v2122 = vadd.f32 %v2033, %v2121
      %v2123 = vpop.f32.mrf.mxu0
      %v2124 = vadd.f32 %v2035, %v2123
      %2125 = vmatmul.bf16.gmra.mxu0 %v1839
      %v2126 = vpop.f32.mrf.mxu0
      %v2127 = vadd.f32 %v2038, %v2126
      %v2128 = vpop.f32.mrf.mxu0
      %v2129 = vadd.f32 %v2040, %v2128
      %2130 = vmatmul.bf16.gmra.mxu0 %v1841
      %v2131 = vpop.f32.mrf.mxu0
      %v2132 = vadd.f32 %v2043, %v2131
      %v2133 = vpop.f32.mrf.mxu0
      %v2134 = vadd.f32 %v2045, %v2133
      %2135 = vmatmul.bf16.gmra.mxu0 %v1843
      %v2136 = vpop.f32.mrf.mxu0
      %v2137 = vadd.f32 %v2048, %v2136
      %v2138 = vpop.f32.mrf.mxu0
      %v2139 = vadd.f32 %v2050, %v2138
      %2140 = vmatmul.bf16.gmra.mxu0 %v1845
      %v2141 = vpop.f32.mrf.mxu0
      %v2142 = vadd.f32 %v2053, %v2141
      %v2143 = vpop.f32.mrf.mxu0
      %v2144 = vadd.f32 %v2055, %v2143
      %2145 = vmatmul.bf16.gmra.mxu0 %v1847
      %v2146 = vpop.f32.mrf.mxu0
      %v2147 = vadd.f32 %v2058, %v2146
      %v2148 = vpop.f32.mrf.mxu0
      %v2149 = vadd.f32 %v2060, %v2148
      %2150 = vmatmul.bf16.gmra.mxu0 %v1849
      %v2151 = vpop.f32.mrf.mxu0
      %v2152 = vadd.f32 %v2063, %v2151
      %v2153 = vpop.f32.mrf.mxu0
      %v2154 = vadd.f32 %v2065, %v2153
      %2155 = vdwg.mxu0
      %v2156 = vadd.f32 %v1786, %v2077
      %v2157 = vadd.f32 %v1787, %v2079
      %v2158 = vadd.f32 %v1788, %v2082
      %v2159 = vadd.f32 %v1789, %v2084
      %v2160 = vadd.f32 %v1790, %v2087
      %v2161 = vadd.f32 %v1791, %v2089
      %v2162 = vadd.f32 %v1792, %v2092
      %v2163 = vadd.f32 %v1793, %v2094
      %v2164 = vadd.f32 %v1794, %v2097
      %v2165 = vadd.f32 %v1795, %v2099
      %v2166 = vadd.f32 %v1796, %v2102
      %v2167 = vadd.f32 %v1797, %v2104
      %v2168 = vadd.f32 %v1798, %v2107
      %v2169 = vadd.f32 %v1799, %v2109
      %v2170 = vadd.f32 %v1800, %v2112
      %v2171 = vadd.f32 %v1801, %v2114
      %v2172 = vadd.f32 %v1802, %v2117
      %v2173 = vadd.f32 %v1803, %v2119
      %v2174 = vadd.f32 %v1804, %v2122
      %v2175 = vadd.f32 %v1805, %v2124
      %v2176 = vadd.f32 %v1806, %v2127
      %v2177 = vadd.f32 %v1807, %v2129
      %v2178 = vadd.f32 %v1808, %v2132
      %v2179 = vadd.f32 %v1809, %v2134
      %v2180 = vadd.f32 %v1810, %v2137
      %v2181 = vadd.f32 %v1811, %v2139
      %v2182 = vadd.f32 %v1812, %v2142
      %v2183 = vadd.f32 %v1813, %v2144
      %v2184 = vadd.f32 %v1814, %v2147
      %v2185 = vadd.f32 %v1815, %v2149
      %v2186 = vadd.f32 %v1816, %v2152
      %v2187 = vadd.f32 %v1817, %v2154
      %vm2188 = vcmask 261120
      %2189 = vst.msk [vmem:[#allocation4] sm:$0xff] %vm2188, %v2156
      %2190 = vst.msk [vmem:[#allocation4 + $0x8] sm:$0xff] %vm2188, %v2157
      %2191 = vst.msk [vmem:[#allocation4 + $0x10] sm:$0xff] %vm2188, %v2158
      %2192 = vst.msk [vmem:[#allocation4 + $0x18] sm:$0xff] %vm2188, %v2159
      %2193 = vst.msk [vmem:[#allocation4 + $0x20] sm:$0xff] %vm2188, %v2160
      %2194 = vst.msk [vmem:[#allocation4 + $0x28] sm:$0xff] %vm2188, %v2161
      %2195 = vst.msk [vmem:[#allocation4 + $0x30] sm:$0xff] %vm2188, %v2162
      %2196 = vst.msk [vmem:[#allocation4 + $0x38] sm:$0xff] %vm2188, %v2163
      %2197 = vst.msk [vmem:[#allocation4 + $0x40] sm:$0xff] %vm2188, %v2164
      %2198 = vst.msk [vmem:[#allocation4 + $0x48] sm:$0xff] %vm2188, %v2165
      %2199 = vst.msk [vmem:[#allocation4 + $0x50] sm:$0xff] %vm2188, %v2166
      %2200 = vst.msk [vmem:[#allocation4 + $0x58] sm:$0xff] %vm2188, %v2167
      %2201 = vst.msk [vmem:[#allocation4 + $0x60] sm:$0xff] %vm2188, %v2168
      %2202 = vst.msk [vmem:[#allocation4 + $0x68] sm:$0xff] %vm2188, %v2169
      %2203 = vst.msk [vmem:[#allocation4 + $0x70] sm:$0xff] %vm2188, %v2170
      %2204 = vst.msk [vmem:[#allocation4 + $0x78] sm:$0xff] %vm2188, %v2171
      %2205 = vst.msk [vmem:[#allocation4 + $0x80] sm:$0xff] %vm2188, %v2172
      %2206 = vst.msk [vmem:[#allocation4 + $0x88] sm:$0xff] %vm2188, %v2173
      %2207 = vst.msk [vmem:[#allocation4 + $0x90] sm:$0xff] %vm2188, %v2174
      %2208 = vst.msk [vmem:[#allocation4 + $0x98] sm:$0xff] %vm2188, %v2175
      %2209 = vst.msk [vmem:[#allocation4 + $0xa0] sm:$0xff] %vm2188, %v2176
      %2210 = vst.msk [vmem:[#allocation4 + $0xa8] sm:$0xff] %vm2188, %v2177
      %2211 = vst.msk [vmem:[#allocation4 + $0xb0] sm:$0xff] %vm2188, %v2178
      %2212 = vst.msk [vmem:[#allocation4 + $0xb8] sm:$0xff] %vm2188, %v2179
      %2213 = vst.msk [vmem:[#allocation4 + $0xc0] sm:$0xff] %vm2188, %v2180
      %2214 = vst.msk [vmem:[#allocation4 + $0xc8] sm:$0xff] %vm2188, %v2181
      %2215 = vst.msk [vmem:[#allocation4 + $0xd0] sm:$0xff] %vm2188, %v2182
      %2216 = vst.msk [vmem:[#allocation4 + $0xd8] sm:$0xff] %vm2188, %v2183
      %2217 = vst.msk [vmem:[#allocation4 + $0xe0] sm:$0xff] %vm2188, %v2184
      %2218 = vst.msk [vmem:[#allocation4 + $0xe8] sm:$0xff] %vm2188, %v2185
      %2219 = vst.msk [vmem:[#allocation4 + $0xf0] sm:$0xff] %vm2188, %v2186
      %2220 = vst.msk [vmem:[#allocation4 + $0xf8] sm:$0xff] %vm2188, %v2187
      %2221 = vst.msk [vmem:[#allocation2] sm:$0xff] %vm1561, %v889
      %2222 = vst.msk [vmem:[#allocation2 + $0x8] sm:$0xff] %vm1561, %v890
      %2223 = vst.msk [vmem:[#allocation2 + $0x10] sm:$0xff] %vm1561, %v891
      %2224 = vst.msk [vmem:[#allocation2 + $0x18] sm:$0xff] %vm1561, %v892
      %2225 = vst.msk [vmem:[#allocation2 + $0x20] sm:$0xff] %vm1561, %v893
      %2226 = vst.msk [vmem:[#allocation2 + $0x28] sm:$0xff] %vm1561, %v894
      %2227 = vst.msk [vmem:[#allocation2 + $0x30] sm:$0xff] %vm1561, %v895
      %2228 = vst.msk [vmem:[#allocation2 + $0x38] sm:$0xff] %vm1561, %v896
      %2229 = vst.msk [vmem:[#allocation2 + $0x40] sm:$0xff] %vm1561, %v897
      %2230 = vst.msk [vmem:[#allocation2 + $0x48] sm:$0xff] %vm1561, %v898
      %2231 = vst.msk [vmem:[#allocation2 + $0x50] sm:$0xff] %vm1561, %v899
      %2232 = vst.msk [vmem:[#allocation2 + $0x58] sm:$0xff] %vm1561, %v900
      %2233 = vst.msk [vmem:[#allocation2 + $0x60] sm:$0xff] %vm1561, %v901
      %2234 = vst.msk [vmem:[#allocation2 + $0x68] sm:$0xff] %vm1561, %v902
      %2235 = vst.msk [vmem:[#allocation2 + $0x70] sm:$0xff] %vm1561, %v903
      %2236 = vst.msk [vmem:[#allocation2 + $0x78] sm:$0xff] %vm1561, %v904
      %2237 = vst.msk [vmem:[#allocation2 + $0x80] sm:$0xff] %vm1561, %v905
      %2238 = vst.msk [vmem:[#allocation2 + $0x88] sm:$0xff] %vm1561, %v906
      %2239 = vst.msk [vmem:[#allocation2 + $0x90] sm:$0xff] %vm1561, %v907
      %2240 = vst.msk [vmem:[#allocation2 + $0x98] sm:$0xff] %vm1561, %v908
      %2241 = vst.msk [vmem:[#allocation2 + $0xa0] sm:$0xff] %vm1561, %v909
      %2242 = vst.msk [vmem:[#allocation2 + $0xa8] sm:$0xff] %vm1561, %v910
      %2243 = vst.msk [vmem:[#allocation2 + $0xb0] sm:$0xff] %vm1561, %v911
      %2244 = vst.msk [vmem:[#allocation2 + $0xb8] sm:$0xff] %vm1561, %v912
      %2245 = vst.msk [vmem:[#allocation2 + $0xc0] sm:$0xff] %vm1561, %v913
      %2246 = vst.msk [vmem:[#allocation2 + $0xc8] sm:$0xff] %vm1561, %v914
      %2247 = vst.msk [vmem:[#allocation2 + $0xd0] sm:$0xff] %vm1561, %v915
      %2248 = vst.msk [vmem:[#allocation2 + $0xd8] sm:$0xff] %vm1561, %v916
      %2249 = vst.msk [vmem:[#allocation2 + $0xe0] sm:$0xff] %vm1561, %v917
      %2250 = vst.msk [vmem:[#allocation2 + $0xe8] sm:$0xff] %vm1561, %v918
      %2251 = vst.msk [vmem:[#allocation2 + $0xf0] sm:$0xff] %vm1561, %v919
      %2252 = vst.msk [vmem:[#allocation2 + $0xf8] sm:$0xff] %vm1561, %v920
      // Predicated region
      $region45: #{change_guide_forward.3} parent=39 // pred_check
        %p2253 = pneg %p384
      $region46: #{change_guide_forward.3} parent=39 // pred_check_branch
        %2255 = sbr.rel (%p2253) target = $region48
      $region47: #{change_guide_forward.3} parent=39 // pred_region
        %v2256 = vld [vmem:[#allocation4] sm:$0xff]
        %v2257 = vld [vmem:[#allocation4 + $0x8] sm:$0xff]
        %v2258 = vld [vmem:[#allocation4 + $0x10] sm:$0xff]
        %v2259 = vld [vmem:[#allocation4 + $0x18] sm:$0xff]
        %v2260 = vld [vmem:[#allocation4 + $0x20] sm:$0xff]
        %v2261 = vld [vmem:[#allocation4 + $0x28] sm:$0xff]
        %v2262 = vld [vmem:[#allocation4 + $0x30] sm:$0xff]
        %v2263 = vld [vmem:[#allocation4 + $0x38] sm:$0xff]
        %v2264 = vld [vmem:[#allocation4 + $0x40] sm:$0xff]
        %v2265 = vld [vmem:[#allocation4 + $0x48] sm:$0xff]
        %v2266 = vld [vmem:[#allocation4 + $0x50] sm:$0xff]
        %v2267 = vld [vmem:[#allocation4 + $0x58] sm:$0xff]
        %v2268 = vld [vmem:[#allocation4 + $0x60] sm:$0xff]
        %v2269 = vld [vmem:[#allocation4 + $0x68] sm:$0xff]
        %v2270 = vld [vmem:[#allocation4 + $0x70] sm:$0xff]
        %v2271 = vld [vmem:[#allocation4 + $0x78] sm:$0xff]
        %v2272 = vld [vmem:[#allocation4 + $0x80] sm:$0xff]
        %v2273 = vld [vmem:[#allocation4 + $0x88] sm:$0xff]
        %v2274 = vld [vmem:[#allocation4 + $0x90] sm:$0xff]
        %v2275 = vld [vmem:[#allocation4 + $0x98] sm:$0xff]
        %v2276 = vld [vmem:[#allocation4 + $0xa0] sm:$0xff]
        %v2277 = vld [vmem:[#allocation4 + $0xa8] sm:$0xff]
        %v2278 = vld [vmem:[#allocation4 + $0xb0] sm:$0xff]
        %v2279 = vld [vmem:[#allocation4 + $0xb8] sm:$0xff]
        %v2280 = vld [vmem:[#allocation4 + $0xc0] sm:$0xff]
        %v2281 = vld [vmem:[#allocation4 + $0xc8] sm:$0xff]
        %v2282 = vld [vmem:[#allocation4 + $0xd0] sm:$0xff]
        %v2283 = vld [vmem:[#allocation4 + $0xd8] sm:$0xff]
        %v2284 = vld [vmem:[#allocation4 + $0xe0] sm:$0xff]
        %v2285 = vld [vmem:[#allocation4 + $0xe8] sm:$0xff]
        %v2286 = vld [vmem:[#allocation4 + $0xf0] sm:$0xff]
        %v2287 = vld [vmem:[#allocation4 + $0xf8] sm:$0xff]
        %v2288 = vld [vmem:[#allocation3] sm:$0xff]
        %v2289 = vld [vmem:[#allocation3 + $0x8] sm:$0xff]
        %v2290 = vld [vmem:[#allocation3 + $0x10] sm:$0xff]
        %v2291 = vld [vmem:[#allocation3 + $0x18] sm:$0xff]
        %v2292 = vld [vmem:[#allocation3 + $0x20] sm:$0xff]
        %v2293 = vld [vmem:[#allocation3 + $0x28] sm:$0xff]
        %v2294 = vld [vmem:[#allocation3 + $0x30] sm:$0xff]
        %v2295 = vld [vmem:[#allocation3 + $0x38] sm:$0xff]
        %v2296 = vld [vmem:[#allocation3 + $0x40] sm:$0xff]
        %v2297 = vld [vmem:[#allocation3 + $0x48] sm:$0xff]
        %v2298 = vld [vmem:[#allocation3 + $0x50] sm:$0xff]
        %v2299 = vld [vmem:[#allocation3 + $0x58] sm:$0xff]
        %v2300 = vld [vmem:[#allocation3 + $0x60] sm:$0xff]
        %v2301 = vld [vmem:[#allocation3 + $0x68] sm:$0xff]
        %v2302 = vld [vmem:[#allocation3 + $0x70] sm:$0xff]
        %v2303 = vld [vmem:[#allocation3 + $0x78] sm:$0xff]
        %v2304 = vld [vmem:[#allocation3 + $0x80] sm:$0xff]
        %v2305 = vld [vmem:[#allocation3 + $0x88] sm:$0xff]
        %v2306 = vld [vmem:[#allocation3 + $0x90] sm:$0xff]
        %v2307 = vld [vmem:[#allocation3 + $0x98] sm:$0xff]
        %v2308 = vld [vmem:[#allocation3 + $0xa0] sm:$0xff]
        %v2309 = vld [vmem:[#allocation3 + $0xa8] sm:$0xff]
        %v2310 = vld [vmem:[#allocation3 + $0xb0] sm:$0xff]
        %v2311 = vld [vmem:[#allocation3 + $0xb8] sm:$0xff]
        %v2312 = vld [vmem:[#allocation3 + $0xc0] sm:$0xff]
        %v2313 = vld [vmem:[#allocation3 + $0xc8] sm:$0xff]
        %v2314 = vld [vmem:[#allocation3 + $0xd0] sm:$0xff]
        %v2315 = vld [vmem:[#allocation3 + $0xd8] sm:$0xff]
        %v2316 = vld [vmem:[#allocation3 + $0xe0] sm:$0xff]
        %v2317 = vld [vmem:[#allocation3 + $0xe8] sm:$0xff]
        %v2318 = vld [vmem:[#allocation3 + $0xf0] sm:$0xff]
        %v2319 = vld [vmem:[#allocation3 + $0xf8] sm:$0xff]
        %v2320 = vrcp.pop %v2288
        %v2321 = vrcp.pop %v2289
        %v2322 = vrcp.pop %v2290
        %v2323 = vrcp.pop %v2291
        %v2324 = vrcp.pop %v2292
        %v2325 = vrcp.pop %v2293
        %v2326 = vrcp.pop %v2294
        %v2327 = vrcp.pop %v2295
        %v2328 = vrcp.pop %v2296
        %v2329 = vrcp.pop %v2297
        %v2330 = vrcp.pop %v2298
        %v2331 = vrcp.pop %v2299
        %v2332 = vrcp.pop %v2300
        %v2333 = vrcp.pop %v2301
        %v2334 = vrcp.pop %v2302
        %v2335 = vrcp.pop %v2303
        %v2336 = vrcp.pop %v2304
        %v2337 = vrcp.pop %v2305
        %v2338 = vrcp.pop %v2306
        %v2339 = vrcp.pop %v2307
        %v2340 = vrcp.pop %v2308
        %v2341 = vrcp.pop %v2309
        %v2342 = vrcp.pop %v2310
        %v2343 = vrcp.pop %v2311
        %v2344 = vrcp.pop %v2312
        %v2345 = vrcp.pop %v2313
        %v2346 = vrcp.pop %v2314
        %v2347 = vrcp.pop %v2315
        %v2348 = vrcp.pop %v2316
        %v2349 = vrcp.pop %v2317
        %v2350 = vrcp.pop %v2318
        %v2351 = vrcp.pop %v2319
        %2353 = vset.pattern.permute.xlu0 0
        %2354 = vperm.xlu0 %2353, %v2320
        %v2355 = vpop.permute.xlu0 %2354
        %2358 = vset.pattern.permute.xlu0 0
        %2359 = vperm.xlu0 %2358, %v2321
        %v2360 = vpop.permute.xlu0 %2359
        %2363 = vset.pattern.permute.xlu0 0
        %2364 = vperm.xlu0 %2363, %v2322
        %v2365 = vpop.permute.xlu0 %2364
        %2368 = vset.pattern.permute.xlu0 0
        %2369 = vperm.xlu0 %2368, %v2323
        %v2370 = vpop.permute.xlu0 %2369
        %2373 = vset.pattern.permute.xlu0 0
        %2374 = vperm.xlu0 %2373, %v2324
        %v2375 = vpop.permute.xlu0 %2374
        %2378 = vset.pattern.permute.xlu0 0
        %2379 = vperm.xlu0 %2378, %v2325
        %v2380 = vpop.permute.xlu0 %2379
        %2383 = vset.pattern.permute.xlu0 0
        %2384 = vperm.xlu0 %2383, %v2326
        %v2385 = vpop.permute.xlu0 %2384
        %2388 = vset.pattern.permute.xlu0 0
        %2389 = vperm.xlu0 %2388, %v2327
        %v2390 = vpop.permute.xlu0 %2389
        %2393 = vset.pattern.permute.xlu0 0
        %2394 = vperm.xlu0 %2393, %v2328
        %v2395 = vpop.permute.xlu0 %2394
        %2398 = vset.pattern.permute.xlu0 0
        %2399 = vperm.xlu0 %2398, %v2329
        %v2400 = vpop.permute.xlu0 %2399
        %2403 = vset.pattern.permute.xlu0 0
        %2404 = vperm.xlu0 %2403, %v2330
        %v2405 = vpop.permute.xlu0 %2404
        %2408 = vset.pattern.permute.xlu0 0
        %2409 = vperm.xlu0 %2408, %v2331
        %v2410 = vpop.permute.xlu0 %2409
        %2413 = vset.pattern.permute.xlu0 0
        %2414 = vperm.xlu0 %2413, %v2332
        %v2415 = vpop.permute.xlu0 %2414
        %2418 = vset.pattern.permute.xlu0 0
        %2419 = vperm.xlu0 %2418, %v2333
        %v2420 = vpop.permute.xlu0 %2419
        %2423 = vset.pattern.permute.xlu0 0
        %2424 = vperm.xlu0 %2423, %v2334
        %v2425 = vpop.permute.xlu0 %2424
        %2428 = vset.pattern.permute.xlu0 0
        %2429 = vperm.xlu0 %2428, %v2335
        %v2430 = vpop.permute.xlu0 %2429
        %2433 = vset.pattern.permute.xlu0 0
        %2434 = vperm.xlu0 %2433, %v2336
        %v2435 = vpop.permute.xlu0 %2434
        %2438 = vset.pattern.permute.xlu0 0
        %2439 = vperm.xlu0 %2438, %v2337
        %v2440 = vpop.permute.xlu0 %2439
        %2443 = vset.pattern.permute.xlu0 0
        %2444 = vperm.xlu0 %2443, %v2338
        %v2445 = vpop.permute.xlu0 %2444
        %2448 = vset.pattern.permute.xlu0 0
        %2449 = vperm.xlu0 %2448, %v2339
        %v2450 = vpop.permute.xlu0 %2449
        %2453 = vset.pattern.permute.xlu0 0
        %2454 = vperm.xlu0 %2453, %v2340
        %v2455 = vpop.permute.xlu0 %2454
        %2458 = vset.pattern.permute.xlu0 0
        %2459 = vperm.xlu0 %2458, %v2341
        %v2460 = vpop.permute.xlu0 %2459
        %2463 = vset.pattern.permute.xlu0 0
        %2464 = vperm.xlu0 %2463, %v2342
        %v2465 = vpop.permute.xlu0 %2464
        %2468 = vset.pattern.permute.xlu0 0
        %2469 = vperm.xlu0 %2468, %v2343
        %v2470 = vpop.permute.xlu0 %2469
        %2473 = vset.pattern.permute.xlu0 0
        %2474 = vperm.xlu0 %2473, %v2344
        %v2475 = vpop.permute.xlu0 %2474
        %2478 = vset.pattern.permute.xlu0 0
        %2479 = vperm.xlu0 %2478, %v2345
        %v2480 = vpop.permute.xlu0 %2479
        %2483 = vset.pattern.permute.xlu0 0
        %2484 = vperm.xlu0 %2483, %v2346
        %v2485 = vpop.permute.xlu0 %2484
        %2488 = vset.pattern.permute.xlu0 0
        %2489 = vperm.xlu0 %2488, %v2347
        %v2490 = vpop.permute.xlu0 %2489
        %2493 = vset.pattern.permute.xlu0 0
        %2494 = vperm.xlu0 %2493, %v2348
        %v2495 = vpop.permute.xlu0 %2494
        %2498 = vset.pattern.permute.xlu0 0
        %2499 = vperm.xlu0 %2498, %v2349
        %v2500 = vpop.permute.xlu0 %2499
        %2503 = vset.pattern.permute.xlu0 0
        %2504 = vperm.xlu0 %2503, %v2350
        %v2505 = vpop.permute.xlu0 %2504
        %2508 = vset.pattern.permute.xlu0 0
        %2509 = vperm.xlu0 %2508, %v2351
        %v2510 = vpop.permute.xlu0 %2509
        %v2512 = vmul.f32 %v2256, %v2355
        %v2513 = vmul.f32 %v2257, %v2360
        %v2514 = vmul.f32 %v2258, %v2365
        %v2515 = vmul.f32 %v2259, %v2370
        %v2516 = vmul.f32 %v2260, %v2375
        %v2517 = vmul.f32 %v2261, %v2380
        %v2518 = vmul.f32 %v2262, %v2385
        %v2519 = vmul.f32 %v2263, %v2390
        %v2520 = vmul.f32 %v2264, %v2395
        %v2521 = vmul.f32 %v2265, %v2400
        %v2522 = vmul.f32 %v2266, %v2405
        %v2523 = vmul.f32 %v2267, %v2410
        %v2524 = vmul.f32 %v2268, %v2415
        %v2525 = vmul.f32 %v2269, %v2420
        %v2526 = vmul.f32 %v2270, %v2425
        %v2527 = vmul.f32 %v2271, %v2430
        %v2528 = vmul.f32 %v2272, %v2435
        %v2529 = vmul.f32 %v2273, %v2440
        %v2530 = vmul.f32 %v2274, %v2445
        %v2531 = vmul.f32 %v2275, %v2450
        %v2532 = vmul.f32 %v2276, %v2455
        %v2533 = vmul.f32 %v2277, %v2460
        %v2534 = vmul.f32 %v2278, %v2465
        %v2535 = vmul.f32 %v2279, %v2470
        %v2536 = vmul.f32 %v2280, %v2475
        %v2537 = vmul.f32 %v2281, %v2480
        %v2538 = vmul.f32 %v2282, %v2485
        %v2539 = vmul.f32 %v2283, %v2490
        %v2540 = vmul.f32 %v2284, %v2495
        %v2541 = vmul.f32 %v2285, %v2500
        %v2542 = vmul.f32 %v2286, %v2505
        %v2543 = vmul.f32 %v2287, %v2510
        %s2544 = sld [smem:[#allocation5]]
        %2545 = vxpose.xlu0.b32.start [1/16] %v2512, 128
        %2546 = vxpose.xlu0.b32.cont [2/16] %v2513, 128
        %2547 = vxpose.xlu0.b32.cont [3/16] %v2514, 128
        %2548 = vxpose.xlu0.b32.cont [4/16] %v2515, 128
        %2549 = vxpose.xlu0.b32.cont [5/16] %v2516, 128
        %2550 = vxpose.xlu0.b32.cont [6/16] %v2517, 128
        %2551 = vxpose.xlu0.b32.cont [7/16] %v2518, 128
        %2552 = vxpose.xlu0.b32.cont [8/16] %v2519, 128
        %2553 = vxpose.xlu0.b32.cont [9/16] %v2520, 128
        %2554 = vxpose.xlu0.b32.cont [10/16] %v2521, 128
        %2555 = vxpose.xlu0.b32.cont [11/16] %v2522, 128
        %2556 = vxpose.xlu0.b32.cont [12/16] %v2523, 128
        %2557 = vxpose.xlu0.b32.cont [13/16] %v2524, 128
        %2558 = vxpose.xlu0.b32.cont [14/16] %v2525, 128
        %2559 = vxpose.xlu0.b32.cont [15/16] %v2526, 128
        %2560 = vxpose.xlu0.b32.end [16/16] %v2527, 128
        %v2561 = vpop.trf.xlu0
        %v2562 = vpop.trf.xlu0
        %v2563 = vpop.trf.xlu0
        %v2564 = vpop.trf.xlu0
        %v2565 = vpop.trf.xlu0
        %v2566 = vpop.trf.xlu0
        %v2567 = vpop.trf.xlu0
        %v2568 = vpop.trf.xlu0
        %v2569 = vpop.trf.xlu0
        %v2570 = vpop.trf.xlu0
        %v2571 = vpop.trf.xlu0
        %v2572 = vpop.trf.xlu0
        %v2573 = vpop.trf.xlu0
        %v2574 = vpop.trf.xlu0
        %v2575 = vpop.trf.xlu0
        %v2576 = vpop.trf.xlu0
        %2577 = vxpose.xlu0.b32.start [1/16] %v2528, 128
        %2578 = vxpose.xlu0.b32.cont [2/16] %v2529, 128
        %2579 = vxpose.xlu0.b32.cont [3/16] %v2530, 128
        %2580 = vxpose.xlu0.b32.cont [4/16] %v2531, 128
        %2581 = vxpose.xlu0.b32.cont [5/16] %v2532, 128
        %2582 = vxpose.xlu0.b32.cont [6/16] %v2533, 128
        %2583 = vxpose.xlu0.b32.cont [7/16] %v2534, 128
        %2584 = vxpose.xlu0.b32.cont [8/16] %v2535, 128
        %2585 = vxpose.xlu0.b32.cont [9/16] %v2536, 128
        %2586 = vxpose.xlu0.b32.cont [10/16] %v2537, 128
        %2587 = vxpose.xlu0.b32.cont [11/16] %v2538, 128
        %2588 = vxpose.xlu0.b32.cont [12/16] %v2539, 128
        %2589 = vxpose.xlu0.b32.cont [13/16] %v2540, 128
        %2590 = vxpose.xlu0.b32.cont [14/16] %v2541, 128
        %2591 = vxpose.xlu0.b32.cont [15/16] %v2542, 128
        %2592 = vxpose.xlu0.b32.end [16/16] %v2543, 128
        %v2593 = vpop.trf.xlu0
        %v2594 = vpop.trf.xlu0
        %v2595 = vpop.trf.xlu0
        %v2596 = vpop.trf.xlu0
        %v2597 = vpop.trf.xlu0
        %v2598 = vpop.trf.xlu0
        %v2599 = vpop.trf.xlu0
        %v2600 = vpop.trf.xlu0
        %v2601 = vpop.trf.xlu0
        %v2602 = vpop.trf.xlu0
        %v2603 = vpop.trf.xlu0
        %v2604 = vpop.trf.xlu0
        %v2605 = vpop.trf.xlu0
        %v2606 = vpop.trf.xlu0
        %v2607 = vpop.trf.xlu0
        %v2608 = vpop.trf.xlu0
        %v2609 = vstv %s2544
        %v2610 = vmul.f32 %v2609, %v2561
        %v2611 = vmul.f32 %v2609, %v2593
        %v2612 = vmul.f32 %v2609, %v2562
        %v2613 = vmul.f32 %v2609, %v2594
        %v2614 = vmul.f32 %v2609, %v2563
        %v2615 = vmul.f32 %v2609, %v2595
        %v2616 = vmul.f32 %v2609, %v2564
        %v2617 = vmul.f32 %v2609, %v2596
        %v2618 = vld [vmem:[%s371] sm:$0xff]
        %v2619 = vld [vmem:[%s371 + $0x8] sm:$0xff]
        %v2620 = vld [vmem:[%s371 + $0x10] sm:$0xff]
        %v2621 = vld [vmem:[%s371 + $0x18] sm:$0xff]
        %v2622 = vld [vmem:[%s371 + $0x20] sm:$0xff]
        %v2623 = vld [vmem:[%s371 + $0x28] sm:$0xff]
        %v2624 = vld [vmem:[%s371 + $0x30] sm:$0xff]
        %v2625 = vld [vmem:[%s371 + $0x38] sm:$0xff]
        %v2626 = vadd.f32 %v2610, %v2618
        %v2627 = vadd.f32 %v2611, %v2619
        %v2628 = vadd.f32 %v2612, %v2620
        %v2629 = vadd.f32 %v2613, %v2621
        %v2630 = vadd.f32 %v2614, %v2622
        %v2631 = vadd.f32 %v2615, %v2623
        %v2632 = vadd.f32 %v2616, %v2624
        %v2633 = vadd.f32 %v2617, %v2625
        %2634 = vst [vmem:[%s381] sm:$0xff] %v2626
        %2635 = vst [vmem:[%s381 + $0x8] sm:$0xff] %v2627
        %2636 = vst [vmem:[%s381 + $0x10] sm:$0xff] %v2628
        %2637 = vst [vmem:[%s381 + $0x18] sm:$0xff] %v2629
        %2638 = vst [vmem:[%s381 + $0x20] sm:$0xff] %v2630
        %2639 = vst [vmem:[%s381 + $0x28] sm:$0xff] %v2631
        %2640 = vst [vmem:[%s381 + $0x30] sm:$0xff] %v2632
        %2641 = vst [vmem:[%s381 + $0x38] sm:$0xff] %v2633
      $region48: #{change_guide_forward.3} parent=39 // pred_fallthru
        _
      %s2642 = smul.u32 2, %s23
      %p2643 = scmp.lt.s32.totalorder %s22, 1
      %s2644 = scalar_select %p2643, %s22, 1
      %p2645 = scmp.lt.s32.totalorder %s2642, 1
      %s2646 = scalar_select %p2645, %s2642, 1
      %s2647 = smul.addr %s2644, 8
      %s2648 = sadd.s32 %s2646, %s2647
      %s2649 = smul.addr %s2648, 8
      %s2650 = scalar_lea.vmem %s5, %s2649
      // Predicated region
      $region49: #{change_guide_forward.3} parent=39 // pred_check
        %p2651 = pneg %p189
      $region50: #{change_guide_forward.3} parent=39 // pred_check_branch
        %2653 = sbr.rel (%p2651) target = $region52
      $region51: #{change_guide_forward.3} parent=39 // pred_region
        %s2654 = smul.u32 2, %s23
      $region52: #{change_guide_forward.3} parent=39 // pred_fallthru
        _
    $region40: #{change_guide_forward.3} parent=5 // pred_fallthru
      _
    %p2655 = scmp.le.s32.totalorder 2, %s12
    // Predicated region
    $region53: #{change_guide_forward.3} parent=5 // pred_check
      %p2656 = pneg %p2655
    $region54: #{change_guide_forward.3} parent=5 // pred_check_branch
      %2658 = sbr.rel (%p2656) target = $region56
    $region55: #{change_guide_forward.3} parent=5 // pred_region
      %s2659 = ssub.s32 %s12, 2
      // Predicated region
      $region57: #{change_guide_forward.3} parent=55 // pred_check
        %p2660 = pneg %p195
      $region58: #{change_guide_forward.3} parent=55 // pred_check_branch
        %2662 = sbr.rel (%p2660) target = $region60
      $region59: #{change_guide_forward.3} parent=55 // pred_region
        %s2663 = smul.u32 2, %s26
        %p2664 = scmp.lt.s32.totalorder %s25, 1
        %s2665 = scalar_select %p2664, %s25, 1
        %p2666 = scmp.lt.s32.totalorder %s2663, 1
        %s2667 = scalar_select %p2666, %s2663, 1
        %s2668 = smul.addr %s2665, 8
        %s2669 = sadd.s32 %s2667, %s2668
        %s2670 = smul.addr %s2669, 8
        %s2671 = scalar_lea.vmem %s5, %s2670
      $region60: #{change_guide_forward.3} parent=55 // pred_fallthru
        _
    $region56: #{change_guide_forward.3} parent=5 // pred_fallthru
      _
  $region6: #{change_guide_forward.3} parent=0 // loop_footer
    %s16 = sadd.s32 1, %s12
  $region7: #{change_guide_forward.3} parent=0 // loop_footer_branch
    %11 = sbr.rel target = $region3
  $region8: #{change_guide_forward.3} parent=0 // loop_exit
    _

</llo_original>
